<compile_context>
chip_gen: v6e
topology: v6e:2x2x1
jax: 0.10.0
libtpu: 0.0.40
codegen_flags: <defaults>
</compile_context>

<pallas_src>
import functools

import jax
import jax.numpy as jnp
from jax import lax
from jax.experimental import pallas as pl
from jax.experimental.pallas import tpu as pltpu

_EPS = 1e-5          # PyTorch BatchNorm2d default
_LANE = 128          # output-channel (lane) padding multiple


def _round_up(x, m):
    return (x + m - 1) // m * m


def _select_vmem_limit():
    """v5e/v6e (128 MiB physical VMEM) -> 64 MiB scoped; v7x (64 MiB) -> 32 MiB."""
    cap = 128 * 1024 * 1024
    try:
        cap = int(getattr(pltpu.get_tpu_info(), "vmem_capacity_bytes", cap))
    except Exception:
        pass
    return 32 * 1024 * 1024 if cap <= 64 * 1024 * 1024 else 64 * 1024 * 1024


_VMEM_LIMIT = _select_vmem_limit()


# ------------------------------ Pallas kernel -------------------------------

def _resblock_kernel(x_ref, w1_ref, b1_ref, w2_ref, wsc_ref, bout_ref,
                     o_ref, out1p_ref, *, stride, Ho, Wo, Cin):
    """Fully fused ResBlock for one batch image (one grid step).

    x_ref    : (s*s, Hpp, Wpp, Cin) bf16   phase-split zero-padded input
    w1_ref   : (9, Cin, Cp)        bf16    conv1 weights (BN1 scale folded)
    b1_ref   : (1, Cp)             f32     conv1+BN1 bias
    w2_ref   : (9, Cp, Cp)         bf16    conv2 weights (BN2 scale folded)
    wsc_ref  : (Cin, Cp)           bf16    1x1 shortcut weights (or padded eye)
    bout_ref : (1, Cp)             f32     b2 + shortcut bias (fused epilogue)
    o_ref    : (1, Ho*Wo, Cp)      f32     block output
    out1p_ref: (Ho+2, Wo+2, Cp)    f32     VMEM scratch for conv1 activation
    """
    s = stride
    M = Ho * Wo
    Cp = out1p_ref.shape[-1]
    bf16 = jnp.bfloat16

    # ---- conv1 (3x3, stride s) + BN1 + ReLU ---------------------------------
    # Each tap is a contiguous static slice of the phase-split input: no im2col.
    acc1 = jnp.zeros((M, Cp), jnp.float32)
    for t in range(9):
        kh, kw = divmod(t, 3)
        tap = x_ref[(kh % s) * s + (kw % s),
                    (kh // s):(kh // s) + Ho,
                    (kw // s):(kw // s) + Wo, :]                 # (Ho, Wo, Cin)
        acc1 = acc1 + jnp.dot(tap.reshape(M, Cin), w1_ref[t],
                              preferred_element_type=jnp.float32)
    out1 = jnp.maximum(acc1 + b1_ref[...], 0.0)

    # Stage out1 with a zero spatial halo in VMEM; it never touches HBM.
    out1p_ref[...] = jnp.zeros_like(out1p_ref)
    out1p_ref[1:1 + Ho, 1:1 + Wo, :] = out1.reshape(Ho, Wo, Cp)

    # ---- conv2 (3x3, stride 1) + BN2 + fused 1x1/identity shortcut + ReLU ---
    acc2 = jnp.zeros((M, Cp), jnp.float32)
    for t in range(9):
        kh, kw = divmod(t, 3)
        tap = out1p_ref[kh:kh + Ho, kw:kw + Wo, :].astype(bf16)  # (Ho, Wo, Cp)
        acc2 = acc2 + jnp.dot(tap.reshape(M, Cp), w2_ref[t],
                              preferred_element_type=jnp.float32)
    sc = x_ref[(1 % s) * s + (1 % s),
               (1 // s):(1 // s) + Ho,
               (1 // s):(1 // s) + Wo, :]                        # (Ho, Wo, Cin)
    acc2 = acc2 + jnp.dot(sc.reshape(M, Cin), wsc_ref[...],
                          preferred_element_type=jnp.float32)
    o_ref[0] = jnp.maximum(acc2 + bout_ref[...], 0.0).astype(o_ref.dtype)


# ------------------------------ host-side glue ------------------------------

def _fold_conv_bn(w_oihw, conv_bias, gamma, beta, mean, var, cin_pad, cout_pad):
    """OIHW conv + eval-mode BN -> ((k*k, cin_pad, cout_pad) bf16, (1, cout_pad) f32)."""
    Cout, Cin, kh, kw = w_oihw.shape
    scale = gamma / jnp.sqrt(var + _EPS)                         # fold in f32 ...
    w = w_oihw.astype(jnp.float32) * scale[:, None, None, None]
    w = jnp.transpose(w, (2, 3, 1, 0)).reshape(kh * kw, Cin, Cout)
    w = jnp.pad(w, ((0, 0), (0, cin_pad - Cin), (0, cout_pad - Cout)))
    bias = scale * (conv_bias - mean) + beta
    bias = jnp.pad(bias, (0, cout_pad - Cout))
    return w.astype(jnp.bfloat16), bias[None, :].astype(jnp.float32)  # ... then bf16


def resblock_forward(x_nchw, params, stride):
    """ResBlock forward, NCHW in / NCHW out (matches PyTorch module, eval BN)."""
    N, Cin, H, W = x_nchw.shape
    Cout = params["w1"].shape[0]
    s = int(stride)
    if Cin == Cout and s != 1:
        # Same constraint as the reference PyTorch module: the identity shortcut
        # (used whenever ch_in == ch_out) is only shape-consistent for stride 1.
        raise ValueError("identity shortcut requires stride == 1")

    Hp, Wp = H + 2, W + 2
    Ho = (Hp - 3) // s + 1
    Wo = (Wp - 3) // s + 1
    M = Ho * Wo
    Cp = _round_up(Cout, _LANE)          # lane-dense output channel dim
    Hpp = Ho + 2 // s                    # per-phase spatial extents
    Wpp = Wo + 2 // s

    # Phase-split the zero-padded input (NCHW -> NHWC, bf16).  This is a pure
    # rearrangement (same total bytes); every conv tap in the kernel becomes a
    # contiguous static slice of one phase slab — no 9x im2col inflation.
    x_nhwc = jnp.transpose(x_nchw, (0, 2, 3, 1)).astype(jnp.bfloat16)
    th, tw = s * Hpp, s * Wpp
    xp = jnp.pad(x_nhwc, ((0, 0),
                          (1, 1 + max(0, th - Hp)),
                          (1, 1 + max(0, tw - Wp)),
                          (0, 0)))[:, :th, :tw, :]
    xph = xp.reshape(N, Hpp, s, Wpp, s, Cin).transpose(0, 2, 4, 1, 3, 5)
    xph = xph.reshape(N * s * s, Hpp, Wpp, Cin)

    # Fold eval-mode BN (and conv bias) into the weights / a single bias.
    w1, b1 = _fold_conv_bn(params["w1"], params["cb1"], params["g1"],
                           params["be1"], params["m1"], params["v1"], Cin, Cp)
    w2, b2 = _fold_conv_bn(params["w2"], params["cb2"], params["g2"],
                           params["be2"], params["m2"], params["v2"], Cp, Cp)
    if Cin != Cout:
        wsc, bsc = _fold_conv_bn(params["we"], params["cbe"], params["ge"],
                                 params["bee"], params["me"], params["ve"],
                                 Cin, Cp)
        wsc = wsc[0]                                       # (Cin, Cp)
    else:
        wsc = jnp.pad(jnp.eye(Cin, dtype=jnp.float32),
                      ((0, 0), (0, Cp - Cin))).astype(jnp.bfloat16)
        bsc = jnp.zeros((1, Cp), jnp.float32)
    b_out = b2 + bsc                                       # fused epilogue bias

    kernel = functools.partial(_resblock_kernel, stride=s, Ho=Ho, Wo=Wo, Cin=Cin)
    flops = 2 * N * M * Cp * (9 * Cin + 9 * Cp + Cin)
    bytes_accessed = (xph.size * 2 + w1.size * 2 + w2.size * 2 + wsc.size * 2
                      + (b1.size + b_out.size) * 4 + N * M * Cp * 4)

    out = pl.pallas_call(
        kernel,
        out_shape=jax.ShapeDtypeStruct((N, M, Cp), jnp.float32),
        grid=(N,),
        in_specs=[
            pl.BlockSpec((s * s, Hpp, Wpp, Cin), lambda n: (n, 0, 0, 0)),
            pl.BlockSpec((9, Cin, Cp), lambda n: (0, 0, 0)),   # VMEM-resident
            pl.BlockSpec((1, Cp), lambda n: (0, 0)),           # VMEM-resident
            pl.BlockSpec((9, Cp, Cp), lambda n: (0, 0, 0)),    # VMEM-resident
            pl.BlockSpec((Cin, Cp), lambda n: (0, 0)),         # VMEM-resident
            pl.BlockSpec((1, Cp), lambda n: (0, 0)),           # VMEM-resident
        ],
        out_specs=pl.BlockSpec((1, M, Cp), lambda n: (n, 0, 0)),
        scratch_shapes=[pltpu.VMEM((Ho + 2, Wo + 2, Cp), jnp.float32)],
        compiler_params=pltpu.CompilerParams(
            dimension_semantics=("parallel",),
            vmem_limit_bytes=_VMEM_LIMIT),
        cost_estimate=pl.CostEstimate(flops=int(flops), transcendentals=0,
                                      bytes_accessed=int(bytes_accessed)),
    )(xph, w1, b1, w2, wsc, b_out)

    out = out[:, :, :Cout].reshape(N, Ho, Wo, Cout)
    return jnp.transpose(out, (0, 3, 1, 2)).astype(x_nchw.dtype)


# ---------------------------- pure-JAX reference ----------------------------

def _ref_conv(x, w, b, stride, pad):
    y = lax.conv_general_dilated(x, w, (stride, stride),
                                 [(pad, pad), (pad, pad)],
                                 dimension_numbers=("NCHW", "OIHW", "NCHW"))
    return y + b[None, :, None, None]


def _ref_bn(x, g, be, m, v):
    return (g[None, :, None, None] * (x - m[None, :, None, None])
            / jnp.sqrt(v[None, :, None, None] + _EPS) + be[None, :, None, None])


def ref_forward(x, p, stride):
    Cin = x.shape[1]
    Cout = p["w1"].shape[0]
    o = jax.nn.relu(_ref_bn(_ref_conv(x, p["w1"], p["cb1"], stride, 1),
                            p["g1"], p["be1"], p["m1"], p["v1"]))
    o = _ref_bn(_ref_conv(o, p["w2"], p["cb2"], 1, 1),
                p["g2"], p["be2"], p["m2"], p["v2"])
    if Cin != Cout:
        sc = _ref_bn(_ref_conv(x, p["we"], p["cbe"], stride, 0),
                     p["ge"], p["bee"], p["me"], p["ve"])
    else:
        sc = x
    return jax.nn.relu(sc + o)


# ---------------------------------- main ------------------------------------

def _make_params(key, cin, cout):
    ks = jax.random.split(key, 12)
    f32 = jnp.float32

    def bn(k, c):
        k1, k2, k3, k4 = jax.random.split(k, 4)
        return (1.0 + 0.1 * jax.random.normal(k1, (c,), f32),       # gamma
                0.1 * jax.random.normal(k2, (c,), f32),             # beta
                0.1 * jax.random.normal(k3, (c,), f32),             # running mean
                0.5 + jnp.abs(jax.random.normal(k4, (c,), f32)))    # running var

    g1, be1, m1, v1 = bn(ks[0], cout)
    g2, be2, m2, v2 = bn(ks[1], cout)
    ge, bee, me, ve = bn(ks[2], cout)
    return dict(
        w1=0.1 * jax.random.normal(ks[3], (cout, cin, 3, 3), f32),
        cb1=0.1 * jax.random.normal(ks[4], (cout,), f32),
        g1=g1, be1=be1, m1=m1, v1=v1,
        w2=0.1 * jax.random.normal(ks[5], (cout, cout, 3, 3), f32),
        cb2=0.1 * jax.random.normal(ks[6], (cout,), f32),
        g2=g2, be2=be2, m2=m2, v2=v2,
        we=0.1 * jax.random.normal(ks[7], (cout, cin, 1, 1), f32),
        cbe=0.1 * jax.random.normal(ks[8], (cout,), f32),
        ge=ge, bee=bee, me=me, ve=ve,
    )


if __name__ == "__main__":
    configs = [
        # (N, Cin, Cout, H, W, stride)
        (2, 4, 8, 16, 16, 2),   # projection shortcut (1x1 conv + BN), downsample
        (2, 8, 8, 16, 16, 1),   # identity shortcut
    ]
    key = jax.random.PRNGKey(0)
    for idx, (N, Cin, Cout, H, W, stride) in enumerate(configs):
        kp, kx, key = jax.random.split(key, 3)
        params = _make_params(kp, Cin, Cout)
        x = jax.random.normal(kx, (N, Cin, H, W), jnp.float32)

        fwd = jax.jit(lambda xx, pp, s=stride: resblock_forward(xx, pp, s))
        out = jax.block_until_ready(fwd(x, params))

        Ho = (H + 2 - 3) // stride + 1
        Wo = (W + 2 - 3) // stride + 1
        assert out.shape == (N, Cout, Ho, Wo), out.shape

        ref = ref_forward(x, params, stride)
        max_err = float(jnp.max(jnp.abs(out - ref)))
        # bf16 activations / weights with f32 accumulation: small rounding error.
        if max_err > 5e-2:
            raise AssertionError(f"config {idx}: mismatch vs reference, "
                                 f"max abs err {max_err}")

    print("KERNEL_OK")
</pallas_src>

<mosaic_0001>
module attributes {stable_mosaic.version = 11 : i64} {
  func.func @_resblock_kernel(%arg0: i32, %arg1: memref<4x9x9x4xbf16, #tpu.memory_space<vmem>>, %arg2: memref<9x4x128xbf16, #tpu.memory_space<vmem>>, %arg3: memref<1x128xf32, #tpu.memory_space<vmem>>, %arg4: memref<9x128x128xbf16, #tpu.memory_space<vmem>>, %arg5: memref<4x128xbf16, #tpu.memory_space<vmem>>, %arg6: memref<1x128xf32, #tpu.memory_space<vmem>>, %arg7: memref<1x64x128xf32, #tpu.memory_space<vmem>>, %arg8: memref<10x10x128xf32, #tpu.memory_space<vmem>>) attributes {dimension_semantics = [#tpu.dimension_semantics<parallel>], iteration_bounds = array<i64: 2>, scalar_prefetch = 0 : i64, scratch_operands = 1 : i64, tpu.core_type = #tpu.core_type<tc>, window_params = [{transform_indices = @transform_0, window_bounds = array<i64: 4, 9, 9, 4>}, {pipeline_mode = #tpu.pipeline_mode<synchronous>, transform_indices = @transform_1, window_bounds = array<i64: 9, 4, 128>}, {pipeline_mode = #tpu.pipeline_mode<synchronous>, transform_indices = @transform_2, window_bounds = array<i64: 1, 128>}, {pipeline_mode = #tpu.pipeline_mode<synchronous>, transform_indices = @transform_3, window_bounds = array<i64: 9, 128, 128>}, {pipeline_mode = #tpu.pipeline_mode<synchronous>, transform_indices = @transform_4, window_bounds = array<i64: 4, 128>}, {pipeline_mode = #tpu.pipeline_mode<synchronous>, transform_indices = @transform_5, window_bounds = array<i64: 1, 128>}, {transform_indices = @transform_6, window_bounds = array<i64: 1, 64, 128>}]} {
    %cst = arith.constant 0.000000e+00 : f32
    %0 = vector.broadcast %cst : f32 to vector<64x128xf32>
    %c0 = arith.constant 0 : index
    %c0_0 = arith.constant 0 : index
    %c0_1 = arith.constant 0 : index
    %c0_2 = arith.constant 0 : index
    %1 = vector.load %arg1[%c0, %c0_0, %c0_1, %c0_2] : memref<4x9x9x4xbf16, #tpu.memory_space<vmem>>, vector<1x8x8x4xbf16>
    %2 = vector.shape_cast %1 : vector<1x8x8x4xbf16> to vector<8x8x4xbf16>
    %3 = vector.shape_cast %2 : vector<8x8x4xbf16> to vector<64x4xbf16>
    %c0_3 = arith.constant 0 : index
    %c0_4 = arith.constant 0 : index
    %c0_5 = arith.constant 0 : index
    %4 = vector.load %arg2[%c0_3, %c0_4, %c0_5] : memref<9x4x128xbf16, #tpu.memory_space<vmem>>, vector<1x4x128xbf16>
    %5 = vector.shape_cast %4 : vector<1x4x128xbf16> to vector<4x128xbf16>
    %cst_6 = arith.constant dense<0.000000e+00> : vector<64x128xf32>
    %6 = tpu.matmul %3, %5, %cst_6 {dimension_numbers = #tpu.dot_dimension_numbers<[1], [0], [0], [1], [0, 0, 1, 1], [], []>} : vector<64x4xbf16>, vector<4x128xbf16>, vector<64x128xf32> -> vector<64x128xf32>
    %7 = arith.addf %0, %6 : vector<64x128xf32>
    %c1 = arith.constant 1 : index
    %c0_7 = arith.constant 0 : index
    %c0_8 = arith.constant 0 : index
    %c0_9 = arith.constant 0 : index
    %8 = vector.load %arg1[%c1, %c0_7, %c0_8, %c0_9] : memref<4x9x9x4xbf16, #tpu.memory_space<vmem>>, vector<1x8x8x4xbf16>
    %9 = vector.shape_cast %8 : vector<1x8x8x4xbf16> to vector<8x8x4xbf16>
    %10 = vector.shape_cast %9 : vector<8x8x4xbf16> to vector<64x4xbf16>
    %c1_10 = arith.constant 1 : index
    %c0_11 = arith.constant 0 : index
    %c0_12 = arith.constant 0 : index
    %11 = vector.load %arg2[%c1_10, %c0_11, %c0_12] : memref<9x4x128xbf16, #tpu.memory_space<vmem>>, vector<1x4x128xbf16>
    %12 = vector.shape_cast %11 : vector<1x4x128xbf16> to vector<4x128xbf16>
    %cst_13 = arith.constant dense<0.000000e+00> : vector<64x128xf32>
    %13 = tpu.matmul %10, %12, %cst_13 {dimension_numbers = #tpu.dot_dimension_numbers<[1], [0], [0], [1], [0, 0, 1, 1], [], []>} : vector<64x4xbf16>, vector<4x128xbf16>, vector<64x128xf32> -> vector<64x128xf32>
    %14 = arith.addf %7, %13 : vector<64x128xf32>
    %c0_14 = arith.constant 0 : index
    %c0_15 = arith.constant 0 : index
    %c1_16 = arith.constant 1 : index
    %c0_17 = arith.constant 0 : index
    %15 = vector.load %arg1[%c0_14, %c0_15, %c1_16, %c0_17] : memref<4x9x9x4xbf16, #tpu.memory_space<vmem>>, vector<1x8x8x4xbf16>
    %16 = vector.shape_cast %15 : vector<1x8x8x4xbf16> to vector<8x8x4xbf16>
    %17 = vector.shape_cast %16 : vector<8x8x4xbf16> to vector<64x4xbf16>
    %c2 = arith.constant 2 : index
    %c0_18 = arith.constant 0 : index
    %c0_19 = arith.constant 0 : index
    %18 = vector.load %arg2[%c2, %c0_18, %c0_19] : memref<9x4x128xbf16, #tpu.memory_space<vmem>>, vector<1x4x128xbf16>
    %19 = vector.shape_cast %18 : vector<1x4x128xbf16> to vector<4x128xbf16>
    %cst_20 = arith.constant dense<0.000000e+00> : vector<64x128xf32>
    %20 = tpu.matmul %17, %19, %cst_20 {dimension_numbers = #tpu.dot_dimension_numbers<[1], [0], [0], [1], [0, 0, 1, 1], [], []>} : vector<64x4xbf16>, vector<4x128xbf16>, vector<64x128xf32> -> vector<64x128xf32>
    %21 = arith.addf %14, %20 : vector<64x128xf32>
    %c2_21 = arith.constant 2 : index
    %c0_22 = arith.constant 0 : index
    %c0_23 = arith.constant 0 : index
    %c0_24 = arith.constant 0 : index
    %22 = vector.load %arg1[%c2_21, %c0_22, %c0_23, %c0_24] : memref<4x9x9x4xbf16, #tpu.memory_space<vmem>>, vector<1x8x8x4xbf16>
    %23 = vector.shape_cast %22 : vector<1x8x8x4xbf16> to vector<8x8x4xbf16>
    %24 = vector.shape_cast %23 : vector<8x8x4xbf16> to vector<64x4xbf16>
    %c3 = arith.constant 3 : index
    %c0_25 = arith.constant 0 : index
    %c0_26 = arith.constant 0 : index
    %25 = vector.load %arg2[%c3, %c0_25, %c0_26] : memref<9x4x128xbf16, #tpu.memory_space<vmem>>, vector<1x4x128xbf16>
    %26 = vector.shape_cast %25 : vector<1x4x128xbf16> to vector<4x128xbf16>
    %cst_27 = arith.constant dense<0.000000e+00> : vector<64x128xf32>
    %27 = tpu.matmul %24, %26, %cst_27 {dimension_numbers = #tpu.dot_dimension_numbers<[1], [0], [0], [1], [0, 0, 1, 1], [], []>} : vector<64x4xbf16>, vector<4x128xbf16>, vector<64x128xf32> -> vector<64x128xf32>
    %28 = arith.addf %21, %27 : vector<64x128xf32>
    %c3_28 = arith.constant 3 : index
    %c0_29 = arith.constant 0 : index
    %c0_30 = arith.constant 0 : index
    %c0_31 = arith.constant 0 : index
    %29 = vector.load %arg1[%c3_28, %c0_29, %c0_30, %c0_31] : memref<4x9x9x4xbf16, #tpu.memory_space<vmem>>, vector<1x8x8x4xbf16>
    %30 = vector.shape_cast %29 : vector<1x8x8x4xbf16> to vector<8x8x4xbf16>
    %31 = vector.shape_cast %30 : vector<8x8x4xbf16> to vector<64x4xbf16>
    %c4 = arith.constant 4 : index
    %c0_32 = arith.constant 0 : index
    %c0_33 = arith.constant 0 : index
    %32 = vector.load %arg2[%c4, %c0_32, %c0_33] : memref<9x4x128xbf16, #tpu.memory_space<vmem>>, vector<1x4x128xbf16>
    %33 = vector.shape_cast %32 : vector<1x4x128xbf16> to vector<4x128xbf16>
    %cst_34 = arith.constant dense<0.000000e+00> : vector<64x128xf32>
    %34 = tpu.matmul %31, %33, %cst_34 {dimension_numbers = #tpu.dot_dimension_numbers<[1], [0], [0], [1], [0, 0, 1, 1], [], []>} : vector<64x4xbf16>, vector<4x128xbf16>, vector<64x128xf32> -> vector<64x128xf32>
    %35 = arith.addf %28, %34 : vector<64x128xf32>
    %c2_35 = arith.constant 2 : index
    %c0_36 = arith.constant 0 : index
    %c1_37 = arith.constant 1 : index
    %c0_38 = arith.constant 0 : index
    %36 = vector.load %arg1[%c2_35, %c0_36, %c1_37, %c0_38] : memref<4x9x9x4xbf16, #tpu.memory_space<vmem>>, vector<1x8x8x4xbf16>
    %37 = vector.shape_cast %36 : vector<1x8x8x4xbf16> to vector<8x8x4xbf16>
    %38 = vector.shape_cast %37 : vector<8x8x4xbf16> to vector<64x4xbf16>
    %c5 = arith.constant 5 : index
    %c0_39 = arith.constant 0 : index
    %c0_40 = arith.constant 0 : index
    %39 = vector.load %arg2[%c5, %c0_39, %c0_40] : memref<9x4x128xbf16, #tpu.memory_space<vmem>>, vector<1x4x128xbf16>
    %40 = vector.shape_cast %39 : vector<1x4x128xbf16> to vector<4x128xbf16>
    %cst_41 = arith.constant dense<0.000000e+00> : vector<64x128xf32>
    %41 = tpu.matmul %38, %40, %cst_41 {dimension_numbers = #tpu.dot_dimension_numbers<[1], [0], [0], [1], [0, 0, 1, 1], [], []>} : vector<64x4xbf16>, vector<4x128xbf16>, vector<64x128xf32> -> vector<64x128xf32>
    %42 = arith.addf %35, %41 : vector<64x128xf32>
    %c0_42 = arith.constant 0 : index
    %c1_43 = arith.constant 1 : index
    %c0_44 = arith.constant 0 : index
    %c0_45 = arith.constant 0 : index
    %43 = vector.load %arg1[%c0_42, %c1_43, %c0_44, %c0_45] : memref<4x9x9x4xbf16, #tpu.memory_space<vmem>>, vector<1x8x8x4xbf16>
    %44 = vector.shape_cast %43 : vector<1x8x8x4xbf16> to vector<8x8x4xbf16>
    %45 = vector.shape_cast %44 : vector<8x8x4xbf16> to vector<64x4xbf16>
    %c6 = arith.constant 6 : index
    %c0_46 = arith.constant 0 : index
    %c0_47 = arith.constant 0 : index
    %46 = vector.load %arg2[%c6, %c0_46, %c0_47] : memref<9x4x128xbf16, #tpu.memory_space<vmem>>, vector<1x4x128xbf16>
    %47 = vector.shape_cast %46 : vector<1x4x128xbf16> to vector<4x128xbf16>
    %cst_48 = arith.constant dense<0.000000e+00> : vector<64x128xf32>
    %48 = tpu.matmul %45, %47, %cst_48 {dimension_numbers = #tpu.dot_dimension_numbers<[1], [0], [0], [1], [0, 0, 1, 1], [], []>} : vector<64x4xbf16>, vector<4x128xbf16>, vector<64x128xf32> -> vector<64x128xf32>
    %49 = arith.addf %42, %48 : vector<64x128xf32>
    %c1_49 = arith.constant 1 : index
    %c1_50 = arith.constant 1 : index
    %c0_51 = arith.constant 0 : index
    %c0_52 = arith.constant 0 : index
    %50 = vector.load %arg1[%c1_49, %c1_50, %c0_51, %c0_52] : memref<4x9x9x4xbf16, #tpu.memory_space<vmem>>, vector<1x8x8x4xbf16>
    %51 = vector.shape_cast %50 : vector<1x8x8x4xbf16> to vector<8x8x4xbf16>
    %52 = vector.shape_cast %51 : vector<8x8x4xbf16> to vector<64x4xbf16>
    %c7 = arith.constant 7 : index
    %c0_53 = arith.constant 0 : index
    %c0_54 = arith.constant 0 : index
    %53 = vector.load %arg2[%c7, %c0_53, %c0_54] : memref<9x4x128xbf16, #tpu.memory_space<vmem>>, vector<1x4x128xbf16>
    %54 = vector.shape_cast %53 : vector<1x4x128xbf16> to vector<4x128xbf16>
    %cst_55 = arith.constant dense<0.000000e+00> : vector<64x128xf32>
    %55 = tpu.matmul %52, %54, %cst_55 {dimension_numbers = #tpu.dot_dimension_numbers<[1], [0], [0], [1], [0, 0, 1, 1], [], []>} : vector<64x4xbf16>, vector<4x128xbf16>, vector<64x128xf32> -> vector<64x128xf32>
    %56 = arith.addf %49, %55 : vector<64x128xf32>
    %c0_56 = arith.constant 0 : index
    %c1_57 = arith.constant 1 : index
    %c1_58 = arith.constant 1 : index
    %c0_59 = arith.constant 0 : index
    %57 = vector.load %arg1[%c0_56, %c1_57, %c1_58, %c0_59] : memref<4x9x9x4xbf16, #tpu.memory_space<vmem>>, vector<1x8x8x4xbf16>
    %58 = vector.shape_cast %57 : vector<1x8x8x4xbf16> to vector<8x8x4xbf16>
    %59 = vector.shape_cast %58 : vector<8x8x4xbf16> to vector<64x4xbf16>
    %c8 = arith.constant 8 : index
    %c0_60 = arith.constant 0 : index
    %c0_61 = arith.constant 0 : index
    %60 = vector.load %arg2[%c8, %c0_60, %c0_61] : memref<9x4x128xbf16, #tpu.memory_space<vmem>>, vector<1x4x128xbf16>
    %61 = vector.shape_cast %60 : vector<1x4x128xbf16> to vector<4x128xbf16>
    %cst_62 = arith.constant dense<0.000000e+00> : vector<64x128xf32>
    %62 = tpu.matmul %59, %61, %cst_62 {dimension_numbers = #tpu.dot_dimension_numbers<[1], [0], [0], [1], [0, 0, 1, 1], [], []>} : vector<64x4xbf16>, vector<4x128xbf16>, vector<64x128xf32> -> vector<64x128xf32>
    %63 = arith.addf %56, %62 : vector<64x128xf32>
    %c0_63 = arith.constant 0 : index
    %c0_64 = arith.constant 0 : index
    %64 = vector.load %arg3[%c0_63, %c0_64] : memref<1x128xf32, #tpu.memory_space<vmem>>, vector<1x128xf32>
    %65 = vector.broadcast %64 : vector<1x128xf32> to vector<64x128xf32>
    %66 = arith.addf %63, %65 : vector<64x128xf32>
    %cst_65 = arith.constant 0.000000e+00 : f32
    %67 = vector.broadcast %cst_65 : f32 to vector<64x128xf32>
    %68 = arith.maximumf %66, %67 : vector<64x128xf32>
    %cst_66 = arith.constant 0.000000e+00 : f32
    %69 = vector.broadcast %cst_66 : f32 to vector<10x10x128xf32>
    %c0_67 = arith.constant 0 : index
    %c0_68 = arith.constant 0 : index
    %c0_69 = arith.constant 0 : index
    %70 = vector.load %arg8[%c0_67, %c0_68, %c0_69] : memref<10x10x128xf32, #tpu.memory_space<vmem>>, vector<10x10x128xf32>
    tpu.vector_store %arg8[%c0_67, %c0_68, %c0_69], %69 {strides = array<i32>} : memref<10x10x128xf32, #tpu.memory_space<vmem>>, vector<10x10x128xf32>,
    %71 = vector.shape_cast %68 : vector<64x128xf32> to vector<8x8x128xf32>
    %c1_70 = arith.constant 1 : index
    %c1_71 = arith.constant 1 : index
    %c0_72 = arith.constant 0 : index
    %72 = vector.load %arg8[%c1_70, %c1_71, %c0_72] : memref<10x10x128xf32, #tpu.memory_space<vmem>>, vector<8x8x128xf32>
    tpu.vector_store %arg8[%c1_70, %c1_71, %c0_72], %71 {strides = array<i32>} : memref<10x10x128xf32, #tpu.memory_space<vmem>>, vector<8x8x128xf32>,
    %cst_73 = arith.constant 0.000000e+00 : f32
    %73 = vector.broadcast %cst_73 : f32 to vector<64x128xf32>
    %c0_74 = arith.constant 0 : index
    %c0_75 = arith.constant 0 : index
    %c0_76 = arith.constant 0 : index
    %74 = vector.load %arg8[%c0_74, %c0_75, %c0_76] : memref<10x10x128xf32, #tpu.memory_space<vmem>>, vector<8x8x128xf32>
    %75 = arith.truncf %74 : vector<8x8x128xf32> to vector<8x8x128xbf16>
    %76 = vector.shape_cast %75 : vector<8x8x128xbf16> to vector<64x128xbf16>
    %c0_77 = arith.constant 0 : index
    %c0_78 = arith.constant 0 : index
    %c0_79 = arith.constant 0 : index
    %77 = vector.load %arg4[%c0_77, %c0_78, %c0_79] : memref<9x128x128xbf16, #tpu.memory_space<vmem>>, vector<1x128x128xbf16>
    %78 = vector.shape_cast %77 : vector<1x128x128xbf16> to vector<128x128xbf16>
    %cst_80 = arith.constant dense<0.000000e+00> : vector<64x128xf32>
    %79 = tpu.matmul %76, %78, %cst_80 {dimension_numbers = #tpu.dot_dimension_numbers<[1], [0], [0], [1], [0, 0, 1, 1], [], []>} : vector<64x128xbf16>, vector<128x128xbf16>, vector<64x128xf32> -> vector<64x128xf32>
    %80 = arith.addf %73, %79 : vector<64x128xf32>
    %c0_81 = arith.constant 0 : index
    %c1_82 = arith.constant 1 : index
    %c0_83 = arith.constant 0 : index
    %81 = vector.load %arg8[%c0_81, %c1_82, %c0_83] : memref<10x10x128xf32, #tpu.memory_space<vmem>>, vector<8x8x128xf32>
    %82 = arith.truncf %81 : vector<8x8x128xf32> to vector<8x8x128xbf16>
    %83 = vector.shape_cast %82 : vector<8x8x128xbf16> to vector<64x128xbf16>
    %c1_84 = arith.constant 1 : index
    %c0_85 = arith.constant 0 : index
    %c0_86 = arith.constant 0 : index
    %84 = vector.load %arg4[%c1_84, %c0_85, %c0_86] : memref<9x128x128xbf16, #tpu.memory_space<vmem>>, vector<1x128x128xbf16>
    %85 = vector.shape_cast %84 : vector<1x128x128xbf16> to vector<128x128xbf16>
    %cst_87 = arith.constant dense<0.000000e+00> : vector<64x128xf32>
    %86 = tpu.matmul %83, %85, %cst_87 {dimension_numbers = #tpu.dot_dimension_numbers<[1], [0], [0], [1], [0, 0, 1, 1], [], []>} : vector<64x128xbf16>, vector<128x128xbf16>, vector<64x128xf32> -> vector<64x128xf32>
    %87 = arith.addf %80, %86 : vector<64x128xf32>
    %c0_88 = arith.constant 0 : index
    %c2_89 = arith.constant 2 : index
    %c0_90 = arith.constant 0 : index
    %88 = vector.load %arg8[%c0_88, %c2_89, %c0_90] : memref<10x10x128xf32, #tpu.memory_space<vmem>>, vector<8x8x128xf32>
    %89 = arith.truncf %88 : vector<8x8x128xf32> to vector<8x8x128xbf16>
    %90 = vector.shape_cast %89 : vector<8x8x128xbf16> to vector<64x128xbf16>
    %c2_91 = arith.constant 2 : index
    %c0_92 = arith.constant 0 : index
    %c0_93 = arith.constant 0 : index
    %91 = vector.load %arg4[%c2_91, %c0_92, %c0_93] : memref<9x128x128xbf16, #tpu.memory_space<vmem>>, vector<1x128x128xbf16>
    %92 = vector.shape_cast %91 : vector<1x128x128xbf16> to vector<128x128xbf16>
    %cst_94 = arith.constant dense<0.000000e+00> : vector<64x128xf32>
    %93 = tpu.matmul %90, %92, %cst_94 {dimension_numbers = #tpu.dot_dimension_numbers<[1], [0], [0], [1], [0, 0, 1, 1], [], []>} : vector<64x128xbf16>, vector<128x128xbf16>, vector<64x128xf32> -> vector<64x128xf32>
    %94 = arith.addf %87, %93 : vector<64x128xf32>
    %c1_95 = arith.constant 1 : index
    %c0_96 = arith.constant 0 : index
    %c0_97 = arith.constant 0 : index
    %95 = vector.load %arg8[%c1_95, %c0_96, %c0_97] : memref<10x10x128xf32, #tpu.memory_space<vmem>>, vector<8x8x128xf32>
    %96 = arith.truncf %95 : vector<8x8x128xf32> to vector<8x8x128xbf16>
    %97 = vector.shape_cast %96 : vector<8x8x128xbf16> to vector<64x128xbf16>
    %c3_98 = arith.constant 3 : index
    %c0_99 = arith.constant 0 : index
    %c0_100 = arith.constant 0 : index
    %98 = vector.load %arg4[%c3_98, %c0_99, %c0_100] : memref<9x128x128xbf16, #tpu.memory_space<vmem>>, vector<1x128x128xbf16>
    %99 = vector.shape_cast %98 : vector<1x128x128xbf16> to vector<128x128xbf16>
    %cst_101 = arith.constant dense<0.000000e+00> : vector<64x128xf32>
    %100 = tpu.matmul %97, %99, %cst_101 {dimension_numbers = #tpu.dot_dimension_numbers<[1], [0], [0], [1], [0, 0, 1, 1], [], []>} : vector<64x128xbf16>, vector<128x128xbf16>, vector<64x128xf32> -> vector<64x128xf32>
    %101 = arith.addf %94, %100 : vector<64x128xf32>
    %c1_102 = arith.constant 1 : index
    %c1_103 = arith.constant 1 : index
    %c0_104 = arith.constant 0 : index
    %102 = vector.load %arg8[%c1_102, %c1_103, %c0_104] : memref<10x10x128xf32, #tpu.memory_space<vmem>>, vector<8x8x128xf32>
    %103 = arith.truncf %102 : vector<8x8x128xf32> to vector<8x8x128xbf16>
    %104 = vector.shape_cast %103 : vector<8x8x128xbf16> to vector<64x128xbf16>
    %c4_105 = arith.constant 4 : index
    %c0_106 = arith.constant 0 : index
    %c0_107 = arith.constant 0 : index
    %105 = vector.load %arg4[%c4_105, %c0_106, %c0_107] : memref<9x128x128xbf16, #tpu.memory_space<vmem>>, vector<1x128x128xbf16>
    %106 = vector.shape_cast %105 : vector<1x128x128xbf16> to vector<128x128xbf16>
    %cst_108 = arith.constant dense<0.000000e+00> : vector<64x128xf32>
    %107 = tpu.matmul %104, %106, %cst_108 {dimension_numbers = #tpu.dot_dimension_numbers<[1], [0], [0], [1], [0, 0, 1, 1], [], []>} : vector<64x128xbf16>, vector<128x128xbf16>, vector<64x128xf32> -> vector<64x128xf32>
    %108 = arith.addf %101, %107 : vector<64x128xf32>
    %c1_109 = arith.constant 1 : index
    %c2_110 = arith.constant 2 : index
    %c0_111 = arith.constant 0 : index
    %109 = vector.load %arg8[%c1_109, %c2_110, %c0_111] : memref<10x10x128xf32, #tpu.memory_space<vmem>>, vector<8x8x128xf32>
    %110 = arith.truncf %109 : vector<8x8x128xf32> to vector<8x8x128xbf16>
    %111 = vector.shape_cast %110 : vector<8x8x128xbf16> to vector<64x128xbf16>
    %c5_112 = arith.constant 5 : index
    %c0_113 = arith.constant 0 : index
    %c0_114 = arith.constant 0 : index
    %112 = vector.load %arg4[%c5_112, %c0_113, %c0_114] : memref<9x128x128xbf16, #tpu.memory_space<vmem>>, vector<1x128x128xbf16>
    %113 = vector.shape_cast %112 : vector<1x128x128xbf16> to vector<128x128xbf16>
    %cst_115 = arith.constant dense<0.000000e+00> : vector<64x128xf32>
    %114 = tpu.matmul %111, %113, %cst_115 {dimension_numbers = #tpu.dot_dimension_numbers<[1], [0], [0], [1], [0, 0, 1, 1], [], []>} : vector<64x128xbf16>, vector<128x128xbf16>, vector<64x128xf32> -> vector<64x128xf32>
    %115 = arith.addf %108, %114 : vector<64x128xf32>
    %c2_116 = arith.constant 2 : index
    %c0_117 = arith.constant 0 : index
    %c0_118 = arith.constant 0 : index
    %116 = vector.load %arg8[%c2_116, %c0_117, %c0_118] : memref<10x10x128xf32, #tpu.memory_space<vmem>>, vector<8x8x128xf32>
    %117 = arith.truncf %116 : vector<8x8x128xf32> to vector<8x8x128xbf16>
    %118 = vector.shape_cast %117 : vector<8x8x128xbf16> to vector<64x128xbf16>
    %c6_119 = arith.constant 6 : index
    %c0_120 = arith.constant 0 : index
    %c0_121 = arith.constant 0 : index
    %119 = vector.load %arg4[%c6_119, %c0_120, %c0_121] : memref<9x128x128xbf16, #tpu.memory_space<vmem>>, vector<1x128x128xbf16>
    %120 = vector.shape_cast %119 : vector<1x128x128xbf16> to vector<128x128xbf16>
    %cst_122 = arith.constant dense<0.000000e+00> : vector<64x128xf32>
    %121 = tpu.matmul %118, %120, %cst_122 {dimension_numbers = #tpu.dot_dimension_numbers<[1], [0], [0], [1], [0, 0, 1, 1], [], []>} : vector<64x128xbf16>, vector<128x128xbf16>, vector<64x128xf32> -> vector<64x128xf32>
    %122 = arith.addf %115, %121 : vector<64x128xf32>
    %c2_123 = arith.constant 2 : index
    %c1_124 = arith.constant 1 : index
    %c0_125 = arith.constant 0 : index
    %123 = vector.load %arg8[%c2_123, %c1_124, %c0_125] : memref<10x10x128xf32, #tpu.memory_space<vmem>>, vector<8x8x128xf32>
    %124 = arith.truncf %123 : vector<8x8x128xf32> to vector<8x8x128xbf16>
    %125 = vector.shape_cast %124 : vector<8x8x128xbf16> to vector<64x128xbf16>
    %c7_126 = arith.constant 7 : index
    %c0_127 = arith.constant 0 : index
    %c0_128 = arith.constant 0 : index
    %126 = vector.load %arg4[%c7_126, %c0_127, %c0_128] : memref<9x128x128xbf16, #tpu.memory_space<vmem>>, vector<1x128x128xbf16>
    %127 = vector.shape_cast %126 : vector<1x128x128xbf16> to vector<128x128xbf16>
    %cst_129 = arith.constant dense<0.000000e+00> : vector<64x128xf32>
    %128 = tpu.matmul %125, %127, %cst_129 {dimension_numbers = #tpu.dot_dimension_numbers<[1], [0], [0], [1], [0, 0, 1, 1], [], []>} : vector<64x128xbf16>, vector<128x128xbf16>, vector<64x128xf32> -> vector<64x128xf32>
    %129 = arith.addf %122, %128 : vector<64x128xf32>
    %c2_130 = arith.constant 2 : index
    %c2_131 = arith.constant 2 : index
    %c0_132 = arith.constant 0 : index
    %130 = vector.load %arg8[%c2_130, %c2_131, %c0_132] : memref<10x10x128xf32, #tpu.memory_space<vmem>>, vector<8x8x128xf32>
    %131 = arith.truncf %130 : vector<8x8x128xf32> to vector<8x8x128xbf16>
    %132 = vector.shape_cast %131 : vector<8x8x128xbf16> to vector<64x128xbf16>
    %c8_133 = arith.constant 8 : index
    %c0_134 = arith.constant 0 : index
    %c0_135 = arith.constant 0 : index
    %133 = vector.load %arg4[%c8_133, %c0_134, %c0_135] : memref<9x128x128xbf16, #tpu.memory_space<vmem>>, vector<1x128x128xbf16>
    %134 = vector.shape_cast %133 : vector<1x128x128xbf16> to vector<128x128xbf16>
    %cst_136 = arith.constant dense<0.000000e+00> : vector<64x128xf32>
    %135 = tpu.matmul %132, %134, %cst_136 {dimension_numbers = #tpu.dot_dimension_numbers<[1], [0], [0], [1], [0, 0, 1, 1], [], []>} : vector<64x128xbf16>, vector<128x128xbf16>, vector<64x128xf32> -> vector<64x128xf32>
    %136 = arith.addf %129, %135 : vector<64x128xf32>
    %c3_137 = arith.constant 3 : index
    %c0_138 = arith.constant 0 : index
    %c0_139 = arith.constant 0 : index
    %c0_140 = arith.constant 0 : index
    %137 = vector.load %arg1[%c3_137, %c0_138, %c0_139, %c0_140] : memref<4x9x9x4xbf16, #tpu.memory_space<vmem>>, vector<1x8x8x4xbf16>
    %138 = vector.shape_cast %137 : vector<1x8x8x4xbf16> to vector<8x8x4xbf16>
    %139 = vector.shape_cast %138 : vector<8x8x4xbf16> to vector<64x4xbf16>
    %c0_141 = arith.constant 0 : index
    %c0_142 = arith.constant 0 : index
    %140 = vector.load %arg5[%c0_141, %c0_142] : memref<4x128xbf16, #tpu.memory_space<vmem>>, vector<4x128xbf16>
    %cst_143 = arith.constant dense<0.000000e+00> : vector<64x128xf32>
    %141 = tpu.matmul %139, %140, %cst_143 {dimension_numbers = #tpu.dot_dimension_numbers<[1], [0], [0], [1], [0, 0, 1, 1], [], []>} : vector<64x4xbf16>, vector<4x128xbf16>, vector<64x128xf32> -> vector<64x128xf32>
    %142 = arith.addf %136, %141 : vector<64x128xf32>
    %c0_144 = arith.constant 0 : index
    %c0_145 = arith.constant 0 : index
    %143 = vector.load %arg6[%c0_144, %c0_145] : memref<1x128xf32, #tpu.memory_space<vmem>>, vector<1x128xf32>
    %144 = vector.broadcast %143 : vector<1x128xf32> to vector<64x128xf32>
    %145 = arith.addf %142, %144 : vector<64x128xf32>
    %cst_146 = arith.constant 0.000000e+00 : f32
    %146 = vector.broadcast %cst_146 : f32 to vector<64x128xf32>
    %147 = arith.maximumf %145, %146 : vector<64x128xf32>
    %c0_147 = arith.constant 0 : index
    %c0_148 = arith.constant 0 : index
    %c0_149 = arith.constant 0 : index
    %148 = vector.load %arg7[%c0_147, %c0_148, %c0_149] : memref<1x64x128xf32, #tpu.memory_space<vmem>>, vector<1x64x128xf32>
    %149 = vector.shape_cast %148 : vector<1x64x128xf32> to vector<64x128xf32>
    %150 = vector.shape_cast %147 : vector<64x128xf32> to vector<1x64x128xf32>
    tpu.vector_store %arg7[%c0_147, %c0_148, %c0_149], %150 {strides = array<i32>} : memref<1x64x128xf32, #tpu.memory_space<vmem>>, vector<1x64x128xf32>,
    return
  }
  func.func @transform_0(%arg0: i32) -> (i32, i32, i32, i32) {
    %c0_i32 = arith.constant 0 : i32
    %c0_i32_0 = arith.constant 0 : i32
    %c0_i32_1 = arith.constant 0 : i32
    %c0_i32_2 = arith.constant 0 : i32
    return %arg0, %c0_i32, %c0_i32_0, %c0_i32_1 : i32, i32, i32, i32
  }
  func.func @transform_1(%arg0: i32) -> (i32, i32, i32) {
    %c0_i32 = arith.constant 0 : i32
    %c0_i32_0 = arith.constant 0 : i32
    %c0_i32_1 = arith.constant 0 : i32
    %c0_i32_2 = arith.constant 0 : i32
    return %c0_i32, %c0_i32_0, %c0_i32_1 : i32, i32, i32
  }
  func.func @transform_2(%arg0: i32) -> (i32, i32) {
    %c0_i32 = arith.constant 0 : i32
    %c0_i32_0 = arith.constant 0 : i32
    %c0_i32_1 = arith.constant 0 : i32
    return %c0_i32, %c0_i32_0 : i32, i32
  }
  func.func @transform_3(%arg0: i32) -> (i32, i32, i32) {
    %c0_i32 = arith.constant 0 : i32
    %c0_i32_0 = arith.constant 0 : i32
    %c0_i32_1 = arith.constant 0 : i32
    %c0_i32_2 = arith.constant 0 : i32
    return %c0_i32, %c0_i32_0, %c0_i32_1 : i32, i32, i32
  }
  func.func @transform_4(%arg0: i32) -> (i32, i32) {
    %c0_i32 = arith.constant 0 : i32
    %c0_i32_0 = arith.constant 0 : i32
    %c0_i32_1 = arith.constant 0 : i32
    return %c0_i32, %c0_i32_0 : i32, i32
  }
  func.func @transform_5(%arg0: i32) -> (i32, i32) {
    %c0_i32 = arith.constant 0 : i32
    %c0_i32_0 = arith.constant 0 : i32
    %c0_i32_1 = arith.constant 0 : i32
    return %c0_i32, %c0_i32_0 : i32, i32
  }
  func.func @transform_6(%arg0: i32) -> (i32, i32, i32) {
    %c0_i32 = arith.constant 0 : i32
    %c0_i32_0 = arith.constant 0 : i32
    %c0_i32_1 = arith.constant 0 : i32
    return %arg0, %c0_i32, %c0_i32_0 : i32, i32, i32
  }
}

</mosaic_0001>

<llo_original>
// kernel: _lambda_.1
$region0: #{_lambda_.1}
  #allocation0 [shape = 'u32[]', space=smem, size = 0x4, offset = 0x4, fixed_abs, tag = 'smem constant byte address 0x4 - core index']
  #allocation1 [shape = 'u32[144,128]{1,0:T(1,128)}', space=vmem, size = 0x12000, scoped, tag = 'internal scratch']
  #allocation2 [shape = 'f32[10,10,128]{2,1,0:T(8,128)}', space=vmem, size = 0x14000, scoped, tag = 'scratch operand']
  %s0 = inlined_call_operand.vmem [shape: bf16[8,9,9,4], index: 0, kind: input, shape index: {}]
  %s1 = inlined_call_operand.vmem [shape: bf16[9,4,128], index: 1, kind: input, shape index: {}]
  %s2 = inlined_call_operand.vmem [shape: f32[1,128], index: 2, kind: input, shape index: {}]
  %s3 = inlined_call_operand.vmem [shape: bf16[9,128,128], index: 3, kind: input, shape index: {}]
  %s4 = inlined_call_operand.vmem [shape: bf16[4,128], index: 4, kind: input, shape index: {}]
  %s5 = inlined_call_operand.vmem [shape: f32[1,128], index: 5, kind: input, shape index: {}]
  %s6 = inlined_call_operand.vmem [shape: f32[2,64,128], index: 6, kind: output, shape index: {}]
  %s7 = sld [smem:[#allocation0]]
  $region57: #{_lambda_.1} parent=0
    _
  %s9 = ssub.s32 1, %s7
  %s10 = scalar_select 0, %s9, %s7
  loop: start=0, step=1, limit=4
  $region2: #{_lambda_.1} parent=0 // loop_pre_header
    _
  $region3: #{_lambda_.1} parent=0 // loop_header
    %s12 = sphi 0, %s16
    %p13 = scmp.ge.s32.totalorder %s12, 4
    %s22 = sphi 0, %s24
    %s25 = sphi 0, %s22
    %s26 = sphi 0, %s25
    %s42 = sphi 0, %s26
    %s46 = sphi 0, %s46
    %s48 = sphi 0, %s46
    %s49 = sphi 0, %s48
    %s63 = sphi 0, %s49
    %s67 = sphi 0, %s67
    %s69 = sphi 0, %s67
    %s70 = sphi 0, %s69
    %s84 = sphi 0, %s70
    %s88 = sphi 0, %s88
    %s90 = sphi 0, %s88
    %s91 = sphi 0, %s90
    %s105 = sphi 0, %s91
    %s109 = sphi 0, %s109
    %s111 = sphi 0, %s109
    %s112 = sphi 0, %s111
    %s126 = sphi 0, %s112
    %s130 = sphi 0, %s130
    %s132 = sphi 0, %s130
    %s133 = sphi 0, %s132
    %s147 = sphi 0, %s133
    %s153 = sphi 0, %s155
    %s156 = sphi 0, %s153
    %s157 = sphi 0, %s156
    %s173 = sphi 0, %s157
  $region4: #{_lambda_.1} parent=0 // loop_header_branch
    %15 = sbr.rel (%p13) target = $region8
  $region5: #{_lambda_.1} parent=0 // loop_body
    %s17 = ssub.s32 %s12, 1
    %s18 = ssub.s32 %s12, 2
    %s19 = sadd.s32 %s12, 1
    %s20 = ssub.s32 %s12, %s19
    %p21 = scmp.eq.s32.totalorder %s20, 0
    %s23 = sadd.s32 %s22, 1
    %s24 = scalar_select %p21, %s22, %s23
    %p27 = pneg %p21
    %p28 = scmp.eq.s32.totalorder %s12, 1
    %p29 = por %p27, %p28
    %p30 = scmp.ne.s32.totalorder %s22, %s25
    %p31 = scmp.eq.s32.totalorder %s12, 0
    %p32 = por %p30, %p31
    %p33 = scmp.ne.s32.totalorder %s22, %s25
    %p34 = scmp.eq.s32.totalorder %s17, 1
    %p35 = por %p33, %p34
    %p36 = scmp.ne.s32.totalorder %s25, %s26
    %p37 = scmp.eq.s32.totalorder %s17, 0
    %p38 = por %p36, %p37
    %p39 = scmp.ne.s32.totalorder %s25, %s26
    %p40 = scmp.eq.s32.totalorder %s18, 1
    %p41 = por %p39, %p40
    %p43 = scmp.ne.s32.totalorder %s26, %s42
    %p44 = scmp.eq.s32.totalorder %s18, 0
    %p45 = por %p43, %p44
    %s47 = sadd.s32 %s46, 1
    %p50 = scmp.eq.s32.totalorder %s12, 1
    %p51 = scmp.ne.s32.totalorder %s46, %s48
    %p52 = scmp.eq.s32.totalorder %s12, 0
    %p53 = por %p51, %p52
    %p54 = scmp.ne.s32.totalorder %s46, %s48
    %p55 = scmp.eq.s32.totalorder %s17, 1
    %p56 = por %p54, %p55
    %p57 = scmp.ne.s32.totalorder %s48, %s49
    %p58 = scmp.eq.s32.totalorder %s17, 0
    %p59 = por %p57, %p58
    %p60 = scmp.ne.s32.totalorder %s48, %s49
    %p61 = scmp.eq.s32.totalorder %s18, 1
    %p62 = por %p60, %p61
    %p64 = scmp.ne.s32.totalorder %s49, %s63
    %p65 = scmp.eq.s32.totalorder %s18, 0
    %p66 = por %p64, %p65
    %s68 = sadd.s32 %s67, 1
    %p71 = scmp.eq.s32.totalorder %s12, 1
    %p72 = scmp.ne.s32.totalorder %s67, %s69
    %p73 = scmp.eq.s32.totalorder %s12, 0
    %p74 = por %p72, %p73
    %p75 = scmp.ne.s32.totalorder %s67, %s69
    %p76 = scmp.eq.s32.totalorder %s17, 1
    %p77 = por %p75, %p76
    %p78 = scmp.ne.s32.totalorder %s69, %s70
    %p79 = scmp.eq.s32.totalorder %s17, 0
    %p80 = por %p78, %p79
    %p81 = scmp.ne.s32.totalorder %s69, %s70
    %p82 = scmp.eq.s32.totalorder %s18, 1
    %p83 = por %p81, %p82
    %p85 = scmp.ne.s32.totalorder %s70, %s84
    %p86 = scmp.eq.s32.totalorder %s18, 0
    %p87 = por %p85, %p86
    %s89 = sadd.s32 %s88, 1
    %p92 = scmp.eq.s32.totalorder %s12, 1
    %p93 = scmp.ne.s32.totalorder %s88, %s90
    %p94 = scmp.eq.s32.totalorder %s12, 0
    %p95 = por %p93, %p94
    %p96 = scmp.ne.s32.totalorder %s88, %s90
    %p97 = scmp.eq.s32.totalorder %s17, 1
    %p98 = por %p96, %p97
    %p99 = scmp.ne.s32.totalorder %s90, %s91
    %p100 = scmp.eq.s32.totalorder %s17, 0
    %p101 = por %p99, %p100
    %p102 = scmp.ne.s32.totalorder %s90, %s91
    %p103 = scmp.eq.s32.totalorder %s18, 1
    %p104 = por %p102, %p103
    %p106 = scmp.ne.s32.totalorder %s91, %s105
    %p107 = scmp.eq.s32.totalorder %s18, 0
    %p108 = por %p106, %p107
    %s110 = sadd.s32 %s109, 1
    %p113 = scmp.eq.s32.totalorder %s12, 1
    %p114 = scmp.ne.s32.totalorder %s109, %s111
    %p115 = scmp.eq.s32.totalorder %s12, 0
    %p116 = por %p114, %p115
    %p117 = scmp.ne.s32.totalorder %s109, %s111
    %p118 = scmp.eq.s32.totalorder %s17, 1
    %p119 = por %p117, %p118
    %p120 = scmp.ne.s32.totalorder %s111, %s112
    %p121 = scmp.eq.s32.totalorder %s17, 0
    %p122 = por %p120, %p121
    %p123 = scmp.ne.s32.totalorder %s111, %s112
    %p124 = scmp.eq.s32.totalorder %s18, 1
    %p125 = por %p123, %p124
    %p127 = scmp.ne.s32.totalorder %s112, %s126
    %p128 = scmp.eq.s32.totalorder %s18, 0
    %p129 = por %p127, %p128
    %s131 = sadd.s32 %s130, 1
    %p134 = scmp.eq.s32.totalorder %s12, 1
    %p135 = scmp.ne.s32.totalorder %s130, %s132
    %p136 = scmp.eq.s32.totalorder %s12, 0
    %p137 = por %p135, %p136
    %p138 = scmp.ne.s32.totalorder %s130, %s132
    %p139 = scmp.eq.s32.totalorder %s17, 1
    %p140 = por %p138, %p139
    %p141 = scmp.ne.s32.totalorder %s132, %s133
    %p142 = scmp.eq.s32.totalorder %s17, 0
    %p143 = por %p141, %p142
    %p144 = scmp.ne.s32.totalorder %s132, %s133
    %p145 = scmp.eq.s32.totalorder %s18, 1
    %p146 = por %p144, %p145
    %p148 = scmp.ne.s32.totalorder %s133, %s147
    %p149 = scmp.eq.s32.totalorder %s18, 0
    %p150 = por %p148, %p149
    %s151 = ssub.s32 %s12, %s19
    %p152 = scmp.eq.s32.totalorder %s151, 0
    %s154 = sadd.s32 %s153, 1
    %s155 = scalar_select %p152, %s153, %s154
    %p158 = pneg %p152
    %p159 = scmp.eq.s32.totalorder %s12, 1
    %p160 = por %p158, %p159
    %p161 = scmp.ne.s32.totalorder %s153, %s156
    %p162 = scmp.eq.s32.totalorder %s12, 0
    %p163 = por %p161, %p162
    %p164 = scmp.ne.s32.totalorder %s153, %s156
    %p165 = scmp.eq.s32.totalorder %s17, 1
    %p166 = por %p164, %p165
    %p167 = scmp.ne.s32.totalorder %s156, %s157
    %p168 = scmp.eq.s32.totalorder %s17, 0
    %p169 = por %p167, %p168
    %p170 = scmp.ne.s32.totalorder %s156, %s157
    %p171 = scmp.eq.s32.totalorder %s18, 1
    %p172 = por %p170, %p171
    %p174 = scmp.ne.s32.totalorder %s157, %s173
    %p175 = scmp.eq.s32.totalorder %s18, 0
    %p176 = por %p174, %p175
    %p177 = scmp.le.s32.totalorder 1, %s12
    %p178 = scmp.lt.s32.totalorder %s12, 3
    %p179 = pnand %p177, %p178
    %p180 = pneg %p179
    // Predicated region
    $region9: #{_lambda_.1} parent=5 // pred_check
      _
    $region10: #{_lambda_.1} parent=5 // pred_check_branch
      %182 = sbr.rel (%p179) target = $region12
    $region11: #{_lambda_.1} parent=5 // pred_region
      %s183 = ssub.s32 %s12, 1
      // Predicated region
      $region13: #{_lambda_.1} parent=11 // pred_check
        %p184 = pneg %p59
      $region14: #{_lambda_.1} parent=11 // pred_check_branch
        %186 = sbr.rel (%p184) target = $region16
      $region15: #{_lambda_.1} parent=11 // pred_region
        _
      $region16: #{_lambda_.1} parent=11 // pred_fallthru
        _
      // Predicated region
      $region17: #{_lambda_.1} parent=11 // pred_check
        %p187 = pneg %p80
      $region18: #{_lambda_.1} parent=11 // pred_check_branch
        %189 = sbr.rel (%p187) target = $region20
      $region19: #{_lambda_.1} parent=11 // pred_region
        _
      $region20: #{_lambda_.1} parent=11 // pred_fallthru
        _
      // Predicated region
      $region21: #{_lambda_.1} parent=11 // pred_check
        %p190 = pneg %p101
      $region22: #{_lambda_.1} parent=11 // pred_check_branch
        %192 = sbr.rel (%p190) target = $region24
      $region23: #{_lambda_.1} parent=11 // pred_region
        _
      $region24: #{_lambda_.1} parent=11 // pred_fallthru
        _
      // Predicated region
      $region25: #{_lambda_.1} parent=11 // pred_check
        %p193 = pneg %p122
      $region26: #{_lambda_.1} parent=11 // pred_check_branch
        %195 = sbr.rel (%p193) target = $region28
      $region27: #{_lambda_.1} parent=11 // pred_region
        _
      $region28: #{_lambda_.1} parent=11 // pred_fallthru
        _
      // Predicated region
      $region29: #{_lambda_.1} parent=11 // pred_check
        %p196 = pneg %p143
      $region30: #{_lambda_.1} parent=11 // pred_check_branch
        %198 = sbr.rel (%p196) target = $region32
      $region31: #{_lambda_.1} parent=11 // pred_region
        _
      $region32: #{_lambda_.1} parent=11 // pred_fallthru
        _
    $region12: #{_lambda_.1} parent=5 // pred_fallthru
      _
    %p199 = scmp.lt.s32.totalorder %s12, 2
    // Predicated region
    $region33: #{_lambda_.1} parent=5 // pred_check
      %p200 = pneg %p199
    $region34: #{_lambda_.1} parent=5 // pred_check_branch
      %202 = sbr.rel (%p200) target = $region36
    $region35: #{_lambda_.1} parent=5 // pred_region
      // Predicated region
      $region37: #{_lambda_.1} parent=35 // pred_check
        %p203 = pneg %p32
      $region38: #{_lambda_.1} parent=35 // pred_check_branch
        %205 = sbr.rel (%p203) target = $region40
      $region39: #{_lambda_.1} parent=35 // pred_region
        %s206 = smul.u32 4, %s12
        %p207 = scmp.lt.s32.totalorder %s206, 7
        %s208 = scalar_select %p207, %s206, 7
        %s209 = smul.addr %s208, 18
        %s210 = smul.addr %s209, 4
        %s211 = scalar_lea.vmem %s0, %s210
        %s212 = smul.u32 4, %s12
      $region40: #{_lambda_.1} parent=35 // pred_fallthru
        _
    $region36: #{_lambda_.1} parent=5 // pred_fallthru
      _
    %p213 = scmp.le.s32.totalorder 1, %s12
    %p214 = scmp.lt.s32.totalorder %s12, 3
    %p215 = pnand %p213, %p214
    %p216 = pneg %p215
    // Predicated region
    $region41: #{_lambda_.1} parent=5 // pred_check
      _
    $region42: #{_lambda_.1} parent=5 // pred_check_branch
      %218 = sbr.rel (%p215) target = $region44
    $region43: #{_lambda_.1} parent=5 // pred_region
      %s219 = ssub.s32 %s12, 1
      %s220 = smul.u32 4, %s17
      %p221 = scmp.lt.s32.totalorder %s220, 7
      %s222 = scalar_select %p221, %s220, 7
      %s223 = smul.addr %s222, 18
      %s224 = smul.addr %s223, 4
      %s225 = scalar_lea.vmem %s0, %s224
      %p226 = pneg %p38
      %p227 = pneg %p35
      %p228 = pneg %p59
      %p229 = pneg %p56
      %p230 = pneg %p80
      %p231 = pneg %p77
      %p232 = pneg %p101
      %p233 = pneg %p98
      %p234 = pneg %p122
      %p235 = pneg %p119
      %p236 = pneg %p143
      %p237 = pneg %p140
      %p238 = pneg %p169
      %p239 = pneg %p166
      %p240 = scmp.lt.s32.totalorder %s17, 1
      %s241 = scalar_select %p240, %s17, 1
      %s242 = smul.addr %s241, 8
      %s243 = smul.addr %s242, 8
      %s244 = scalar_lea.vmem %s6, %s243
      %s245 = smul.u32 4, %s17
      %p246 = scmp.lt.s32.totalorder %s245, 7
      %s247 = scalar_select %p246, %s245, 7
      %s248 = smul.addr %s247, 18
      %s249 = smul.addr %s248, 4
      %s250 = scalar_lea.vmem %s0, %s249
      %s251 = smul.u32 4, %s17
      %p252 = scmp.lt.s32.totalorder %s17, 1
      %s253 = scalar_select %p252, %s17, 1
      %s254 = smul.addr %s253, 8
      %s255 = smul.addr %s254, 8
      %s256 = scalar_lea.vmem %s6, %s255
      %v258 = vld [vmem:[%s250] sm:$0xf]
      %v259 = vld [vmem:[%s250 + $0x8] sm:$0xf]
      %v260 = vld [vmem:[%s250 + $0x10] sm:$0xf]
      %v261 = vld [vmem:[%s250 + $0x18] sm:$0xf]
      %v262 = vld [vmem:[%s250 + $0x20] sm:$0xf]
      %v263 = vld [vmem:[%s250 + $0x28] sm:$0xf]
      %v264 = vld [vmem:[%s250 + $0x30] sm:$0xf]
      %v265 = vld [vmem:[%s250 + $0x38] sm:$0xf]
      %v266 = vld [vmem:[%s1] sm:$0x3]
      %s267 = scalar_lea.vmem %s250, 72
      %v268 = vld [vmem:[%s267] sm:$0xf]
      %v269 = vld [vmem:[%s267 + $0x8] sm:$0xf]
      %v270 = vld [vmem:[%s267 + $0x10] sm:$0xf]
      %v271 = vld [vmem:[%s267 + $0x18] sm:$0xf]
      %v272 = vld [vmem:[%s267 + $0x20] sm:$0xf]
      %v273 = vld [vmem:[%s267 + $0x28] sm:$0xf]
      %v274 = vld [vmem:[%s267 + $0x30] sm:$0xf]
      %v275 = vld [vmem:[%s267 + $0x38] sm:$0xf]
      %s276 = scalar_lea.vmem %s1, 2
      %v277 = vld [vmem:[%s276] sm:$0x3]
      %v286 = vunpack.c.l.b16 %v268
      %v287 = vunpack.c.l.b16 %v269
      %v288 = vunpack.c.l.b16 %v270
      %v289 = vunpack.c.l.b16 %v271
      %v290 = vunpack.c.l.b16 %v272
      %v291 = vunpack.c.l.b16 %v273
      %v292 = vunpack.c.l.b16 %v274
      %v293 = vunpack.c.l.b16 %v275
      %v294 = vpack.c.b16 %v287, %v286
      %v295 = vpack.c.b16 %v289, %v288
      %v296 = vpack.c.b16 %v291, %v290
      %v297 = vpack.c.b16 %v293, %v292
      %vm298 = vcmask 31744
      %v300 = vsel %vm298, %v294, 0
      %v303 = vsel %vm298, %v295, 0
      %v306 = vsel %vm298, %v296, 0
      %v309 = vsel %vm298, %v297, 0
      %vm311 = vcmask 1041408
      %v313 = vsel %vm311, %v277, 0
      %315 = vmatprep.subr.bf16.mxu0 0
      %316 = vmatpush1.bf16.msra.mxu0 0
      %317 = vmatprep.subr.bf16.mxu0 0
      %318 = vmatpush1.bf16.msra.mxu0 0
      %319 = vmatprep.subr.bf16.mxu0 0
      %320 = vmatpush1.bf16.msra.mxu0 0
      %321 = vmatprep.subr.bf16.mxu0 0
      %322 = vmatpush1.bf16.msra.mxu0 0
      %323 = vmatprep.subr.bf16.mxu0 0
      %324 = vmatpush1.bf16.msra.mxu0 0
      %325 = vmatprep.subr.bf16.mxu0 0
      %326 = vmatpush1.bf16.msra.mxu0 0
      %327 = vmatprep.subr.bf16.mxu0 0
      %328 = vmatpush1.bf16.msra.mxu0 0
      %329 = vmatprep.subr.bf16.mxu0 0
      %330 = vmatpush1.bf16.msra.mxu0 %v313
      %331 = vmatprep.subr.bf16.mxu0 0
      %332 = vmatpush2.bf16.msra.mxu0 0
      %333 = vmatprep.subr.bf16.mxu0 0
      %334 = vmatpush2.bf16.msra.mxu0 0
      %335 = vmatprep.subr.bf16.mxu0 0
      %336 = vmatpush2.bf16.msra.mxu0 0
      %337 = vmatprep.subr.bf16.mxu0 0
      %338 = vmatpush2.bf16.msra.mxu0 0
      %339 = vmatprep.subr.bf16.mxu0 0
      %340 = vmatpush2.bf16.msra.mxu0 0
      %341 = vmatprep.subr.bf16.mxu0 0
      %342 = vmatpush2.bf16.msra.mxu0 0
      %343 = vmatprep.subr.bf16.mxu0 0
      %344 = vmatpush2.bf16.msra.mxu0 0
      %345 = vmatprep.subr.bf16.mxu0 0
      %346 = vmatpush2.bf16.msra.mxu0 0
      %347 = vmatprep.mubr.bf16.mxu0 0
      %348 = vmatmul.mubr.bf16.gmra.mxu0 %v300
      %v349 = vpop.f32.mrf.mxu0
      %v350 = vadd.f32 0.0, %v349
      %v351 = vpop.f32.mrf.mxu0
      %v352 = vpop.f32.mrf.mxu0
      %v353 = vadd.f32 0.0, %v352
      %v354 = vpop.f32.mrf.mxu0
      %355 = vmatprep.mubr.bf16.mxu0 0
      %356 = vmatmul.mubr.bf16.gmra.mxu0 %v303
      %v357 = vpop.f32.mrf.mxu0
      %v358 = vadd.f32 0.0, %v357
      %v359 = vpop.f32.mrf.mxu0
      %v360 = vpop.f32.mrf.mxu0
      %v361 = vadd.f32 0.0, %v360
      %v362 = vpop.f32.mrf.mxu0
      %363 = vmatprep.mubr.bf16.mxu0 0
      %364 = vmatmul.mubr.bf16.gmra.mxu0 %v306
      %v365 = vpop.f32.mrf.mxu0
      %v366 = vadd.f32 0.0, %v365
      %v367 = vpop.f32.mrf.mxu0
      %v368 = vpop.f32.mrf.mxu0
      %v369 = vadd.f32 0.0, %v368
      %v370 = vpop.f32.mrf.mxu0
      %371 = vmatprep.mubr.bf16.mxu0 0
      %372 = vmatmul.mubr.bf16.gmra.mxu0 %v309
      %v373 = vpop.f32.mrf.mxu0
      %v374 = vadd.f32 0.0, %v373
      %v375 = vpop.f32.mrf.mxu0
      %v376 = vpop.f32.mrf.mxu0
      %v377 = vadd.f32 0.0, %v376
      %v378 = vpop.f32.mrf.mxu0
      %379 = vdwg.mxu0
      %v388 = vunpack.c.l.b16 %v258
      %v389 = vunpack.c.l.b16 %v259
      %v390 = vunpack.c.l.b16 %v260
      %v391 = vunpack.c.l.b16 %v261
      %v392 = vunpack.c.l.b16 %v262
      %v393 = vunpack.c.l.b16 %v263
      %v394 = vunpack.c.l.b16 %v264
      %v395 = vunpack.c.l.b16 %v265
      %v396 = vpack.c.b16 %v389, %v388
      %v397 = vpack.c.b16 %v391, %v390
      %v398 = vpack.c.b16 %v393, %v392
      %v399 = vpack.c.b16 %v395, %v394
      %v401 = vsel %vm298, %v396, 0
      %v404 = vsel %vm298, %v397, 0
      %v407 = vsel %vm298, %v398, 0
      %v410 = vsel %vm298, %v399, 0
      %v413 = vsel %vm311, %v266, 0
      %415 = vmatprep.subr.bf16.mxu0 0
      %416 = vmatpush1.bf16.msra.mxu0 0
      %417 = vmatprep.subr.bf16.mxu0 0
      %418 = vmatpush1.bf16.msra.mxu0 0
      %419 = vmatprep.subr.bf16.mxu0 0
      %420 = vmatpush1.bf16.msra.mxu0 0
      %421 = vmatprep.subr.bf16.mxu0 0
      %422 = vmatpush1.bf16.msra.mxu0 0
      %423 = vmatprep.subr.bf16.mxu0 0
      %424 = vmatpush1.bf16.msra.mxu0 0
      %425 = vmatprep.subr.bf16.mxu0 0
      %426 = vmatpush1.bf16.msra.mxu0 0
      %427 = vmatprep.subr.bf16.mxu0 0
      %428 = vmatpush1.bf16.msra.mxu0 0
      %429 = vmatprep.subr.bf16.mxu0 0
      %430 = vmatpush1.bf16.msra.mxu0 %v413
      %431 = vmatprep.subr.bf16.mxu0 0
      %432 = vmatpush2.bf16.msra.mxu0 0
      %433 = vmatprep.subr.bf16.mxu0 0
      %434 = vmatpush2.bf16.msra.mxu0 0
      %435 = vmatprep.subr.bf16.mxu0 0
      %436 = vmatpush2.bf16.msra.mxu0 0
      %437 = vmatprep.subr.bf16.mxu0 0
      %438 = vmatpush2.bf16.msra.mxu0 0
      %439 = vmatprep.subr.bf16.mxu0 0
      %440 = vmatpush2.bf16.msra.mxu0 0
      %441 = vmatprep.subr.bf16.mxu0 0
      %442 = vmatpush2.bf16.msra.mxu0 0
      %443 = vmatprep.subr.bf16.mxu0 0
      %444 = vmatpush2.bf16.msra.mxu0 0
      %445 = vmatprep.subr.bf16.mxu0 0
      %446 = vmatpush2.bf16.msra.mxu0 0
      %447 = vmatprep.mubr.bf16.mxu0 0
      %448 = vmatmul.mubr.bf16.gmra.mxu0 %v401
      %v449 = vpop.f32.mrf.mxu0
      %v450 = vadd.f32 %v350, %v449
      %v451 = vpop.f32.mrf.mxu0
      %v452 = vpop.f32.mrf.mxu0
      %v453 = vadd.f32 %v353, %v452
      %v454 = vpop.f32.mrf.mxu0
      %455 = vmatprep.mubr.bf16.mxu0 0
      %456 = vmatmul.mubr.bf16.gmra.mxu0 %v404
      %v457 = vpop.f32.mrf.mxu0
      %v458 = vadd.f32 %v358, %v457
      %v459 = vpop.f32.mrf.mxu0
      %v460 = vpop.f32.mrf.mxu0
      %v461 = vadd.f32 %v361, %v460
      %v462 = vpop.f32.mrf.mxu0
      %463 = vmatprep.mubr.bf16.mxu0 0
      %464 = vmatmul.mubr.bf16.gmra.mxu0 %v407
      %v465 = vpop.f32.mrf.mxu0
      %v466 = vadd.f32 %v366, %v465
      %v467 = vpop.f32.mrf.mxu0
      %v468 = vpop.f32.mrf.mxu0
      %v469 = vadd.f32 %v369, %v468
      %v470 = vpop.f32.mrf.mxu0
      %471 = vmatprep.mubr.bf16.mxu0 0
      %472 = vmatmul.mubr.bf16.gmra.mxu0 %v410
      %v473 = vpop.f32.mrf.mxu0
      %v474 = vadd.f32 %v374, %v473
      %v475 = vpop.f32.mrf.mxu0
      %v476 = vpop.f32.mrf.mxu0
      %v477 = vadd.f32 %v377, %v476
      %v478 = vpop.f32.mrf.mxu0
      %479 = vdwg.mxu0
      %v480 = vld [vmem:[%s250] sm:$0xf]
      %v481 = vld [vmem:[%s250 + $0x4] sm:$0x1]
      %v482 = vld [vmem:[%s250 + $0x8] sm:$0xf]
      %v483 = vld [vmem:[%s250 + $0xc] sm:$0x1]
      %v484 = vld [vmem:[%s250 + $0x10] sm:$0xf]
      %v485 = vld [vmem:[%s250 + $0x14] sm:$0x1]
      %v486 = vld [vmem:[%s250 + $0x18] sm:$0xf]
      %v487 = vld [vmem:[%s250 + $0x1c] sm:$0x1]
      %v488 = vld [vmem:[%s250 + $0x20] sm:$0xf]
      %v489 = vld [vmem:[%s250 + $0x24] sm:$0x1]
      %v490 = vld [vmem:[%s250 + $0x28] sm:$0xf]
      %v491 = vld [vmem:[%s250 + $0x2c] sm:$0x1]
      %v492 = vld [vmem:[%s250 + $0x30] sm:$0xf]
      %v493 = vld [vmem:[%s250 + $0x34] sm:$0x1]
      %v494 = vld [vmem:[%s250 + $0x38] sm:$0xf]
      %v495 = vld [vmem:[%s250 + $0x3c] sm:$0x1]
      %vm496 = vsmask.f32 3328
      %vm497 = vsmask.f32 7440
      %vm498 = vmor %vm496, %vm497
      %v500 = vshrl.u32 %v480, 16
      %v502 = vrot.slane %v500, 4
      %v503 = vshll.u32 %v480, 16
      %v505 = vrot.slane %v503, 5
      %v506 = vor.u32 %v502, %v505
      %v507 = vrot.slane %v506, 4
      %v509 = vshll.u32 %v481, 16
      %v511 = vrot.slane %v509, 5
      %v512 = vsel %vm498, %v507, %v511
      %v514 = vshrl.u32 %v482, 16
      %v516 = vrot.slane %v514, 4
      %v517 = vshll.u32 %v482, 16
      %v519 = vrot.slane %v517, 5
      %v520 = vor.u32 %v516, %v519
      %v521 = vrot.slane %v520, 4
      %v523 = vshll.u32 %v483, 16
      %v525 = vrot.slane %v523, 5
      %v526 = vsel %vm498, %v521, %v525
      %v528 = vshrl.u32 %v484, 16
      %v530 = vrot.slane %v528, 4
      %v531 = vshll.u32 %v484, 16
      %v533 = vrot.slane %v531, 5
      %v534 = vor.u32 %v530, %v533
      %v535 = vrot.slane %v534, 4
      %v537 = vshll.u32 %v485, 16
      %v539 = vrot.slane %v537, 5
      %v540 = vsel %vm498, %v535, %v539
      %v542 = vshrl.u32 %v486, 16
      %v544 = vrot.slane %v542, 4
      %v545 = vshll.u32 %v486, 16
      %v547 = vrot.slane %v545, 5
      %v548 = vor.u32 %v544, %v547
      %v549 = vrot.slane %v548, 4
      %v551 = vshll.u32 %v487, 16
      %v553 = vrot.slane %v551, 5
      %v554 = vsel %vm498, %v549, %v553
      %v556 = vshrl.u32 %v488, 16
      %v558 = vrot.slane %v556, 4
      %v559 = vshll.u32 %v488, 16
      %v561 = vrot.slane %v559, 5
      %v562 = vor.u32 %v558, %v561
      %v563 = vrot.slane %v562, 4
      %v565 = vshll.u32 %v489, 16
      %v567 = vrot.slane %v565, 5
      %v568 = vsel %vm498, %v563, %v567
      %v570 = vshrl.u32 %v490, 16
      %v572 = vrot.slane %v570, 4
      %v573 = vshll.u32 %v490, 16
      %v575 = vrot.slane %v573, 5
      %v576 = vor.u32 %v572, %v575
      %v577 = vrot.slane %v576, 4
      %v579 = vshll.u32 %v491, 16
      %v581 = vrot.slane %v579, 5
      %v582 = vsel %vm498, %v577, %v581
      %v584 = vshrl.u32 %v492, 16
      %v586 = vrot.slane %v584, 4
      %v587 = vshll.u32 %v492, 16
      %v589 = vrot.slane %v587, 5
      %v590 = vor.u32 %v586, %v589
      %v591 = vrot.slane %v590, 4
      %v593 = vshll.u32 %v493, 16
      %v595 = vrot.slane %v593, 5
      %v596 = vsel %vm498, %v591, %v595
      %v598 = vshrl.u32 %v494, 16
      %v600 = vrot.slane %v598, 4
      %v601 = vshll.u32 %v494, 16
      %v603 = vrot.slane %v601, 5
      %v604 = vor.u32 %v600, %v603
      %v605 = vrot.slane %v604, 4
      %v607 = vshll.u32 %v495, 16
      %v609 = vrot.slane %v607, 5
      %v610 = vsel %vm498, %v605, %v609
      %s611 = scalar_lea.vmem %s1, 4
      %v612 = vld [vmem:[%s611] sm:$0x3]
      %v613 = vunpack.c.l.b16 %v512
      %v614 = vunpack.c.l.b16 %v526
      %v615 = vunpack.c.l.b16 %v540
      %v616 = vunpack.c.l.b16 %v554
      %v617 = vunpack.c.l.b16 %v568
      %v618 = vunpack.c.l.b16 %v582
      %v619 = vunpack.c.l.b16 %v596
      %v620 = vunpack.c.l.b16 %v610
      %v621 = vpack.c.b16 %v614, %v613
      %v622 = vpack.c.b16 %v616, %v615
      %v623 = vpack.c.b16 %v618, %v617
      %v624 = vpack.c.b16 %v620, %v619
      %v626 = vsel %vm298, %v621, 0
      %v629 = vsel %vm298, %v622, 0
      %v632 = vsel %vm298, %v623, 0
      %v635 = vsel %vm298, %v624, 0
      %v638 = vsel %vm311, %v612, 0
      %640 = vmatprep.subr.bf16.mxu0 0
      %641 = vmatpush1.bf16.msra.mxu0 0
      %642 = vmatprep.subr.bf16.mxu0 0
      %643 = vmatpush1.bf16.msra.mxu0 0
      %644 = vmatprep.subr.bf16.mxu0 0
      %645 = vmatpush1.bf16.msra.mxu0 0
      %646 = vmatprep.subr.bf16.mxu0 0
      %647 = vmatpush1.bf16.msra.mxu0 0
      %648 = vmatprep.subr.bf16.mxu0 0
      %649 = vmatpush1.bf16.msra.mxu0 0
      %650 = vmatprep.subr.bf16.mxu0 0
      %651 = vmatpush1.bf16.msra.mxu0 0
      %652 = vmatprep.subr.bf16.mxu0 0
      %653 = vmatpush1.bf16.msra.mxu0 0
      %654 = vmatprep.subr.bf16.mxu0 0
      %655 = vmatpush1.bf16.msra.mxu0 %v638
      %656 = vmatprep.subr.bf16.mxu0 0
      %657 = vmatpush2.bf16.msra.mxu0 0
      %658 = vmatprep.subr.bf16.mxu0 0
      %659 = vmatpush2.bf16.msra.mxu0 0
      %660 = vmatprep.subr.bf16.mxu0 0
      %661 = vmatpush2.bf16.msra.mxu0 0
      %662 = vmatprep.subr.bf16.mxu0 0
      %663 = vmatpush2.bf16.msra.mxu0 0
      %664 = vmatprep.subr.bf16.mxu0 0
      %665 = vmatpush2.bf16.msra.mxu0 0
      %666 = vmatprep.subr.bf16.mxu0 0
      %667 = vmatpush2.bf16.msra.mxu0 0
      %668 = vmatprep.subr.bf16.mxu0 0
      %669 = vmatpush2.bf16.msra.mxu0 0
      %670 = vmatprep.subr.bf16.mxu0 0
      %671 = vmatpush2.bf16.msra.mxu0 0
      %672 = vmatprep.mubr.bf16.mxu0 0
      %673 = vmatmul.mubr.bf16.gmra.mxu0 %v626
      %v674 = vpop.f32.mrf.mxu0
      %v675 = vadd.f32 0.0, %v674
      %v676 = vpop.f32.mrf.mxu0
      %v677 = vpop.f32.mrf.mxu0
      %v678 = vadd.f32 0.0, %v677
      %v679 = vpop.f32.mrf.mxu0
      %680 = vmatprep.mubr.bf16.mxu0 0
      %681 = vmatmul.mubr.bf16.gmra.mxu0 %v629
      %v682 = vpop.f32.mrf.mxu0
      %v683 = vadd.f32 0.0, %v682
      %v684 = vpop.f32.mrf.mxu0
      %v685 = vpop.f32.mrf.mxu0
      %v686 = vadd.f32 0.0, %v685
      %v687 = vpop.f32.mrf.mxu0
      %688 = vmatprep.mubr.bf16.mxu0 0
      %689 = vmatmul.mubr.bf16.gmra.mxu0 %v632
      %v690 = vpop.f32.mrf.mxu0
      %v691 = vadd.f32 0.0, %v690
      %v692 = vpop.f32.mrf.mxu0
      %v693 = vpop.f32.mrf.mxu0
      %v694 = vadd.f32 0.0, %v693
      %v695 = vpop.f32.mrf.mxu0
      %696 = vmatprep.mubr.bf16.mxu0 0
      %697 = vmatmul.mubr.bf16.gmra.mxu0 %v635
      %v698 = vpop.f32.mrf.mxu0
      %v699 = vadd.f32 0.0, %v698
      %v700 = vpop.f32.mrf.mxu0
      %v701 = vpop.f32.mrf.mxu0
      %v702 = vadd.f32 0.0, %v701
      %v703 = vpop.f32.mrf.mxu0
      %704 = vdwg.mxu0
      %v705 = vadd.f32 %v450, %v675
      %v706 = vadd.f32 %v453, %v678
      %v707 = vadd.f32 %v458, %v683
      %v708 = vadd.f32 %v461, %v686
      %v709 = vadd.f32 %v466, %v691
      %v710 = vadd.f32 %v469, %v694
      %v711 = vadd.f32 %v474, %v699
      %v712 = vadd.f32 %v477, %v702
      %s713 = scalar_lea.vmem %s250, 144
      %v714 = vld [vmem:[%s713] sm:$0xf]
      %v715 = vld [vmem:[%s713 + $0x8] sm:$0xf]
      %v716 = vld [vmem:[%s713 + $0x10] sm:$0xf]
      %v717 = vld [vmem:[%s713 + $0x18] sm:$0xf]
      %v718 = vld [vmem:[%s713 + $0x20] sm:$0xf]
      %v719 = vld [vmem:[%s713 + $0x28] sm:$0xf]
      %v720 = vld [vmem:[%s713 + $0x30] sm:$0xf]
      %v721 = vld [vmem:[%s713 + $0x38] sm:$0xf]
      %s722 = scalar_lea.vmem %s1, 6
      %v723 = vld [vmem:[%s722] sm:$0x3]
      %v732 = vunpack.c.l.b16 %v714
      %v733 = vunpack.c.l.b16 %v715
      %v734 = vunpack.c.l.b16 %v716
      %v735 = vunpack.c.l.b16 %v717
      %v736 = vunpack.c.l.b16 %v718
      %v737 = vunpack.c.l.b16 %v719
      %v738 = vunpack.c.l.b16 %v720
      %v739 = vunpack.c.l.b16 %v721
      %v740 = vpack.c.b16 %v733, %v732
      %v741 = vpack.c.b16 %v735, %v734
      %v742 = vpack.c.b16 %v737, %v736
      %v743 = vpack.c.b16 %v739, %v738
      %v745 = vsel %vm298, %v740, 0
      %v748 = vsel %vm298, %v741, 0
      %v751 = vsel %vm298, %v742, 0
      %v754 = vsel %vm298, %v743, 0
      %v757 = vsel %vm311, %v723, 0
      %759 = vmatprep.subr.bf16.mxu0 0
      %760 = vmatpush1.bf16.msra.mxu0 0
      %761 = vmatprep.subr.bf16.mxu0 0
      %762 = vmatpush1.bf16.msra.mxu0 0
      %763 = vmatprep.subr.bf16.mxu0 0
      %764 = vmatpush1.bf16.msra.mxu0 0
      %765 = vmatprep.subr.bf16.mxu0 0
      %766 = vmatpush1.bf16.msra.mxu0 0
      %767 = vmatprep.subr.bf16.mxu0 0
      %768 = vmatpush1.bf16.msra.mxu0 0
      %769 = vmatprep.subr.bf16.mxu0 0
      %770 = vmatpush1.bf16.msra.mxu0 0
      %771 = vmatprep.subr.bf16.mxu0 0
      %772 = vmatpush1.bf16.msra.mxu0 0
      %773 = vmatprep.subr.bf16.mxu0 0
      %774 = vmatpush1.bf16.msra.mxu0 %v757
      %775 = vmatprep.subr.bf16.mxu0 0
      %776 = vmatpush2.bf16.msra.mxu0 0
      %777 = vmatprep.subr.bf16.mxu0 0
      %778 = vmatpush2.bf16.msra.mxu0 0
      %779 = vmatprep.subr.bf16.mxu0 0
      %780 = vmatpush2.bf16.msra.mxu0 0
      %781 = vmatprep.subr.bf16.mxu0 0
      %782 = vmatpush2.bf16.msra.mxu0 0
      %783 = vmatprep.subr.bf16.mxu0 0
      %784 = vmatpush2.bf16.msra.mxu0 0
      %785 = vmatprep.subr.bf16.mxu0 0
      %786 = vmatpush2.bf16.msra.mxu0 0
      %787 = vmatprep.subr.bf16.mxu0 0
      %788 = vmatpush2.bf16.msra.mxu0 0
      %789 = vmatprep.subr.bf16.mxu0 0
      %790 = vmatpush2.bf16.msra.mxu0 0
      %791 = vmatprep.mubr.bf16.mxu0 0
      %792 = vmatmul.mubr.bf16.gmra.mxu0 %v745
      %v793 = vpop.f32.mrf.mxu0
      %v794 = vadd.f32 0.0, %v793
      %v795 = vpop.f32.mrf.mxu0
      %v796 = vpop.f32.mrf.mxu0
      %v797 = vadd.f32 0.0, %v796
      %v798 = vpop.f32.mrf.mxu0
      %799 = vmatprep.mubr.bf16.mxu0 0
      %800 = vmatmul.mubr.bf16.gmra.mxu0 %v748
      %v801 = vpop.f32.mrf.mxu0
      %v802 = vadd.f32 0.0, %v801
      %v803 = vpop.f32.mrf.mxu0
      %v804 = vpop.f32.mrf.mxu0
      %v805 = vadd.f32 0.0, %v804
      %v806 = vpop.f32.mrf.mxu0
      %807 = vmatprep.mubr.bf16.mxu0 0
      %808 = vmatmul.mubr.bf16.gmra.mxu0 %v751
      %v809 = vpop.f32.mrf.mxu0
      %v810 = vadd.f32 0.0, %v809
      %v811 = vpop.f32.mrf.mxu0
      %v812 = vpop.f32.mrf.mxu0
      %v813 = vadd.f32 0.0, %v812
      %v814 = vpop.f32.mrf.mxu0
      %815 = vmatprep.mubr.bf16.mxu0 0
      %816 = vmatmul.mubr.bf16.gmra.mxu0 %v754
      %v817 = vpop.f32.mrf.mxu0
      %v818 = vadd.f32 0.0, %v817
      %v819 = vpop.f32.mrf.mxu0
      %v820 = vpop.f32.mrf.mxu0
      %v821 = vadd.f32 0.0, %v820
      %v822 = vpop.f32.mrf.mxu0
      %823 = vdwg.mxu0
      %v824 = vadd.f32 %v705, %v794
      %v825 = vadd.f32 %v706, %v797
      %v826 = vadd.f32 %v707, %v802
      %v827 = vadd.f32 %v708, %v805
      %v828 = vadd.f32 %v709, %v810
      %v829 = vadd.f32 %v710, %v813
      %v830 = vadd.f32 %v711, %v818
      %v831 = vadd.f32 %v712, %v821
      %s832 = scalar_lea.vmem %s250, 216
      %v833 = vld [vmem:[%s832] sm:$0xf]
      %v834 = vld [vmem:[%s832 + $0x8] sm:$0xf]
      %v835 = vld [vmem:[%s832 + $0x10] sm:$0xf]
      %v836 = vld [vmem:[%s832 + $0x18] sm:$0xf]
      %v837 = vld [vmem:[%s832 + $0x20] sm:$0xf]
      %v838 = vld [vmem:[%s832 + $0x28] sm:$0xf]
      %v839 = vld [vmem:[%s832 + $0x30] sm:$0xf]
      %v840 = vld [vmem:[%s832 + $0x38] sm:$0xf]
      %s841 = scalar_lea.vmem %s1, 8
      %v842 = vld [vmem:[%s841] sm:$0x3]
      %v851 = vunpack.c.l.b16 %v833
      %v852 = vunpack.c.l.b16 %v834
      %v853 = vunpack.c.l.b16 %v835
      %v854 = vunpack.c.l.b16 %v836
      %v855 = vunpack.c.l.b16 %v837
      %v856 = vunpack.c.l.b16 %v838
      %v857 = vunpack.c.l.b16 %v839
      %v858 = vunpack.c.l.b16 %v840
      %v859 = vpack.c.b16 %v852, %v851
      %v860 = vpack.c.b16 %v854, %v853
      %v861 = vpack.c.b16 %v856, %v855
      %v862 = vpack.c.b16 %v858, %v857
      %v864 = vsel %vm298, %v859, 0
      %v867 = vsel %vm298, %v860, 0
      %v870 = vsel %vm298, %v861, 0
      %v873 = vsel %vm298, %v862, 0
      %v876 = vsel %vm311, %v842, 0
      %878 = vmatprep.subr.bf16.mxu0 0
      %879 = vmatpush1.bf16.msra.mxu0 0
      %880 = vmatprep.subr.bf16.mxu0 0
      %881 = vmatpush1.bf16.msra.mxu0 0
      %882 = vmatprep.subr.bf16.mxu0 0
      %883 = vmatpush1.bf16.msra.mxu0 0
      %884 = vmatprep.subr.bf16.mxu0 0
      %885 = vmatpush1.bf16.msra.mxu0 0
      %886 = vmatprep.subr.bf16.mxu0 0
      %887 = vmatpush1.bf16.msra.mxu0 0
      %888 = vmatprep.subr.bf16.mxu0 0
      %889 = vmatpush1.bf16.msra.mxu0 0
      %890 = vmatprep.subr.bf16.mxu0 0
      %891 = vmatpush1.bf16.msra.mxu0 0
      %892 = vmatprep.subr.bf16.mxu0 0
      %893 = vmatpush1.bf16.msra.mxu0 %v876
      %894 = vmatprep.subr.bf16.mxu0 0
      %895 = vmatpush2.bf16.msra.mxu0 0
      %896 = vmatprep.subr.bf16.mxu0 0
      %897 = vmatpush2.bf16.msra.mxu0 0
      %898 = vmatprep.subr.bf16.mxu0 0
      %899 = vmatpush2.bf16.msra.mxu0 0
      %900 = vmatprep.subr.bf16.mxu0 0
      %901 = vmatpush2.bf16.msra.mxu0 0
      %902 = vmatprep.subr.bf16.mxu0 0
      %903 = vmatpush2.bf16.msra.mxu0 0
      %904 = vmatprep.subr.bf16.mxu0 0
      %905 = vmatpush2.bf16.msra.mxu0 0
      %906 = vmatprep.subr.bf16.mxu0 0
      %907 = vmatpush2.bf16.msra.mxu0 0
      %908 = vmatprep.subr.bf16.mxu0 0
      %909 = vmatpush2.bf16.msra.mxu0 0
      %910 = vmatprep.mubr.bf16.mxu0 0
      %911 = vmatmul.mubr.bf16.gmra.mxu0 %v864
      %v912 = vpop.f32.mrf.mxu0
      %v913 = vadd.f32 0.0, %v912
      %v914 = vpop.f32.mrf.mxu0
      %v915 = vpop.f32.mrf.mxu0
      %v916 = vadd.f32 0.0, %v915
      %v917 = vpop.f32.mrf.mxu0
      %918 = vmatprep.mubr.bf16.mxu0 0
      %919 = vmatmul.mubr.bf16.gmra.mxu0 %v867
      %v920 = vpop.f32.mrf.mxu0
      %v921 = vadd.f32 0.0, %v920
      %v922 = vpop.f32.mrf.mxu0
      %v923 = vpop.f32.mrf.mxu0
      %v924 = vadd.f32 0.0, %v923
      %v925 = vpop.f32.mrf.mxu0
      %926 = vmatprep.mubr.bf16.mxu0 0
      %927 = vmatmul.mubr.bf16.gmra.mxu0 %v870
      %v928 = vpop.f32.mrf.mxu0
      %v929 = vadd.f32 0.0, %v928
      %v930 = vpop.f32.mrf.mxu0
      %v931 = vpop.f32.mrf.mxu0
      %v932 = vadd.f32 0.0, %v931
      %v933 = vpop.f32.mrf.mxu0
      %934 = vmatprep.mubr.bf16.mxu0 0
      %935 = vmatmul.mubr.bf16.gmra.mxu0 %v873
      %v936 = vpop.f32.mrf.mxu0
      %v937 = vadd.f32 0.0, %v936
      %v938 = vpop.f32.mrf.mxu0
      %v939 = vpop.f32.mrf.mxu0
      %v940 = vadd.f32 0.0, %v939
      %v941 = vpop.f32.mrf.mxu0
      %942 = vdwg.mxu0
      %v943 = vadd.f32 %v824, %v913
      %v944 = vadd.f32 %v825, %v916
      %v945 = vadd.f32 %v826, %v921
      %v946 = vadd.f32 %v827, %v924
      %v947 = vadd.f32 %v828, %v929
      %v948 = vadd.f32 %v829, %v932
      %v949 = vadd.f32 %v830, %v937
      %v950 = vadd.f32 %v831, %v940
      %v951 = vld [vmem:[%s713] sm:$0xf]
      %v952 = vld [vmem:[%s713 + $0x4] sm:$0x1]
      %v953 = vld [vmem:[%s713 + $0x8] sm:$0xf]
      %v954 = vld [vmem:[%s713 + $0xc] sm:$0x1]
      %v955 = vld [vmem:[%s713 + $0x10] sm:$0xf]
      %v956 = vld [vmem:[%s713 + $0x14] sm:$0x1]
      %v957 = vld [vmem:[%s713 + $0x18] sm:$0xf]
      %v958 = vld [vmem:[%s713 + $0x1c] sm:$0x1]
      %v959 = vld [vmem:[%s713 + $0x20] sm:$0xf]
      %v960 = vld [vmem:[%s713 + $0x24] sm:$0x1]
      %v961 = vld [vmem:[%s713 + $0x28] sm:$0xf]
      %v962 = vld [vmem:[%s713 + $0x2c] sm:$0x1]
      %v963 = vld [vmem:[%s713 + $0x30] sm:$0xf]
      %v964 = vld [vmem:[%s713 + $0x34] sm:$0x1]
      %v965 = vld [vmem:[%s713 + $0x38] sm:$0xf]
      %v966 = vld [vmem:[%s713 + $0x3c] sm:$0x1]
      %v968 = vshrl.u32 %v951, 16
      %v970 = vrot.slane %v968, 4
      %v971 = vshll.u32 %v951, 16
      %v973 = vrot.slane %v971, 5
      %v974 = vor.u32 %v970, %v973
      %v975 = vrot.slane %v974, 4
      %v977 = vshll.u32 %v952, 16
      %v979 = vrot.slane %v977, 5
      %v980 = vsel %vm498, %v975, %v979
      %v982 = vshrl.u32 %v953, 16
      %v984 = vrot.slane %v982, 4
      %v985 = vshll.u32 %v953, 16
      %v987 = vrot.slane %v985, 5
      %v988 = vor.u32 %v984, %v987
      %v989 = vrot.slane %v988, 4
      %v991 = vshll.u32 %v954, 16
      %v993 = vrot.slane %v991, 5
      %v994 = vsel %vm498, %v989, %v993
      %v996 = vshrl.u32 %v955, 16
      %v998 = vrot.slane %v996, 4
      %v999 = vshll.u32 %v955, 16
      %v1001 = vrot.slane %v999, 5
      %v1002 = vor.u32 %v998, %v1001
      %v1003 = vrot.slane %v1002, 4
      %v1005 = vshll.u32 %v956, 16
      %v1007 = vrot.slane %v1005, 5
      %v1008 = vsel %vm498, %v1003, %v1007
      %v1010 = vshrl.u32 %v957, 16
      %v1012 = vrot.slane %v1010, 4
      %v1013 = vshll.u32 %v957, 16
      %v1015 = vrot.slane %v1013, 5
      %v1016 = vor.u32 %v1012, %v1015
      %v1017 = vrot.slane %v1016, 4
      %v1019 = vshll.u32 %v958, 16
      %v1021 = vrot.slane %v1019, 5
      %v1022 = vsel %vm498, %v1017, %v1021
      %v1024 = vshrl.u32 %v959, 16
      %v1026 = vrot.slane %v1024, 4
      %v1027 = vshll.u32 %v959, 16
      %v1029 = vrot.slane %v1027, 5
      %v1030 = vor.u32 %v1026, %v1029
      %v1031 = vrot.slane %v1030, 4
      %v1033 = vshll.u32 %v960, 16
      %v1035 = vrot.slane %v1033, 5
      %v1036 = vsel %vm498, %v1031, %v1035
      %v1038 = vshrl.u32 %v961, 16
      %v1040 = vrot.slane %v1038, 4
      %v1041 = vshll.u32 %v961, 16
      %v1043 = vrot.slane %v1041, 5
      %v1044 = vor.u32 %v1040, %v1043
      %v1045 = vrot.slane %v1044, 4
      %v1047 = vshll.u32 %v962, 16
      %v1049 = vrot.slane %v1047, 5
      %v1050 = vsel %vm498, %v1045, %v1049
      %v1052 = vshrl.u32 %v963, 16
      %v1054 = vrot.slane %v1052, 4
      %v1055 = vshll.u32 %v963, 16
      %v1057 = vrot.slane %v1055, 5
      %v1058 = vor.u32 %v1054, %v1057
      %v1059 = vrot.slane %v1058, 4
      %v1061 = vshll.u32 %v964, 16
      %v1063 = vrot.slane %v1061, 5
      %v1064 = vsel %vm498, %v1059, %v1063
      %v1066 = vshrl.u32 %v965, 16
      %v1068 = vrot.slane %v1066, 4
      %v1069 = vshll.u32 %v965, 16
      %v1071 = vrot.slane %v1069, 5
      %v1072 = vor.u32 %v1068, %v1071
      %v1073 = vrot.slane %v1072, 4
      %v1075 = vshll.u32 %v966, 16
      %v1077 = vrot.slane %v1075, 5
      %v1078 = vsel %vm498, %v1073, %v1077
      %s1079 = scalar_lea.vmem %s1, 10
      %v1080 = vld [vmem:[%s1079] sm:$0x3]
      %v1081 = vunpack.c.l.b16 %v980
      %v1082 = vunpack.c.l.b16 %v994
      %v1083 = vunpack.c.l.b16 %v1008
      %v1084 = vunpack.c.l.b16 %v1022
      %v1085 = vunpack.c.l.b16 %v1036
      %v1086 = vunpack.c.l.b16 %v1050
      %v1087 = vunpack.c.l.b16 %v1064
      %v1088 = vunpack.c.l.b16 %v1078
      %v1089 = vpack.c.b16 %v1082, %v1081
      %v1090 = vpack.c.b16 %v1084, %v1083
      %v1091 = vpack.c.b16 %v1086, %v1085
      %v1092 = vpack.c.b16 %v1088, %v1087
      %v1094 = vsel %vm298, %v1089, 0
      %v1097 = vsel %vm298, %v1090, 0
      %v1100 = vsel %vm298, %v1091, 0
      %v1103 = vsel %vm298, %v1092, 0
      %v1106 = vsel %vm311, %v1080, 0
      %1108 = vmatprep.subr.bf16.mxu0 0
      %1109 = vmatpush1.bf16.msra.mxu0 0
      %1110 = vmatprep.subr.bf16.mxu0 0
      %1111 = vmatpush1.bf16.msra.mxu0 0
      %1112 = vmatprep.subr.bf16.mxu0 0
      %1113 = vmatpush1.bf16.msra.mxu0 0
      %1114 = vmatprep.subr.bf16.mxu0 0
      %1115 = vmatpush1.bf16.msra.mxu0 0
      %1116 = vmatprep.subr.bf16.mxu0 0
      %1117 = vmatpush1.bf16.msra.mxu0 0
      %1118 = vmatprep.subr.bf16.mxu0 0
      %1119 = vmatpush1.bf16.msra.mxu0 0
      %1120 = vmatprep.subr.bf16.mxu0 0
      %1121 = vmatpush1.bf16.msra.mxu0 0
      %1122 = vmatprep.subr.bf16.mxu0 0
      %1123 = vmatpush1.bf16.msra.mxu0 %v1106
      %1124 = vmatprep.subr.bf16.mxu0 0
      %1125 = vmatpush2.bf16.msra.mxu0 0
      %1126 = vmatprep.subr.bf16.mxu0 0
      %1127 = vmatpush2.bf16.msra.mxu0 0
      %1128 = vmatprep.subr.bf16.mxu0 0
      %1129 = vmatpush2.bf16.msra.mxu0 0
      %1130 = vmatprep.subr.bf16.mxu0 0
      %1131 = vmatpush2.bf16.msra.mxu0 0
      %1132 = vmatprep.subr.bf16.mxu0 0
      %1133 = vmatpush2.bf16.msra.mxu0 0
      %1134 = vmatprep.subr.bf16.mxu0 0
      %1135 = vmatpush2.bf16.msra.mxu0 0
      %1136 = vmatprep.subr.bf16.mxu0 0
      %1137 = vmatpush2.bf16.msra.mxu0 0
      %1138 = vmatprep.subr.bf16.mxu0 0
      %1139 = vmatpush2.bf16.msra.mxu0 0
      %1140 = vmatprep.mubr.bf16.mxu0 0
      %1141 = vmatmul.mubr.bf16.gmra.mxu0 %v1094
      %v1142 = vpop.f32.mrf.mxu0
      %v1143 = vadd.f32 0.0, %v1142
      %v1144 = vpop.f32.mrf.mxu0
      %v1145 = vpop.f32.mrf.mxu0
      %v1146 = vadd.f32 0.0, %v1145
      %v1147 = vpop.f32.mrf.mxu0
      %1148 = vmatprep.mubr.bf16.mxu0 0
      %1149 = vmatmul.mubr.bf16.gmra.mxu0 %v1097
      %v1150 = vpop.f32.mrf.mxu0
      %v1151 = vadd.f32 0.0, %v1150
      %v1152 = vpop.f32.mrf.mxu0
      %v1153 = vpop.f32.mrf.mxu0
      %v1154 = vadd.f32 0.0, %v1153
      %v1155 = vpop.f32.mrf.mxu0
      %1156 = vmatprep.mubr.bf16.mxu0 0
      %1157 = vmatmul.mubr.bf16.gmra.mxu0 %v1100
      %v1158 = vpop.f32.mrf.mxu0
      %v1159 = vadd.f32 0.0, %v1158
      %v1160 = vpop.f32.mrf.mxu0
      %v1161 = vpop.f32.mrf.mxu0
      %v1162 = vadd.f32 0.0, %v1161
      %v1163 = vpop.f32.mrf.mxu0
      %1164 = vmatprep.mubr.bf16.mxu0 0
      %1165 = vmatmul.mubr.bf16.gmra.mxu0 %v1103
      %v1166 = vpop.f32.mrf.mxu0
      %v1167 = vadd.f32 0.0, %v1166
      %v1168 = vpop.f32.mrf.mxu0
      %v1169 = vpop.f32.mrf.mxu0
      %v1170 = vadd.f32 0.0, %v1169
      %v1171 = vpop.f32.mrf.mxu0
      %1172 = vdwg.mxu0
      %v1173 = vadd.f32 %v943, %v1143
      %v1174 = vadd.f32 %v944, %v1146
      %v1175 = vadd.f32 %v945, %v1151
      %v1176 = vadd.f32 %v946, %v1154
      %v1177 = vadd.f32 %v947, %v1159
      %v1178 = vadd.f32 %v948, %v1162
      %v1179 = vadd.f32 %v949, %v1167
      %v1180 = vadd.f32 %v950, %v1170
      %s1181 = scalar_lea.vmem %s250, 8
      %v1182 = vld [vmem:[%s1181] sm:$0xf]
      %v1183 = vld [vmem:[%s1181 + $0x8] sm:$0xf]
      %v1184 = vld [vmem:[%s1181 + $0x10] sm:$0xf]
      %v1185 = vld [vmem:[%s1181 + $0x18] sm:$0xf]
      %v1186 = vld [vmem:[%s1181 + $0x20] sm:$0xf]
      %v1187 = vld [vmem:[%s1181 + $0x28] sm:$0xf]
      %v1188 = vld [vmem:[%s1181 + $0x30] sm:$0xf]
      %v1189 = vld [vmem:[%s1181 + $0x38] sm:$0xf]
      %s1190 = scalar_lea.vmem %s1, 12
      %v1191 = vld [vmem:[%s1190] sm:$0x3]
      %v1200 = vunpack.c.l.b16 %v1182
      %v1201 = vunpack.c.l.b16 %v1183
      %v1202 = vunpack.c.l.b16 %v1184
      %v1203 = vunpack.c.l.b16 %v1185
      %v1204 = vunpack.c.l.b16 %v1186
      %v1205 = vunpack.c.l.b16 %v1187
      %v1206 = vunpack.c.l.b16 %v1188
      %v1207 = vunpack.c.l.b16 %v1189
      %v1208 = vpack.c.b16 %v1201, %v1200
      %v1209 = vpack.c.b16 %v1203, %v1202
      %v1210 = vpack.c.b16 %v1205, %v1204
      %v1211 = vpack.c.b16 %v1207, %v1206
      %v1213 = vsel %vm298, %v1208, 0
      %v1216 = vsel %vm298, %v1209, 0
      %v1219 = vsel %vm298, %v1210, 0
      %v1222 = vsel %vm298, %v1211, 0
      %v1225 = vsel %vm311, %v1191, 0
      %1227 = vmatprep.subr.bf16.mxu0 0
      %1228 = vmatpush1.bf16.msra.mxu0 0
      %1229 = vmatprep.subr.bf16.mxu0 0
      %1230 = vmatpush1.bf16.msra.mxu0 0
      %1231 = vmatprep.subr.bf16.mxu0 0
      %1232 = vmatpush1.bf16.msra.mxu0 0
      %1233 = vmatprep.subr.bf16.mxu0 0
      %1234 = vmatpush1.bf16.msra.mxu0 0
      %1235 = vmatprep.subr.bf16.mxu0 0
      %1236 = vmatpush1.bf16.msra.mxu0 0
      %1237 = vmatprep.subr.bf16.mxu0 0
      %1238 = vmatpush1.bf16.msra.mxu0 0
      %1239 = vmatprep.subr.bf16.mxu0 0
      %1240 = vmatpush1.bf16.msra.mxu0 0
      %1241 = vmatprep.subr.bf16.mxu0 0
      %1242 = vmatpush1.bf16.msra.mxu0 %v1225
      %1243 = vmatprep.subr.bf16.mxu0 0
      %1244 = vmatpush2.bf16.msra.mxu0 0
      %1245 = vmatprep.subr.bf16.mxu0 0
      %1246 = vmatpush2.bf16.msra.mxu0 0
      %1247 = vmatprep.subr.bf16.mxu0 0
      %1248 = vmatpush2.bf16.msra.mxu0 0
      %1249 = vmatprep.subr.bf16.mxu0 0
      %1250 = vmatpush2.bf16.msra.mxu0 0
      %1251 = vmatprep.subr.bf16.mxu0 0
      %1252 = vmatpush2.bf16.msra.mxu0 0
      %1253 = vmatprep.subr.bf16.mxu0 0
      %1254 = vmatpush2.bf16.msra.mxu0 0
      %1255 = vmatprep.subr.bf16.mxu0 0
      %1256 = vmatpush2.bf16.msra.mxu0 0
      %1257 = vmatprep.subr.bf16.mxu0 0
      %1258 = vmatpush2.bf16.msra.mxu0 0
      %1259 = vmatprep.mubr.bf16.mxu0 0
      %1260 = vmatmul.mubr.bf16.gmra.mxu0 %v1213
      %v1261 = vpop.f32.mrf.mxu0
      %v1262 = vadd.f32 0.0, %v1261
      %v1263 = vpop.f32.mrf.mxu0
      %v1264 = vpop.f32.mrf.mxu0
      %v1265 = vadd.f32 0.0, %v1264
      %v1266 = vpop.f32.mrf.mxu0
      %1267 = vmatprep.mubr.bf16.mxu0 0
      %1268 = vmatmul.mubr.bf16.gmra.mxu0 %v1216
      %v1269 = vpop.f32.mrf.mxu0
      %v1270 = vadd.f32 0.0, %v1269
      %v1271 = vpop.f32.mrf.mxu0
      %v1272 = vpop.f32.mrf.mxu0
      %v1273 = vadd.f32 0.0, %v1272
      %v1274 = vpop.f32.mrf.mxu0
      %1275 = vmatprep.mubr.bf16.mxu0 0
      %1276 = vmatmul.mubr.bf16.gmra.mxu0 %v1219
      %v1277 = vpop.f32.mrf.mxu0
      %v1278 = vadd.f32 0.0, %v1277
      %v1279 = vpop.f32.mrf.mxu0
      %v1280 = vpop.f32.mrf.mxu0
      %v1281 = vadd.f32 0.0, %v1280
      %v1282 = vpop.f32.mrf.mxu0
      %1283 = vmatprep.mubr.bf16.mxu0 0
      %1284 = vmatmul.mubr.bf16.gmra.mxu0 %v1222
      %v1285 = vpop.f32.mrf.mxu0
      %v1286 = vadd.f32 0.0, %v1285
      %v1287 = vpop.f32.mrf.mxu0
      %v1288 = vpop.f32.mrf.mxu0
      %v1289 = vadd.f32 0.0, %v1288
      %v1290 = vpop.f32.mrf.mxu0
      %1291 = vdwg.mxu0
      %v1292 = vadd.f32 %v1173, %v1262
      %v1293 = vadd.f32 %v1174, %v1265
      %v1294 = vadd.f32 %v1175, %v1270
      %v1295 = vadd.f32 %v1176, %v1273
      %v1296 = vadd.f32 %v1177, %v1278
      %v1297 = vadd.f32 %v1178, %v1281
      %v1298 = vadd.f32 %v1179, %v1286
      %v1299 = vadd.f32 %v1180, %v1289
      %s1300 = scalar_lea.vmem %s250, 80
      %v1301 = vld [vmem:[%s1300] sm:$0xf]
      %v1302 = vld [vmem:[%s1300 + $0x8] sm:$0xf]
      %v1303 = vld [vmem:[%s1300 + $0x10] sm:$0xf]
      %v1304 = vld [vmem:[%s1300 + $0x18] sm:$0xf]
      %v1305 = vld [vmem:[%s1300 + $0x20] sm:$0xf]
      %v1306 = vld [vmem:[%s1300 + $0x28] sm:$0xf]
      %v1307 = vld [vmem:[%s1300 + $0x30] sm:$0xf]
      %v1308 = vld [vmem:[%s1300 + $0x38] sm:$0xf]
      %s1309 = scalar_lea.vmem %s1, 14
      %v1310 = vld [vmem:[%s1309] sm:$0x3]
      %v1319 = vunpack.c.l.b16 %v1301
      %v1320 = vunpack.c.l.b16 %v1302
      %v1321 = vunpack.c.l.b16 %v1303
      %v1322 = vunpack.c.l.b16 %v1304
      %v1323 = vunpack.c.l.b16 %v1305
      %v1324 = vunpack.c.l.b16 %v1306
      %v1325 = vunpack.c.l.b16 %v1307
      %v1326 = vunpack.c.l.b16 %v1308
      %v1327 = vpack.c.b16 %v1320, %v1319
      %v1328 = vpack.c.b16 %v1322, %v1321
      %v1329 = vpack.c.b16 %v1324, %v1323
      %v1330 = vpack.c.b16 %v1326, %v1325
      %v1332 = vsel %vm298, %v1327, 0
      %v1335 = vsel %vm298, %v1328, 0
      %v1338 = vsel %vm298, %v1329, 0
      %v1341 = vsel %vm298, %v1330, 0
      %v1344 = vsel %vm311, %v1310, 0
      %1346 = vmatprep.subr.bf16.mxu0 0
      %1347 = vmatpush1.bf16.msra.mxu0 0
      %1348 = vmatprep.subr.bf16.mxu0 0
      %1349 = vmatpush1.bf16.msra.mxu0 0
      %1350 = vmatprep.subr.bf16.mxu0 0
      %1351 = vmatpush1.bf16.msra.mxu0 0
      %1352 = vmatprep.subr.bf16.mxu0 0
      %1353 = vmatpush1.bf16.msra.mxu0 0
      %1354 = vmatprep.subr.bf16.mxu0 0
      %1355 = vmatpush1.bf16.msra.mxu0 0
      %1356 = vmatprep.subr.bf16.mxu0 0
      %1357 = vmatpush1.bf16.msra.mxu0 0
      %1358 = vmatprep.subr.bf16.mxu0 0
      %1359 = vmatpush1.bf16.msra.mxu0 0
      %1360 = vmatprep.subr.bf16.mxu0 0
      %1361 = vmatpush1.bf16.msra.mxu0 %v1344
      %1362 = vmatprep.subr.bf16.mxu0 0
      %1363 = vmatpush2.bf16.msra.mxu0 0
      %1364 = vmatprep.subr.bf16.mxu0 0
      %1365 = vmatpush2.bf16.msra.mxu0 0
      %1366 = vmatprep.subr.bf16.mxu0 0
      %1367 = vmatpush2.bf16.msra.mxu0 0
      %1368 = vmatprep.subr.bf16.mxu0 0
      %1369 = vmatpush2.bf16.msra.mxu0 0
      %1370 = vmatprep.subr.bf16.mxu0 0
      %1371 = vmatpush2.bf16.msra.mxu0 0
      %1372 = vmatprep.subr.bf16.mxu0 0
      %1373 = vmatpush2.bf16.msra.mxu0 0
      %1374 = vmatprep.subr.bf16.mxu0 0
      %1375 = vmatpush2.bf16.msra.mxu0 0
      %1376 = vmatprep.subr.bf16.mxu0 0
      %1377 = vmatpush2.bf16.msra.mxu0 0
      %1378 = vmatprep.mubr.bf16.mxu0 0
      %1379 = vmatmul.mubr.bf16.gmra.mxu0 %v1332
      %v1380 = vpop.f32.mrf.mxu0
      %v1381 = vadd.f32 0.0, %v1380
      %v1382 = vpop.f32.mrf.mxu0
      %v1383 = vpop.f32.mrf.mxu0
      %v1384 = vadd.f32 0.0, %v1383
      %v1385 = vpop.f32.mrf.mxu0
      %1386 = vmatprep.mubr.bf16.mxu0 0
      %1387 = vmatmul.mubr.bf16.gmra.mxu0 %v1335
      %v1388 = vpop.f32.mrf.mxu0
      %v1389 = vadd.f32 0.0, %v1388
      %v1390 = vpop.f32.mrf.mxu0
      %v1391 = vpop.f32.mrf.mxu0
      %v1392 = vadd.f32 0.0, %v1391
      %v1393 = vpop.f32.mrf.mxu0
      %1394 = vmatprep.mubr.bf16.mxu0 0
      %1395 = vmatmul.mubr.bf16.gmra.mxu0 %v1338
      %v1396 = vpop.f32.mrf.mxu0
      %v1397 = vadd.f32 0.0, %v1396
      %v1398 = vpop.f32.mrf.mxu0
      %v1399 = vpop.f32.mrf.mxu0
      %v1400 = vadd.f32 0.0, %v1399
      %v1401 = vpop.f32.mrf.mxu0
      %1402 = vmatprep.mubr.bf16.mxu0 0
      %1403 = vmatmul.mubr.bf16.gmra.mxu0 %v1341
      %v1404 = vpop.f32.mrf.mxu0
      %v1405 = vadd.f32 0.0, %v1404
      %v1406 = vpop.f32.mrf.mxu0
      %v1407 = vpop.f32.mrf.mxu0
      %v1408 = vadd.f32 0.0, %v1407
      %v1409 = vpop.f32.mrf.mxu0
      %1410 = vdwg.mxu0
      %v1411 = vadd.f32 %v1292, %v1381
      %v1412 = vadd.f32 %v1293, %v1384
      %v1413 = vadd.f32 %v1294, %v1389
      %v1414 = vadd.f32 %v1295, %v1392
      %v1415 = vadd.f32 %v1296, %v1397
      %v1416 = vadd.f32 %v1297, %v1400
      %v1417 = vadd.f32 %v1298, %v1405
      %v1418 = vadd.f32 %v1299, %v1408
      %v1419 = vld [vmem:[%s1181] sm:$0xf]
      %v1420 = vld [vmem:[%s1181 + $0x4] sm:$0x1]
      %v1421 = vld [vmem:[%s1181 + $0x8] sm:$0xf]
      %v1422 = vld [vmem:[%s1181 + $0xc] sm:$0x1]
      %v1423 = vld [vmem:[%s1181 + $0x10] sm:$0xf]
      %v1424 = vld [vmem:[%s1181 + $0x14] sm:$0x1]
      %v1425 = vld [vmem:[%s1181 + $0x18] sm:$0xf]
      %v1426 = vld [vmem:[%s1181 + $0x1c] sm:$0x1]
      %v1427 = vld [vmem:[%s1181 + $0x20] sm:$0xf]
      %v1428 = vld [vmem:[%s1181 + $0x24] sm:$0x1]
      %v1429 = vld [vmem:[%s1181 + $0x28] sm:$0xf]
      %v1430 = vld [vmem:[%s1181 + $0x2c] sm:$0x1]
      %v1431 = vld [vmem:[%s1181 + $0x30] sm:$0xf]
      %v1432 = vld [vmem:[%s1181 + $0x34] sm:$0x1]
      %v1433 = vld [vmem:[%s1181 + $0x38] sm:$0xf]
      %v1434 = vld [vmem:[%s1181 + $0x3c] sm:$0x1]
      %v1436 = vshrl.u32 %v1419, 16
      %v1438 = vrot.slane %v1436, 4
      %v1439 = vshll.u32 %v1419, 16
      %v1441 = vrot.slane %v1439, 5
      %v1442 = vor.u32 %v1438, %v1441
      %v1443 = vrot.slane %v1442, 4
      %v1445 = vshll.u32 %v1420, 16
      %v1447 = vrot.slane %v1445, 5
      %v1448 = vsel %vm498, %v1443, %v1447
      %v1450 = vshrl.u32 %v1421, 16
      %v1452 = vrot.slane %v1450, 4
      %v1453 = vshll.u32 %v1421, 16
      %v1455 = vrot.slane %v1453, 5
      %v1456 = vor.u32 %v1452, %v1455
      %v1457 = vrot.slane %v1456, 4
      %v1459 = vshll.u32 %v1422, 16
      %v1461 = vrot.slane %v1459, 5
      %v1462 = vsel %vm498, %v1457, %v1461
      %v1464 = vshrl.u32 %v1423, 16
      %v1466 = vrot.slane %v1464, 4
      %v1467 = vshll.u32 %v1423, 16
      %v1469 = vrot.slane %v1467, 5
      %v1470 = vor.u32 %v1466, %v1469
      %v1471 = vrot.slane %v1470, 4
      %v1473 = vshll.u32 %v1424, 16
      %v1475 = vrot.slane %v1473, 5
      %v1476 = vsel %vm498, %v1471, %v1475
      %v1478 = vshrl.u32 %v1425, 16
      %v1480 = vrot.slane %v1478, 4
      %v1481 = vshll.u32 %v1425, 16
      %v1483 = vrot.slane %v1481, 5
      %v1484 = vor.u32 %v1480, %v1483
      %v1485 = vrot.slane %v1484, 4
      %v1487 = vshll.u32 %v1426, 16
      %v1489 = vrot.slane %v1487, 5
      %v1490 = vsel %vm498, %v1485, %v1489
      %v1492 = vshrl.u32 %v1427, 16
      %v1494 = vrot.slane %v1492, 4
      %v1495 = vshll.u32 %v1427, 16
      %v1497 = vrot.slane %v1495, 5
      %v1498 = vor.u32 %v1494, %v1497
      %v1499 = vrot.slane %v1498, 4
      %v1501 = vshll.u32 %v1428, 16
      %v1503 = vrot.slane %v1501, 5
      %v1504 = vsel %vm498, %v1499, %v1503
      %v1506 = vshrl.u32 %v1429, 16
      %v1508 = vrot.slane %v1506, 4
      %v1509 = vshll.u32 %v1429, 16
      %v1511 = vrot.slane %v1509, 5
      %v1512 = vor.u32 %v1508, %v1511
      %v1513 = vrot.slane %v1512, 4
      %v1515 = vshll.u32 %v1430, 16
      %v1517 = vrot.slane %v1515, 5
      %v1518 = vsel %vm498, %v1513, %v1517
      %v1520 = vshrl.u32 %v1431, 16
      %v1522 = vrot.slane %v1520, 4
      %v1523 = vshll.u32 %v1431, 16
      %v1525 = vrot.slane %v1523, 5
      %v1526 = vor.u32 %v1522, %v1525
      %v1527 = vrot.slane %v1526, 4
      %v1529 = vshll.u32 %v1432, 16
      %v1531 = vrot.slane %v1529, 5
      %v1532 = vsel %vm498, %v1527, %v1531
      %v1534 = vshrl.u32 %v1433, 16
      %v1536 = vrot.slane %v1534, 4
      %v1537 = vshll.u32 %v1433, 16
      %v1539 = vrot.slane %v1537, 5
      %v1540 = vor.u32 %v1536, %v1539
      %v1541 = vrot.slane %v1540, 4
      %v1543 = vshll.u32 %v1434, 16
      %v1545 = vrot.slane %v1543, 5
      %v1546 = vsel %vm498, %v1541, %v1545
      %s1547 = scalar_lea.vmem %s1, 16
      %v1548 = vld [vmem:[%s1547] sm:$0x3]
      %v1549 = vunpack.c.l.b16 %v1448
      %v1550 = vunpack.c.l.b16 %v1462
      %v1551 = vunpack.c.l.b16 %v1476
      %v1552 = vunpack.c.l.b16 %v1490
      %v1553 = vunpack.c.l.b16 %v1504
      %v1554 = vunpack.c.l.b16 %v1518
      %v1555 = vunpack.c.l.b16 %v1532
      %v1556 = vunpack.c.l.b16 %v1546
      %v1557 = vpack.c.b16 %v1550, %v1549
      %v1558 = vpack.c.b16 %v1552, %v1551
      %v1559 = vpack.c.b16 %v1554, %v1553
      %v1560 = vpack.c.b16 %v1556, %v1555
      %v1562 = vsel %vm298, %v1557, 0
      %v1565 = vsel %vm298, %v1558, 0
      %v1568 = vsel %vm298, %v1559, 0
      %v1571 = vsel %vm298, %v1560, 0
      %v1574 = vsel %vm311, %v1548, 0
      %1576 = vmatprep.subr.bf16.mxu0 0
      %1577 = vmatpush1.bf16.msra.mxu0 0
      %1578 = vmatprep.subr.bf16.mxu0 0
      %1579 = vmatpush1.bf16.msra.mxu0 0
      %1580 = vmatprep.subr.bf16.mxu0 0
      %1581 = vmatpush1.bf16.msra.mxu0 0
      %1582 = vmatprep.subr.bf16.mxu0 0
      %1583 = vmatpush1.bf16.msra.mxu0 0
      %1584 = vmatprep.subr.bf16.mxu0 0
      %1585 = vmatpush1.bf16.msra.mxu0 0
      %1586 = vmatprep.subr.bf16.mxu0 0
      %1587 = vmatpush1.bf16.msra.mxu0 0
      %1588 = vmatprep.subr.bf16.mxu0 0
      %1589 = vmatpush1.bf16.msra.mxu0 0
      %1590 = vmatprep.subr.bf16.mxu0 0
      %1591 = vmatpush1.bf16.msra.mxu0 %v1574
      %1592 = vmatprep.subr.bf16.mxu0 0
      %1593 = vmatpush2.bf16.msra.mxu0 0
      %1594 = vmatprep.subr.bf16.mxu0 0
      %1595 = vmatpush2.bf16.msra.mxu0 0
      %1596 = vmatprep.subr.bf16.mxu0 0
      %1597 = vmatpush2.bf16.msra.mxu0 0
      %1598 = vmatprep.subr.bf16.mxu0 0
      %1599 = vmatpush2.bf16.msra.mxu0 0
      %1600 = vmatprep.subr.bf16.mxu0 0
      %1601 = vmatpush2.bf16.msra.mxu0 0
      %1602 = vmatprep.subr.bf16.mxu0 0
      %1603 = vmatpush2.bf16.msra.mxu0 0
      %1604 = vmatprep.subr.bf16.mxu0 0
      %1605 = vmatpush2.bf16.msra.mxu0 0
      %1606 = vmatprep.subr.bf16.mxu0 0
      %1607 = vmatpush2.bf16.msra.mxu0 0
      %1608 = vmatprep.mubr.bf16.mxu0 0
      %1609 = vmatmul.mubr.bf16.gmra.mxu0 %v1562
      %v1610 = vpop.f32.mrf.mxu0
      %v1611 = vadd.f32 0.0, %v1610
      %v1612 = vpop.f32.mrf.mxu0
      %v1613 = vpop.f32.mrf.mxu0
      %v1614 = vadd.f32 0.0, %v1613
      %v1615 = vpop.f32.mrf.mxu0
      %1616 = vmatprep.mubr.bf16.mxu0 0
      %1617 = vmatmul.mubr.bf16.gmra.mxu0 %v1565
      %v1618 = vpop.f32.mrf.mxu0
      %v1619 = vadd.f32 0.0, %v1618
      %v1620 = vpop.f32.mrf.mxu0
      %v1621 = vpop.f32.mrf.mxu0
      %v1622 = vadd.f32 0.0, %v1621
      %v1623 = vpop.f32.mrf.mxu0
      %1624 = vmatprep.mubr.bf16.mxu0 0
      %1625 = vmatmul.mubr.bf16.gmra.mxu0 %v1568
      %v1626 = vpop.f32.mrf.mxu0
      %v1627 = vadd.f32 0.0, %v1626
      %v1628 = vpop.f32.mrf.mxu0
      %v1629 = vpop.f32.mrf.mxu0
      %v1630 = vadd.f32 0.0, %v1629
      %v1631 = vpop.f32.mrf.mxu0
      %1632 = vmatprep.mubr.bf16.mxu0 0
      %1633 = vmatmul.mubr.bf16.gmra.mxu0 %v1571
      %v1634 = vpop.f32.mrf.mxu0
      %v1635 = vadd.f32 0.0, %v1634
      %v1636 = vpop.f32.mrf.mxu0
      %v1637 = vpop.f32.mrf.mxu0
      %v1638 = vadd.f32 0.0, %v1637
      %v1639 = vpop.f32.mrf.mxu0
      %1640 = vdwg.mxu0
      %v1641 = vadd.f32 %v1411, %v1611
      %v1642 = vadd.f32 %v1412, %v1614
      %v1643 = vadd.f32 %v1413, %v1619
      %v1644 = vadd.f32 %v1414, %v1622
      %v1645 = vadd.f32 %v1415, %v1627
      %v1646 = vadd.f32 %v1416, %v1630
      %v1647 = vadd.f32 %v1417, %v1635
      %v1648 = vadd.f32 %v1418, %v1638
      %v1649 = vld [vmem:[%s2] sm:$0x1]
      %v1651 = vlaneseq
      %v1652 = vshrl.u32 %v1651, 7
      %v1653 = vsub.s32 0, %v1652
      %v1654 = vrot.slane %v1649, %v1653
      %v1656 = vadd.f32 %v1641, %v1654
      %v1657 = vadd.f32 %v1642, %v1654
      %v1658 = vadd.f32 %v1643, %v1654
      %v1659 = vadd.f32 %v1644, %v1654
      %v1660 = vadd.f32 %v1645, %v1654
      %v1661 = vadd.f32 %v1646, %v1654
      %v1662 = vadd.f32 %v1647, %v1654
      %v1663 = vadd.f32 %v1648, %v1654
      %v1664 = vmax.f32 %v1656, 0.0
      %v1665 = vmax.f32 %v1657, 0.0
      %v1666 = vmax.f32 %v1658, 0.0
      %v1667 = vmax.f32 %v1659, 0.0
      %v1668 = vmax.f32 %v1660, 0.0
      %v1669 = vmax.f32 %v1661, 0.0
      %v1670 = vmax.f32 %v1662, 0.0
      %v1671 = vmax.f32 %v1663, 0.0
      %1672 = vst [vmem:[#allocation2] sm:$0xff] 0.0
      %1673 = vst [vmem:[#allocation2 + $0x8] sm:$0x3] 0.0
      %1674 = vst [vmem:[#allocation2 + $0x10] sm:$0xff] 0.0
      %1675 = vst [vmem:[#allocation2 + $0x18] sm:$0x3] 0.0
      %1676 = vst [vmem:[#allocation2 + $0x20] sm:$0xff] 0.0
      %1677 = vst [vmem:[#allocation2 + $0x28] sm:$0x3] 0.0
      %1678 = vst [vmem:[#allocation2 + $0x30] sm:$0xff] 0.0
      %1679 = vst [vmem:[#allocation2 + $0x38] sm:$0x3] 0.0
      %1680 = vst [vmem:[#allocation2 + $0x40] sm:$0xff] 0.0
      %1681 = vst [vmem:[#allocation2 + $0x48] sm:$0x3] 0.0
      %1682 = vst [vmem:[#allocation2 + $0x50] sm:$0xff] 0.0
      %1683 = vst [vmem:[#allocation2 + $0x58] sm:$0x3] 0.0
      %1684 = vst [vmem:[#allocation2 + $0x60] sm:$0xff] 0.0
      %1685 = vst [vmem:[#allocation2 + $0x68] sm:$0x3] 0.0
      %1686 = vst [vmem:[#allocation2 + $0x70] sm:$0xff] 0.0
      %1687 = vst [vmem:[#allocation2 + $0x78] sm:$0x3] 0.0
      %1688 = vst [vmem:[#allocation2 + $0x80] sm:$0xff] 0.0
      %1689 = vst [vmem:[#allocation2 + $0x88] sm:$0x3] 0.0
      %1690 = vst [vmem:[#allocation2 + $0x90] sm:$0xff] 0.0
      %1691 = vst [vmem:[#allocation2 + $0x98] sm:$0x3] 0.0
      %s1692 = scalar_lea.vmem [#allocation2], 16
      %1693 = vst [vmem:[%s1692 + $0x1] sm:$0xff] %v1664
      %1694 = vst [vmem:[%s1692 + $0x11] sm:$0xff] %v1665
      %1695 = vst [vmem:[%s1692 + $0x21] sm:$0xff] %v1666
      %1696 = vst [vmem:[%s1692 + $0x31] sm:$0xff] %v1667
      %1697 = vst [vmem:[%s1692 + $0x41] sm:$0xff] %v1668
      %1698 = vst [vmem:[%s1692 + $0x51] sm:$0xff] %v1669
      %1699 = vst [vmem:[%s1692 + $0x61] sm:$0xff] %v1670
      %1700 = vst [vmem:[%s1692 + $0x71] sm:$0xff] %v1671
      %v1701 = vld [vmem:[#allocation2] sm:$0xff]
      %v1702 = vld [vmem:[#allocation2 + $0x10] sm:$0xff]
      %v1703 = vld [vmem:[#allocation2 + $0x20] sm:$0xff]
      %v1704 = vld [vmem:[#allocation2 + $0x30] sm:$0xff]
      %v1705 = vld [vmem:[#allocation2 + $0x40] sm:$0xff]
      %v1706 = vld [vmem:[#allocation2 + $0x50] sm:$0xff]
      %v1707 = vld [vmem:[#allocation2 + $0x60] sm:$0xff]
      %v1708 = vld [vmem:[#allocation2 + $0x70] sm:$0xff]
      %v1709 = vpack.c.bf16 %v1701, %v1701
      %v1710 = vpack.c.bf16 %v1702, %v1702
      %v1711 = vpack.c.bf16 %v1703, %v1703
      %v1712 = vpack.c.bf16 %v1704, %v1704
      %v1713 = vpack.c.bf16 %v1705, %v1705
      %v1714 = vpack.c.bf16 %v1706, %v1706
      %v1715 = vpack.c.bf16 %v1707, %v1707
      %v1716 = vpack.c.bf16 %v1708, %v1708
      %v1717 = vld [vmem:[%s3] sm:$0xf]
      %v1718 = vld [vmem:[%s3 + $0x4] sm:$0xf]
      %v1719 = vld [vmem:[%s3 + $0x8] sm:$0xf]
      %v1720 = vld [vmem:[%s3 + $0xc] sm:$0xf]
      %v1721 = vld [vmem:[%s3 + $0x10] sm:$0xf]
      %v1722 = vld [vmem:[%s3 + $0x14] sm:$0xf]
      %v1723 = vld [vmem:[%s3 + $0x18] sm:$0xf]
      %v1724 = vld [vmem:[%s3 + $0x1c] sm:$0xf]
      %v1725 = vld [vmem:[%s3 + $0x20] sm:$0xf]
      %v1726 = vld [vmem:[%s3 + $0x24] sm:$0xf]
      %v1727 = vld [vmem:[%s3 + $0x28] sm:$0xf]
      %v1728 = vld [vmem:[%s3 + $0x2c] sm:$0xf]
      %v1729 = vld [vmem:[%s3 + $0x30] sm:$0xf]
      %v1730 = vld [vmem:[%s3 + $0x34] sm:$0xf]
      %v1731 = vld [vmem:[%s3 + $0x38] sm:$0xf]
      %v1732 = vld [vmem:[%s3 + $0x3c] sm:$0xf]
      %v1733 = vld [vmem:[#allocation2 + $0x1] sm:$0xff]
      %v1734 = vld [vmem:[#allocation2 + $0x11] sm:$0xff]
      %v1735 = vld [vmem:[#allocation2 + $0x21] sm:$0xff]
      %v1736 = vld [vmem:[#allocation2 + $0x31] sm:$0xff]
      %v1737 = vld [vmem:[#allocation2 + $0x41] sm:$0xff]
      %v1738 = vld [vmem:[#allocation2 + $0x51] sm:$0xff]
      %v1739 = vld [vmem:[#allocation2 + $0x61] sm:$0xff]
      %v1740 = vld [vmem:[#allocation2 + $0x71] sm:$0xff]
      %v1741 = vpack.c.bf16 %v1733, %v1733
      %v1742 = vpack.c.bf16 %v1734, %v1734
      %v1743 = vpack.c.bf16 %v1735, %v1735
      %v1744 = vpack.c.bf16 %v1736, %v1736
      %v1745 = vpack.c.bf16 %v1737, %v1737
      %v1746 = vpack.c.bf16 %v1738, %v1738
      %v1747 = vpack.c.bf16 %v1739, %v1739
      %v1748 = vpack.c.bf16 %v1740, %v1740
      %s1749 = scalar_lea.vmem %s3, 64
      %v1750 = vld [vmem:[%s1749] sm:$0xf]
      %v1751 = vld [vmem:[%s1749 + $0x4] sm:$0xf]
      %v1752 = vld [vmem:[%s1749 + $0x8] sm:$0xf]
      %v1753 = vld [vmem:[%s1749 + $0xc] sm:$0xf]
      %v1754 = vld [vmem:[%s1749 + $0x10] sm:$0xf]
      %v1755 = vld [vmem:[%s1749 + $0x14] sm:$0xf]
      %v1756 = vld [vmem:[%s1749 + $0x18] sm:$0xf]
      %v1757 = vld [vmem:[%s1749 + $0x1c] sm:$0xf]
      %v1758 = vld [vmem:[%s1749 + $0x20] sm:$0xf]
      %v1759 = vld [vmem:[%s1749 + $0x24] sm:$0xf]
      %v1760 = vld [vmem:[%s1749 + $0x28] sm:$0xf]
      %v1761 = vld [vmem:[%s1749 + $0x2c] sm:$0xf]
      %v1762 = vld [vmem:[%s1749 + $0x30] sm:$0xf]
      %v1763 = vld [vmem:[%s1749 + $0x34] sm:$0xf]
      %v1764 = vld [vmem:[%s1749 + $0x38] sm:$0xf]
      %v1765 = vld [vmem:[%s1749 + $0x3c] sm:$0xf]
      %v1774 = vunpack.c.l.b16 %v1741
      %v1775 = vunpack.c.l.b16 %v1742
      %v1776 = vunpack.c.l.b16 %v1743
      %v1777 = vunpack.c.l.b16 %v1744
      %v1778 = vunpack.c.l.b16 %v1745
      %v1779 = vunpack.c.l.b16 %v1746
      %v1780 = vunpack.c.l.b16 %v1747
      %v1781 = vunpack.c.l.b16 %v1748
      %v1782 = vpack.c.b16 %v1775, %v1774
      %v1783 = vpack.c.b16 %v1777, %v1776
      %v1784 = vpack.c.b16 %v1779, %v1778
      %v1785 = vpack.c.b16 %v1781, %v1780
      %v1806 = vunpack.c.l.b16 %v1750
      %v1807 = vunpack.c.l.b16 %v1751
      %v1808 = vunpack.c.l.b16 %v1752
      %v1809 = vunpack.c.l.b16 %v1753
      %v1810 = vunpack.c.l.b16 %v1754
      %v1811 = vunpack.c.l.b16 %v1755
      %v1812 = vunpack.c.l.b16 %v1756
      %v1813 = vunpack.c.l.b16 %v1757
      %v1814 = vunpack.c.l.b16 %v1758
      %v1815 = vunpack.c.l.b16 %v1759
      %v1816 = vunpack.c.l.b16 %v1760
      %v1817 = vunpack.c.l.b16 %v1761
      %v1818 = vunpack.c.l.b16 %v1762
      %v1819 = vunpack.c.l.b16 %v1763
      %v1820 = vunpack.c.l.b16 %v1764
      %v1821 = vunpack.c.l.b16 %v1765
      %v1822 = vpack.c.b16 %v1807, %v1806
      %v1823 = vpack.c.b16 %v1809, %v1808
      %v1824 = vpack.c.b16 %v1811, %v1810
      %v1825 = vpack.c.b16 %v1813, %v1812
      %v1826 = vpack.c.b16 %v1815, %v1814
      %v1827 = vpack.c.b16 %v1817, %v1816
      %v1828 = vpack.c.b16 %v1819, %v1818
      %v1829 = vpack.c.b16 %v1821, %v1820
      %1838 = vmatprep.subr.bf16.mxu0 0
      %1839 = vmatpush1.bf16.msra.mxu0 %v1829
      %1840 = vmatprep.subr.bf16.mxu0 0
      %1841 = vmatpush1.bf16.msra.mxu0 %v1828
      %1842 = vmatprep.subr.bf16.mxu0 0
      %1843 = vmatpush1.bf16.msra.mxu0 %v1827
      %1844 = vmatprep.subr.bf16.mxu0 0
      %1845 = vmatpush1.bf16.msra.mxu0 %v1826
      %1846 = vmatprep.subr.bf16.mxu0 0
      %1847 = vmatpush1.bf16.msra.mxu0 %v1825
      %1848 = vmatprep.subr.bf16.mxu0 0
      %1849 = vmatpush1.bf16.msra.mxu0 %v1824
      %1850 = vmatprep.subr.bf16.mxu0 0
      %1851 = vmatpush1.bf16.msra.mxu0 %v1823
      %1852 = vmatprep.subr.bf16.mxu0 0
      %1853 = vmatpush1.bf16.msra.mxu0 %v1822
      %1854 = vmatprep.subr.bf16.mxu0 0
      %1855 = vmatpush2.bf16.msra.mxu0 0
      %1856 = vmatprep.subr.bf16.mxu0 0
      %1857 = vmatpush2.bf16.msra.mxu0 0
      %1858 = vmatprep.subr.bf16.mxu0 0
      %1859 = vmatpush2.bf16.msra.mxu0 0
      %1860 = vmatprep.subr.bf16.mxu0 0
      %1861 = vmatpush2.bf16.msra.mxu0 0
      %1862 = vmatprep.subr.bf16.mxu0 0
      %1863 = vmatpush2.bf16.msra.mxu0 0
      %1864 = vmatprep.subr.bf16.mxu0 0
      %1865 = vmatpush2.bf16.msra.mxu0 0
      %1866 = vmatprep.subr.bf16.mxu0 0
      %1867 = vmatpush2.bf16.msra.mxu0 0
      %1868 = vmatprep.subr.bf16.mxu0 0
      %1869 = vmatpush2.bf16.msra.mxu0 0
      %1870 = vmatprep.mubr.bf16.mxu0 0
      %1871 = vmatmul.mubr.bf16.gmra.mxu0 %v1782
      %v1872 = vpop.f32.mrf.mxu0
      %v1873 = vadd.f32 0.0, %v1872
      %v1874 = vpop.f32.mrf.mxu0
      %v1875 = vpop.f32.mrf.mxu0
      %v1876 = vadd.f32 0.0, %v1875
      %v1877 = vpop.f32.mrf.mxu0
      %1878 = vmatprep.mubr.bf16.mxu0 0
      %1879 = vmatmul.mubr.bf16.gmra.mxu0 %v1783
      %v1880 = vpop.f32.mrf.mxu0
      %v1881 = vadd.f32 0.0, %v1880
      %v1882 = vpop.f32.mrf.mxu0
      %v1883 = vpop.f32.mrf.mxu0
      %v1884 = vadd.f32 0.0, %v1883
      %v1885 = vpop.f32.mrf.mxu0
      %1886 = vmatprep.mubr.bf16.mxu0 0
      %1887 = vmatmul.mubr.bf16.gmra.mxu0 %v1784
      %v1888 = vpop.f32.mrf.mxu0
      %v1889 = vadd.f32 0.0, %v1888
      %v1890 = vpop.f32.mrf.mxu0
      %v1891 = vpop.f32.mrf.mxu0
      %v1892 = vadd.f32 0.0, %v1891
      %v1893 = vpop.f32.mrf.mxu0
      %1894 = vmatprep.mubr.bf16.mxu0 0
      %1895 = vmatmul.mubr.bf16.gmra.mxu0 %v1785
      %v1896 = vpop.f32.mrf.mxu0
      %v1897 = vadd.f32 0.0, %v1896
      %v1898 = vpop.f32.mrf.mxu0
      %v1899 = vpop.f32.mrf.mxu0
      %v1900 = vadd.f32 0.0, %v1899
      %v1901 = vpop.f32.mrf.mxu0
      %1902 = vdwg.mxu0
      %v1911 = vunpack.c.l.b16 %v1709
      %v1912 = vunpack.c.l.b16 %v1710
      %v1913 = vunpack.c.l.b16 %v1711
      %v1914 = vunpack.c.l.b16 %v1712
      %v1915 = vunpack.c.l.b16 %v1713
      %v1916 = vunpack.c.l.b16 %v1714
      %v1917 = vunpack.c.l.b16 %v1715
      %v1918 = vunpack.c.l.b16 %v1716
      %v1919 = vpack.c.b16 %v1912, %v1911
      %v1920 = vpack.c.b16 %v1914, %v1913
      %v1921 = vpack.c.b16 %v1916, %v1915
      %v1922 = vpack.c.b16 %v1918, %v1917
      %v1943 = vunpack.c.l.b16 %v1717
      %v1944 = vunpack.c.l.b16 %v1718
      %v1945 = vunpack.c.l.b16 %v1719
      %v1946 = vunpack.c.l.b16 %v1720
      %v1947 = vunpack.c.l.b16 %v1721
      %v1948 = vunpack.c.l.b16 %v1722
      %v1949 = vunpack.c.l.b16 %v1723
      %v1950 = vunpack.c.l.b16 %v1724
      %v1951 = vunpack.c.l.b16 %v1725
      %v1952 = vunpack.c.l.b16 %v1726
      %v1953 = vunpack.c.l.b16 %v1727
      %v1954 = vunpack.c.l.b16 %v1728
      %v1955 = vunpack.c.l.b16 %v1729
      %v1956 = vunpack.c.l.b16 %v1730
      %v1957 = vunpack.c.l.b16 %v1731
      %v1958 = vunpack.c.l.b16 %v1732
      %v1959 = vpack.c.b16 %v1944, %v1943
      %v1960 = vpack.c.b16 %v1946, %v1945
      %v1961 = vpack.c.b16 %v1948, %v1947
      %v1962 = vpack.c.b16 %v1950, %v1949
      %v1963 = vpack.c.b16 %v1952, %v1951
      %v1964 = vpack.c.b16 %v1954, %v1953
      %v1965 = vpack.c.b16 %v1956, %v1955
      %v1966 = vpack.c.b16 %v1958, %v1957
      %1975 = vmatprep.subr.bf16.mxu0 0
      %1976 = vmatpush1.bf16.msra.mxu0 %v1966
      %1977 = vmatprep.subr.bf16.mxu0 0
      %1978 = vmatpush1.bf16.msra.mxu0 %v1965
      %1979 = vmatprep.subr.bf16.mxu0 0
      %1980 = vmatpush1.bf16.msra.mxu0 %v1964
      %1981 = vmatprep.subr.bf16.mxu0 0
      %1982 = vmatpush1.bf16.msra.mxu0 %v1963
      %1983 = vmatprep.subr.bf16.mxu0 0
      %1984 = vmatpush1.bf16.msra.mxu0 %v1962
      %1985 = vmatprep.subr.bf16.mxu0 0
      %1986 = vmatpush1.bf16.msra.mxu0 %v1961
      %1987 = vmatprep.subr.bf16.mxu0 0
      %1988 = vmatpush1.bf16.msra.mxu0 %v1960
      %1989 = vmatprep.subr.bf16.mxu0 0
      %1990 = vmatpush1.bf16.msra.mxu0 %v1959
      %1991 = vmatprep.subr.bf16.mxu0 0
      %1992 = vmatpush2.bf16.msra.mxu0 0
      %1993 = vmatprep.subr.bf16.mxu0 0
      %1994 = vmatpush2.bf16.msra.mxu0 0
      %1995 = vmatprep.subr.bf16.mxu0 0
      %1996 = vmatpush2.bf16.msra.mxu0 0
      %1997 = vmatprep.subr.bf16.mxu0 0
      %1998 = vmatpush2.bf16.msra.mxu0 0
      %1999 = vmatprep.subr.bf16.mxu0 0
      %2000 = vmatpush2.bf16.msra.mxu0 0
      %2001 = vmatprep.subr.bf16.mxu0 0
      %2002 = vmatpush2.bf16.msra.mxu0 0
      %2003 = vmatprep.subr.bf16.mxu0 0
      %2004 = vmatpush2.bf16.msra.mxu0 0
      %2005 = vmatprep.subr.bf16.mxu0 0
      %2006 = vmatpush2.bf16.msra.mxu0 0
      %2007 = vmatprep.mubr.bf16.mxu0 0
      %2008 = vmatmul.mubr.bf16.gmra.mxu0 %v1919
      %v2009 = vpop.f32.mrf.mxu0
      %v2010 = vadd.f32 %v1873, %v2009
      %v2011 = vpop.f32.mrf.mxu0
      %v2012 = vpop.f32.mrf.mxu0
      %v2013 = vadd.f32 %v1876, %v2012
      %v2014 = vpop.f32.mrf.mxu0
      %2015 = vmatprep.mubr.bf16.mxu0 0
      %2016 = vmatmul.mubr.bf16.gmra.mxu0 %v1920
      %v2017 = vpop.f32.mrf.mxu0
      %v2018 = vadd.f32 %v1881, %v2017
      %v2019 = vpop.f32.mrf.mxu0
      %v2020 = vpop.f32.mrf.mxu0
      %v2021 = vadd.f32 %v1884, %v2020
      %v2022 = vpop.f32.mrf.mxu0
      %2023 = vmatprep.mubr.bf16.mxu0 0
      %2024 = vmatmul.mubr.bf16.gmra.mxu0 %v1921
      %v2025 = vpop.f32.mrf.mxu0
      %v2026 = vadd.f32 %v1889, %v2025
      %v2027 = vpop.f32.mrf.mxu0
      %v2028 = vpop.f32.mrf.mxu0
      %v2029 = vadd.f32 %v1892, %v2028
      %v2030 = vpop.f32.mrf.mxu0
      %2031 = vmatprep.mubr.bf16.mxu0 0
      %2032 = vmatmul.mubr.bf16.gmra.mxu0 %v1922
      %v2033 = vpop.f32.mrf.mxu0
      %v2034 = vadd.f32 %v1897, %v2033
      %v2035 = vpop.f32.mrf.mxu0
      %v2036 = vpop.f32.mrf.mxu0
      %v2037 = vadd.f32 %v1900, %v2036
      %v2038 = vpop.f32.mrf.mxu0
      %2039 = vdwg.mxu0
      %v2040 = vld [vmem:[#allocation2 + $0x2] sm:$0xff]
      %v2041 = vld [vmem:[#allocation2 + $0x12] sm:$0xff]
      %v2042 = vld [vmem:[#allocation2 + $0x22] sm:$0xff]
      %v2043 = vld [vmem:[#allocation2 + $0x32] sm:$0xff]
      %v2044 = vld [vmem:[#allocation2 + $0x42] sm:$0xff]
      %v2045 = vld [vmem:[#allocation2 + $0x52] sm:$0xff]
      %v2046 = vld [vmem:[#allocation2 + $0x62] sm:$0xff]
      %v2047 = vld [vmem:[#allocation2 + $0x72] sm:$0xff]
      %v2048 = vpack.c.bf16 %v2040, %v2040
      %v2049 = vpack.c.bf16 %v2041, %v2041
      %v2050 = vpack.c.bf16 %v2042, %v2042
      %v2051 = vpack.c.bf16 %v2043, %v2043
      %v2052 = vpack.c.bf16 %v2044, %v2044
      %v2053 = vpack.c.bf16 %v2045, %v2045
      %v2054 = vpack.c.bf16 %v2046, %v2046
      %v2055 = vpack.c.bf16 %v2047, %v2047
      %s2056 = scalar_lea.vmem %s3, 128
      %v2057 = vld [vmem:[%s2056] sm:$0xf]
      %v2058 = vld [vmem:[%s2056 + $0x4] sm:$0xf]
      %v2059 = vld [vmem:[%s2056 + $0x8] sm:$0xf]
      %v2060 = vld [vmem:[%s2056 + $0xc] sm:$0xf]
      %v2061 = vld [vmem:[%s2056 + $0x10] sm:$0xf]
      %v2062 = vld [vmem:[%s2056 + $0x14] sm:$0xf]
      %v2063 = vld [vmem:[%s2056 + $0x18] sm:$0xf]
      %v2064 = vld [vmem:[%s2056 + $0x1c] sm:$0xf]
      %v2065 = vld [vmem:[%s2056 + $0x20] sm:$0xf]
      %v2066 = vld [vmem:[%s2056 + $0x24] sm:$0xf]
      %v2067 = vld [vmem:[%s2056 + $0x28] sm:$0xf]
      %v2068 = vld [vmem:[%s2056 + $0x2c] sm:$0xf]
      %v2069 = vld [vmem:[%s2056 + $0x30] sm:$0xf]
      %v2070 = vld [vmem:[%s2056 + $0x34] sm:$0xf]
      %v2071 = vld [vmem:[%s2056 + $0x38] sm:$0xf]
      %v2072 = vld [vmem:[%s2056 + $0x3c] sm:$0xf]
      %v2081 = vunpack.c.l.b16 %v2048
      %v2082 = vunpack.c.l.b16 %v2049
      %v2083 = vunpack.c.l.b16 %v2050
      %v2084 = vunpack.c.l.b16 %v2051
      %v2085 = vunpack.c.l.b16 %v2052
      %v2086 = vunpack.c.l.b16 %v2053
      %v2087 = vunpack.c.l.b16 %v2054
      %v2088 = vunpack.c.l.b16 %v2055
      %v2089 = vpack.c.b16 %v2082, %v2081
      %v2090 = vpack.c.b16 %v2084, %v2083
      %v2091 = vpack.c.b16 %v2086, %v2085
      %v2092 = vpack.c.b16 %v2088, %v2087
      %v2113 = vunpack.c.l.b16 %v2057
      %v2114 = vunpack.c.l.b16 %v2058
      %v2115 = vunpack.c.l.b16 %v2059
      %v2116 = vunpack.c.l.b16 %v2060
      %v2117 = vunpack.c.l.b16 %v2061
      %v2118 = vunpack.c.l.b16 %v2062
      %v2119 = vunpack.c.l.b16 %v2063
      %v2120 = vunpack.c.l.b16 %v2064
      %v2121 = vunpack.c.l.b16 %v2065
      %v2122 = vunpack.c.l.b16 %v2066
      %v2123 = vunpack.c.l.b16 %v2067
      %v2124 = vunpack.c.l.b16 %v2068
      %v2125 = vunpack.c.l.b16 %v2069
      %v2126 = vunpack.c.l.b16 %v2070
      %v2127 = vunpack.c.l.b16 %v2071
      %v2128 = vunpack.c.l.b16 %v2072
      %v2129 = vpack.c.b16 %v2114, %v2113
      %v2130 = vpack.c.b16 %v2116, %v2115
      %v2131 = vpack.c.b16 %v2118, %v2117
      %v2132 = vpack.c.b16 %v2120, %v2119
      %v2133 = vpack.c.b16 %v2122, %v2121
      %v2134 = vpack.c.b16 %v2124, %v2123
      %v2135 = vpack.c.b16 %v2126, %v2125
      %v2136 = vpack.c.b16 %v2128, %v2127
      %2145 = vmatprep.subr.bf16.mxu0 0
      %2146 = vmatpush1.bf16.msra.mxu0 %v2136
      %2147 = vmatprep.subr.bf16.mxu0 0
      %2148 = vmatpush1.bf16.msra.mxu0 %v2135
      %2149 = vmatprep.subr.bf16.mxu0 0
      %2150 = vmatpush1.bf16.msra.mxu0 %v2134
      %2151 = vmatprep.subr.bf16.mxu0 0
      %2152 = vmatpush1.bf16.msra.mxu0 %v2133
      %2153 = vmatprep.subr.bf16.mxu0 0
      %2154 = vmatpush1.bf16.msra.mxu0 %v2132
      %2155 = vmatprep.subr.bf16.mxu0 0
      %2156 = vmatpush1.bf16.msra.mxu0 %v2131
      %2157 = vmatprep.subr.bf16.mxu0 0
      %2158 = vmatpush1.bf16.msra.mxu0 %v2130
      %2159 = vmatprep.subr.bf16.mxu0 0
      %2160 = vmatpush1.bf16.msra.mxu0 %v2129
      %2161 = vmatprep.subr.bf16.mxu0 0
      %2162 = vmatpush2.bf16.msra.mxu0 0
      %2163 = vmatprep.subr.bf16.mxu0 0
      %2164 = vmatpush2.bf16.msra.mxu0 0
      %2165 = vmatprep.subr.bf16.mxu0 0
      %2166 = vmatpush2.bf16.msra.mxu0 0
      %2167 = vmatprep.subr.bf16.mxu0 0
      %2168 = vmatpush2.bf16.msra.mxu0 0
      %2169 = vmatprep.subr.bf16.mxu0 0
      %2170 = vmatpush2.bf16.msra.mxu0 0
      %2171 = vmatprep.subr.bf16.mxu0 0
      %2172 = vmatpush2.bf16.msra.mxu0 0
      %2173 = vmatprep.subr.bf16.mxu0 0
      %2174 = vmatpush2.bf16.msra.mxu0 0
      %2175 = vmatprep.subr.bf16.mxu0 0
      %2176 = vmatpush2.bf16.msra.mxu0 0
      %2177 = vmatprep.mubr.bf16.mxu0 0
      %2178 = vmatmul.mubr.bf16.gmra.mxu0 %v2089
      %v2179 = vpop.f32.mrf.mxu0
      %v2180 = vadd.f32 0.0, %v2179
      %v2181 = vpop.f32.mrf.mxu0
      %v2182 = vpop.f32.mrf.mxu0
      %v2183 = vadd.f32 0.0, %v2182
      %v2184 = vpop.f32.mrf.mxu0
      %2185 = vmatprep.mubr.bf16.mxu0 0
      %2186 = vmatmul.mubr.bf16.gmra.mxu0 %v2090
      %v2187 = vpop.f32.mrf.mxu0
      %v2188 = vadd.f32 0.0, %v2187
      %v2189 = vpop.f32.mrf.mxu0
      %v2190 = vpop.f32.mrf.mxu0
      %v2191 = vadd.f32 0.0, %v2190
      %v2192 = vpop.f32.mrf.mxu0
      %2193 = vmatprep.mubr.bf16.mxu0 0
      %2194 = vmatmul.mubr.bf16.gmra.mxu0 %v2091
      %v2195 = vpop.f32.mrf.mxu0
      %v2196 = vadd.f32 0.0, %v2195
      %v2197 = vpop.f32.mrf.mxu0
      %v2198 = vpop.f32.mrf.mxu0
      %v2199 = vadd.f32 0.0, %v2198
      %v2200 = vpop.f32.mrf.mxu0
      %2201 = vmatprep.mubr.bf16.mxu0 0
      %2202 = vmatmul.mubr.bf16.gmra.mxu0 %v2092
      %v2203 = vpop.f32.mrf.mxu0
      %v2204 = vadd.f32 0.0, %v2203
      %v2205 = vpop.f32.mrf.mxu0
      %v2206 = vpop.f32.mrf.mxu0
      %v2207 = vadd.f32 0.0, %v2206
      %v2208 = vpop.f32.mrf.mxu0
      %2209 = vdwg.mxu0
      %v2210 = vadd.f32 %v2010, %v2180
      %v2211 = vadd.f32 %v2013, %v2183
      %v2212 = vadd.f32 %v2018, %v2188
      %v2213 = vadd.f32 %v2021, %v2191
      %v2214 = vadd.f32 %v2026, %v2196
      %v2215 = vadd.f32 %v2029, %v2199
      %v2216 = vadd.f32 %v2034, %v2204
      %v2217 = vadd.f32 %v2037, %v2207
      %v2218 = vld [vmem:[%s1692] sm:$0xff]
      %v2219 = vld [vmem:[%s1692 + $0x10] sm:$0xff]
      %v2220 = vld [vmem:[%s1692 + $0x20] sm:$0xff]
      %v2221 = vld [vmem:[%s1692 + $0x30] sm:$0xff]
      %v2222 = vld [vmem:[%s1692 + $0x40] sm:$0xff]
      %v2223 = vld [vmem:[%s1692 + $0x50] sm:$0xff]
      %v2224 = vld [vmem:[%s1692 + $0x60] sm:$0xff]
      %v2225 = vld [vmem:[%s1692 + $0x70] sm:$0xff]
      %v2226 = vpack.c.bf16 %v2218, %v2218
      %v2227 = vpack.c.bf16 %v2219, %v2219
      %v2228 = vpack.c.bf16 %v2220, %v2220
      %v2229 = vpack.c.bf16 %v2221, %v2221
      %v2230 = vpack.c.bf16 %v2222, %v2222
      %v2231 = vpack.c.bf16 %v2223, %v2223
      %v2232 = vpack.c.bf16 %v2224, %v2224
      %v2233 = vpack.c.bf16 %v2225, %v2225
      %s2234 = scalar_lea.vmem %s3, 192
      %v2235 = vld [vmem:[%s2234] sm:$0xf]
      %v2236 = vld [vmem:[%s2234 + $0x4] sm:$0xf]
      %v2237 = vld [vmem:[%s2234 + $0x8] sm:$0xf]
      %v2238 = vld [vmem:[%s2234 + $0xc] sm:$0xf]
      %v2239 = vld [vmem:[%s2234 + $0x10] sm:$0xf]
      %v2240 = vld [vmem:[%s2234 + $0x14] sm:$0xf]
      %v2241 = vld [vmem:[%s2234 + $0x18] sm:$0xf]
      %v2242 = vld [vmem:[%s2234 + $0x1c] sm:$0xf]
      %v2243 = vld [vmem:[%s2234 + $0x20] sm:$0xf]
      %v2244 = vld [vmem:[%s2234 + $0x24] sm:$0xf]
      %v2245 = vld [vmem:[%s2234 + $0x28] sm:$0xf]
      %v2246 = vld [vmem:[%s2234 + $0x2c] sm:$0xf]
      %v2247 = vld [vmem:[%s2234 + $0x30] sm:$0xf]
      %v2248 = vld [vmem:[%s2234 + $0x34] sm:$0xf]
      %v2249 = vld [vmem:[%s2234 + $0x38] sm:$0xf]
      %v2250 = vld [vmem:[%s2234 + $0x3c] sm:$0xf]
      %v2259 = vunpack.c.l.b16 %v2226
      %v2260 = vunpack.c.l.b16 %v2227
      %v2261 = vunpack.c.l.b16 %v2228
      %v2262 = vunpack.c.l.b16 %v2229
      %v2263 = vunpack.c.l.b16 %v2230
      %v2264 = vunpack.c.l.b16 %v2231
      %v2265 = vunpack.c.l.b16 %v2232
      %v2266 = vunpack.c.l.b16 %v2233
      %v2267 = vpack.c.b16 %v2260, %v2259
      %v2268 = vpack.c.b16 %v2262, %v2261
      %v2269 = vpack.c.b16 %v2264, %v2263
      %v2270 = vpack.c.b16 %v2266, %v2265
      %v2291 = vunpack.c.l.b16 %v2235
      %v2292 = vunpack.c.l.b16 %v2236
      %v2293 = vunpack.c.l.b16 %v2237
      %v2294 = vunpack.c.l.b16 %v2238
      %v2295 = vunpack.c.l.b16 %v2239
      %v2296 = vunpack.c.l.b16 %v2240
      %v2297 = vunpack.c.l.b16 %v2241
      %v2298 = vunpack.c.l.b16 %v2242
      %v2299 = vunpack.c.l.b16 %v2243
      %v2300 = vunpack.c.l.b16 %v2244
      %v2301 = vunpack.c.l.b16 %v2245
      %v2302 = vunpack.c.l.b16 %v2246
      %v2303 = vunpack.c.l.b16 %v2247
      %v2304 = vunpack.c.l.b16 %v2248
      %v2305 = vunpack.c.l.b16 %v2249
      %v2306 = vunpack.c.l.b16 %v2250
      %v2307 = vpack.c.b16 %v2292, %v2291
      %v2308 = vpack.c.b16 %v2294, %v2293
      %v2309 = vpack.c.b16 %v2296, %v2295
      %v2310 = vpack.c.b16 %v2298, %v2297
      %v2311 = vpack.c.b16 %v2300, %v2299
      %v2312 = vpack.c.b16 %v2302, %v2301
      %v2313 = vpack.c.b16 %v2304, %v2303
      %v2314 = vpack.c.b16 %v2306, %v2305
      %2323 = vmatprep.subr.bf16.mxu0 0
      %2324 = vmatpush1.bf16.msra.mxu0 %v2314
      %2325 = vmatprep.subr.bf16.mxu0 0
      %2326 = vmatpush1.bf16.msra.mxu0 %v2313
      %2327 = vmatprep.subr.bf16.mxu0 0
      %2328 = vmatpush1.bf16.msra.mxu0 %v2312
      %2329 = vmatprep.subr.bf16.mxu0 0
      %2330 = vmatpush1.bf16.msra.mxu0 %v2311
      %2331 = vmatprep.subr.bf16.mxu0 0
      %2332 = vmatpush1.bf16.msra.mxu0 %v2310
      %2333 = vmatprep.subr.bf16.mxu0 0
      %2334 = vmatpush1.bf16.msra.mxu0 %v2309
      %2335 = vmatprep.subr.bf16.mxu0 0
      %2336 = vmatpush1.bf16.msra.mxu0 %v2308
      %2337 = vmatprep.subr.bf16.mxu0 0
      %2338 = vmatpush1.bf16.msra.mxu0 %v2307
      %2339 = vmatprep.subr.bf16.mxu0 0
      %2340 = vmatpush2.bf16.msra.mxu0 0
      %2341 = vmatprep.subr.bf16.mxu0 0
      %2342 = vmatpush2.bf16.msra.mxu0 0
      %2343 = vmatprep.subr.bf16.mxu0 0
      %2344 = vmatpush2.bf16.msra.mxu0 0
      %2345 = vmatprep.subr.bf16.mxu0 0
      %2346 = vmatpush2.bf16.msra.mxu0 0
      %2347 = vmatprep.subr.bf16.mxu0 0
      %2348 = vmatpush2.bf16.msra.mxu0 0
      %2349 = vmatprep.subr.bf16.mxu0 0
      %2350 = vmatpush2.bf16.msra.mxu0 0
      %2351 = vmatprep.subr.bf16.mxu0 0
      %2352 = vmatpush2.bf16.msra.mxu0 0
      %2353 = vmatprep.subr.bf16.mxu0 0
      %2354 = vmatpush2.bf16.msra.mxu0 0
      %2355 = vmatprep.mubr.bf16.mxu0 0
      %2356 = vmatmul.mubr.bf16.gmra.mxu0 %v2267
      %v2357 = vpop.f32.mrf.mxu0
      %v2358 = vadd.f32 0.0, %v2357
      %v2359 = vpop.f32.mrf.mxu0
      %v2360 = vpop.f32.mrf.mxu0
      %v2361 = vadd.f32 0.0, %v2360
      %v2362 = vpop.f32.mrf.mxu0
      %2363 = vmatprep.mubr.bf16.mxu0 0
      %2364 = vmatmul.mubr.bf16.gmra.mxu0 %v2268
      %v2365 = vpop.f32.mrf.mxu0
      %v2366 = vadd.f32 0.0, %v2365
      %v2367 = vpop.f32.mrf.mxu0
      %v2368 = vpop.f32.mrf.mxu0
      %v2369 = vadd.f32 0.0, %v2368
      %v2370 = vpop.f32.mrf.mxu0
      %2371 = vmatprep.mubr.bf16.mxu0 0
      %2372 = vmatmul.mubr.bf16.gmra.mxu0 %v2269
      %v2373 = vpop.f32.mrf.mxu0
      %v2374 = vadd.f32 0.0, %v2373
      %v2375 = vpop.f32.mrf.mxu0
      %v2376 = vpop.f32.mrf.mxu0
      %v2377 = vadd.f32 0.0, %v2376
      %v2378 = vpop.f32.mrf.mxu0
      %2379 = vmatprep.mubr.bf16.mxu0 0
      %2380 = vmatmul.mubr.bf16.gmra.mxu0 %v2270
      %v2381 = vpop.f32.mrf.mxu0
      %v2382 = vadd.f32 0.0, %v2381
      %v2383 = vpop.f32.mrf.mxu0
      %v2384 = vpop.f32.mrf.mxu0
      %v2385 = vadd.f32 0.0, %v2384
      %v2386 = vpop.f32.mrf.mxu0
      %2387 = vdwg.mxu0
      %v2388 = vadd.f32 %v2210, %v2358
      %v2389 = vadd.f32 %v2211, %v2361
      %v2390 = vadd.f32 %v2212, %v2366
      %v2391 = vadd.f32 %v2213, %v2369
      %v2392 = vadd.f32 %v2214, %v2374
      %v2393 = vadd.f32 %v2215, %v2377
      %v2394 = vadd.f32 %v2216, %v2382
      %v2395 = vadd.f32 %v2217, %v2385
      %v2396 = vld [vmem:[%s1692 + $0x1] sm:$0xff]
      %v2397 = vld [vmem:[%s1692 + $0x11] sm:$0xff]
      %v2398 = vld [vmem:[%s1692 + $0x21] sm:$0xff]
      %v2399 = vld [vmem:[%s1692 + $0x31] sm:$0xff]
      %v2400 = vld [vmem:[%s1692 + $0x41] sm:$0xff]
      %v2401 = vld [vmem:[%s1692 + $0x51] sm:$0xff]
      %v2402 = vld [vmem:[%s1692 + $0x61] sm:$0xff]
      %v2403 = vld [vmem:[%s1692 + $0x71] sm:$0xff]
      %v2404 = vpack.c.bf16 %v2396, %v2396
      %v2405 = vpack.c.bf16 %v2397, %v2397
      %v2406 = vpack.c.bf16 %v2398, %v2398
      %v2407 = vpack.c.bf16 %v2399, %v2399
      %v2408 = vpack.c.bf16 %v2400, %v2400
      %v2409 = vpack.c.bf16 %v2401, %v2401
      %v2410 = vpack.c.bf16 %v2402, %v2402
      %v2411 = vpack.c.bf16 %v2403, %v2403
      %s2412 = scalar_lea.vmem %s3, 256
      %v2413 = vld [vmem:[%s2412] sm:$0xf]
      %v2414 = vld [vmem:[%s2412 + $0x4] sm:$0xf]
      %v2415 = vld [vmem:[%s2412 + $0x8] sm:$0xf]
      %v2416 = vld [vmem:[%s2412 + $0xc] sm:$0xf]
      %v2417 = vld [vmem:[%s2412 + $0x10] sm:$0xf]
      %v2418 = vld [vmem:[%s2412 + $0x14] sm:$0xf]
      %v2419 = vld [vmem:[%s2412 + $0x18] sm:$0xf]
      %v2420 = vld [vmem:[%s2412 + $0x1c] sm:$0xf]
      %v2421 = vld [vmem:[%s2412 + $0x20] sm:$0xf]
      %v2422 = vld [vmem:[%s2412 + $0x24] sm:$0xf]
      %v2423 = vld [vmem:[%s2412 + $0x28] sm:$0xf]
      %v2424 = vld [vmem:[%s2412 + $0x2c] sm:$0xf]
      %v2425 = vld [vmem:[%s2412 + $0x30] sm:$0xf]
      %v2426 = vld [vmem:[%s2412 + $0x34] sm:$0xf]
      %v2427 = vld [vmem:[%s2412 + $0x38] sm:$0xf]
      %v2428 = vld [vmem:[%s2412 + $0x3c] sm:$0xf]
      %v2437 = vunpack.c.l.b16 %v2404
      %v2438 = vunpack.c.l.b16 %v2405
      %v2439 = vunpack.c.l.b16 %v2406
      %v2440 = vunpack.c.l.b16 %v2407
      %v2441 = vunpack.c.l.b16 %v2408
      %v2442 = vunpack.c.l.b16 %v2409
      %v2443 = vunpack.c.l.b16 %v2410
      %v2444 = vunpack.c.l.b16 %v2411
      %v2445 = vpack.c.b16 %v2438, %v2437
      %v2446 = vpack.c.b16 %v2440, %v2439
      %v2447 = vpack.c.b16 %v2442, %v2441
      %v2448 = vpack.c.b16 %v2444, %v2443
      %v2469 = vunpack.c.l.b16 %v2413
      %v2470 = vunpack.c.l.b16 %v2414
      %v2471 = vunpack.c.l.b16 %v2415
      %v2472 = vunpack.c.l.b16 %v2416
      %v2473 = vunpack.c.l.b16 %v2417
      %v2474 = vunpack.c.l.b16 %v2418
      %v2475 = vunpack.c.l.b16 %v2419
      %v2476 = vunpack.c.l.b16 %v2420
      %v2477 = vunpack.c.l.b16 %v2421
      %v2478 = vunpack.c.l.b16 %v2422
      %v2479 = vunpack.c.l.b16 %v2423
      %v2480 = vunpack.c.l.b16 %v2424
      %v2481 = vunpack.c.l.b16 %v2425
      %v2482 = vunpack.c.l.b16 %v2426
      %v2483 = vunpack.c.l.b16 %v2427
      %v2484 = vunpack.c.l.b16 %v2428
      %v2485 = vpack.c.b16 %v2470, %v2469
      %v2486 = vpack.c.b16 %v2472, %v2471
      %v2487 = vpack.c.b16 %v2474, %v2473
      %v2488 = vpack.c.b16 %v2476, %v2475
      %v2489 = vpack.c.b16 %v2478, %v2477
      %v2490 = vpack.c.b16 %v2480, %v2479
      %v2491 = vpack.c.b16 %v2482, %v2481
      %v2492 = vpack.c.b16 %v2484, %v2483
      %2501 = vmatprep.subr.bf16.mxu0 0
      %2502 = vmatpush1.bf16.msra.mxu0 %v2492
      %2503 = vmatprep.subr.bf16.mxu0 0
      %2504 = vmatpush1.bf16.msra.mxu0 %v2491
      %2505 = vmatprep.subr.bf16.mxu0 0
      %2506 = vmatpush1.bf16.msra.mxu0 %v2490
      %2507 = vmatprep.subr.bf16.mxu0 0
      %2508 = vmatpush1.bf16.msra.mxu0 %v2489
      %2509 = vmatprep.subr.bf16.mxu0 0
      %2510 = vmatpush1.bf16.msra.mxu0 %v2488
      %2511 = vmatprep.subr.bf16.mxu0 0
      %2512 = vmatpush1.bf16.msra.mxu0 %v2487
      %2513 = vmatprep.subr.bf16.mxu0 0
      %2514 = vmatpush1.bf16.msra.mxu0 %v2486
      %2515 = vmatprep.subr.bf16.mxu0 0
      %2516 = vmatpush1.bf16.msra.mxu0 %v2485
      %2517 = vmatprep.subr.bf16.mxu0 0
      %2518 = vmatpush2.bf16.msra.mxu0 0
      %2519 = vmatprep.subr.bf16.mxu0 0
      %2520 = vmatpush2.bf16.msra.mxu0 0
      %2521 = vmatprep.subr.bf16.mxu0 0
      %2522 = vmatpush2.bf16.msra.mxu0 0
      %2523 = vmatprep.subr.bf16.mxu0 0
      %2524 = vmatpush2.bf16.msra.mxu0 0
      %2525 = vmatprep.subr.bf16.mxu0 0
      %2526 = vmatpush2.bf16.msra.mxu0 0
      %2527 = vmatprep.subr.bf16.mxu0 0
      %2528 = vmatpush2.bf16.msra.mxu0 0
      %2529 = vmatprep.subr.bf16.mxu0 0
      %2530 = vmatpush2.bf16.msra.mxu0 0
      %2531 = vmatprep.subr.bf16.mxu0 0
      %2532 = vmatpush2.bf16.msra.mxu0 0
      %2533 = vmatprep.mubr.bf16.mxu0 0
      %2534 = vmatmul.mubr.bf16.gmra.mxu0 %v2445
      %v2535 = vpop.f32.mrf.mxu0
      %v2536 = vadd.f32 0.0, %v2535
      %v2537 = vpop.f32.mrf.mxu0
      %v2538 = vpop.f32.mrf.mxu0
      %v2539 = vadd.f32 0.0, %v2538
      %v2540 = vpop.f32.mrf.mxu0
      %2541 = vmatprep.mubr.bf16.mxu0 0
      %2542 = vmatmul.mubr.bf16.gmra.mxu0 %v2446
      %v2543 = vpop.f32.mrf.mxu0
      %v2544 = vadd.f32 0.0, %v2543
      %v2545 = vpop.f32.mrf.mxu0
      %v2546 = vpop.f32.mrf.mxu0
      %v2547 = vadd.f32 0.0, %v2546
      %v2548 = vpop.f32.mrf.mxu0
      %2549 = vmatprep.mubr.bf16.mxu0 0
      %2550 = vmatmul.mubr.bf16.gmra.mxu0 %v2447
      %v2551 = vpop.f32.mrf.mxu0
      %v2552 = vadd.f32 0.0, %v2551
      %v2553 = vpop.f32.mrf.mxu0
      %v2554 = vpop.f32.mrf.mxu0
      %v2555 = vadd.f32 0.0, %v2554
      %v2556 = vpop.f32.mrf.mxu0
      %2557 = vmatprep.mubr.bf16.mxu0 0
      %2558 = vmatmul.mubr.bf16.gmra.mxu0 %v2448
      %v2559 = vpop.f32.mrf.mxu0
      %v2560 = vadd.f32 0.0, %v2559
      %v2561 = vpop.f32.mrf.mxu0
      %v2562 = vpop.f32.mrf.mxu0
      %v2563 = vadd.f32 0.0, %v2562
      %v2564 = vpop.f32.mrf.mxu0
      %2565 = vdwg.mxu0
      %v2566 = vadd.f32 %v2388, %v2536
      %v2567 = vadd.f32 %v2389, %v2539
      %v2568 = vadd.f32 %v2390, %v2544
      %v2569 = vadd.f32 %v2391, %v2547
      %v2570 = vadd.f32 %v2392, %v2552
      %v2571 = vadd.f32 %v2393, %v2555
      %v2572 = vadd.f32 %v2394, %v2560
      %v2573 = vadd.f32 %v2395, %v2563
      %v2574 = vld [vmem:[%s1692 + $0x2] sm:$0xff]
      %v2575 = vld [vmem:[%s1692 + $0x12] sm:$0xff]
      %v2576 = vld [vmem:[%s1692 + $0x22] sm:$0xff]
      %v2577 = vld [vmem:[%s1692 + $0x32] sm:$0xff]
      %v2578 = vld [vmem:[%s1692 + $0x42] sm:$0xff]
      %v2579 = vld [vmem:[%s1692 + $0x52] sm:$0xff]
      %v2580 = vld [vmem:[%s1692 + $0x62] sm:$0xff]
      %v2581 = vld [vmem:[%s1692 + $0x72] sm:$0xff]
      %v2582 = vpack.c.bf16 %v2574, %v2574
      %v2583 = vpack.c.bf16 %v2575, %v2575
      %v2584 = vpack.c.bf16 %v2576, %v2576
      %v2585 = vpack.c.bf16 %v2577, %v2577
      %v2586 = vpack.c.bf16 %v2578, %v2578
      %v2587 = vpack.c.bf16 %v2579, %v2579
      %v2588 = vpack.c.bf16 %v2580, %v2580
      %v2589 = vpack.c.bf16 %v2581, %v2581
      %s2590 = scalar_lea.vmem %s3, 320
      %v2591 = vld [vmem:[%s2590] sm:$0xf]
      %v2592 = vld [vmem:[%s2590 + $0x4] sm:$0xf]
      %v2593 = vld [vmem:[%s2590 + $0x8] sm:$0xf]
      %v2594 = vld [vmem:[%s2590 + $0xc] sm:$0xf]
      %v2595 = vld [vmem:[%s2590 + $0x10] sm:$0xf]
      %v2596 = vld [vmem:[%s2590 + $0x14] sm:$0xf]
      %v2597 = vld [vmem:[%s2590 + $0x18] sm:$0xf]
      %v2598 = vld [vmem:[%s2590 + $0x1c] sm:$0xf]
      %v2599 = vld [vmem:[%s2590 + $0x20] sm:$0xf]
      %v2600 = vld [vmem:[%s2590 + $0x24] sm:$0xf]
      %v2601 = vld [vmem:[%s2590 + $0x28] sm:$0xf]
      %v2602 = vld [vmem:[%s2590 + $0x2c] sm:$0xf]
      %v2603 = vld [vmem:[%s2590 + $0x30] sm:$0xf]
      %v2604 = vld [vmem:[%s2590 + $0x34] sm:$0xf]
      %v2605 = vld [vmem:[%s2590 + $0x38] sm:$0xf]
      %v2606 = vld [vmem:[%s2590 + $0x3c] sm:$0xf]
      %v2615 = vunpack.c.l.b16 %v2582
      %v2616 = vunpack.c.l.b16 %v2583
      %v2617 = vunpack.c.l.b16 %v2584
      %v2618 = vunpack.c.l.b16 %v2585
      %v2619 = vunpack.c.l.b16 %v2586
      %v2620 = vunpack.c.l.b16 %v2587
      %v2621 = vunpack.c.l.b16 %v2588
      %v2622 = vunpack.c.l.b16 %v2589
      %v2623 = vpack.c.b16 %v2616, %v2615
      %v2624 = vpack.c.b16 %v2618, %v2617
      %v2625 = vpack.c.b16 %v2620, %v2619
      %v2626 = vpack.c.b16 %v2622, %v2621
      %v2647 = vunpack.c.l.b16 %v2591
      %v2648 = vunpack.c.l.b16 %v2592
      %v2649 = vunpack.c.l.b16 %v2593
      %v2650 = vunpack.c.l.b16 %v2594
      %v2651 = vunpack.c.l.b16 %v2595
      %v2652 = vunpack.c.l.b16 %v2596
      %v2653 = vunpack.c.l.b16 %v2597
      %v2654 = vunpack.c.l.b16 %v2598
      %v2655 = vunpack.c.l.b16 %v2599
      %v2656 = vunpack.c.l.b16 %v2600
      %v2657 = vunpack.c.l.b16 %v2601
      %v2658 = vunpack.c.l.b16 %v2602
      %v2659 = vunpack.c.l.b16 %v2603
      %v2660 = vunpack.c.l.b16 %v2604
      %v2661 = vunpack.c.l.b16 %v2605
      %v2662 = vunpack.c.l.b16 %v2606
      %v2663 = vpack.c.b16 %v2648, %v2647
      %v2664 = vpack.c.b16 %v2650, %v2649
      %v2665 = vpack.c.b16 %v2652, %v2651
      %v2666 = vpack.c.b16 %v2654, %v2653
      %v2667 = vpack.c.b16 %v2656, %v2655
      %v2668 = vpack.c.b16 %v2658, %v2657
      %v2669 = vpack.c.b16 %v2660, %v2659
      %v2670 = vpack.c.b16 %v2662, %v2661
      %2679 = vmatprep.subr.bf16.mxu0 0
      %2680 = vmatpush1.bf16.msra.mxu0 %v2670
      %2681 = vmatprep.subr.bf16.mxu0 0
      %2682 = vmatpush1.bf16.msra.mxu0 %v2669
      %2683 = vmatprep.subr.bf16.mxu0 0
      %2684 = vmatpush1.bf16.msra.mxu0 %v2668
      %2685 = vmatprep.subr.bf16.mxu0 0
      %2686 = vmatpush1.bf16.msra.mxu0 %v2667
      %2687 = vmatprep.subr.bf16.mxu0 0
      %2688 = vmatpush1.bf16.msra.mxu0 %v2666
      %2689 = vmatprep.subr.bf16.mxu0 0
      %2690 = vmatpush1.bf16.msra.mxu0 %v2665
      %2691 = vmatprep.subr.bf16.mxu0 0
      %2692 = vmatpush1.bf16.msra.mxu0 %v2664
      %2693 = vmatprep.subr.bf16.mxu0 0
      %2694 = vmatpush1.bf16.msra.mxu0 %v2663
      %2695 = vmatprep.subr.bf16.mxu0 0
      %2696 = vmatpush2.bf16.msra.mxu0 0
      %2697 = vmatprep.subr.bf16.mxu0 0
      %2698 = vmatpush2.bf16.msra.mxu0 0
      %2699 = vmatprep.subr.bf16.mxu0 0
      %2700 = vmatpush2.bf16.msra.mxu0 0
      %2701 = vmatprep.subr.bf16.mxu0 0
      %2702 = vmatpush2.bf16.msra.mxu0 0
      %2703 = vmatprep.subr.bf16.mxu0 0
      %2704 = vmatpush2.bf16.msra.mxu0 0
      %2705 = vmatprep.subr.bf16.mxu0 0
      %2706 = vmatpush2.bf16.msra.mxu0 0
      %2707 = vmatprep.subr.bf16.mxu0 0
      %2708 = vmatpush2.bf16.msra.mxu0 0
      %2709 = vmatprep.subr.bf16.mxu0 0
      %2710 = vmatpush2.bf16.msra.mxu0 0
      %2711 = vmatprep.mubr.bf16.mxu0 0
      %2712 = vmatmul.mubr.bf16.gmra.mxu0 %v2623
      %v2713 = vpop.f32.mrf.mxu0
      %v2714 = vadd.f32 0.0, %v2713
      %v2715 = vpop.f32.mrf.mxu0
      %v2716 = vpop.f32.mrf.mxu0
      %v2717 = vadd.f32 0.0, %v2716
      %v2718 = vpop.f32.mrf.mxu0
      %2719 = vmatprep.mubr.bf16.mxu0 0
      %2720 = vmatmul.mubr.bf16.gmra.mxu0 %v2624
      %v2721 = vpop.f32.mrf.mxu0
      %v2722 = vadd.f32 0.0, %v2721
      %v2723 = vpop.f32.mrf.mxu0
      %v2724 = vpop.f32.mrf.mxu0
      %v2725 = vadd.f32 0.0, %v2724
      %v2726 = vpop.f32.mrf.mxu0
      %2727 = vmatprep.mubr.bf16.mxu0 0
      %2728 = vmatmul.mubr.bf16.gmra.mxu0 %v2625
      %v2729 = vpop.f32.mrf.mxu0
      %v2730 = vadd.f32 0.0, %v2729
      %v2731 = vpop.f32.mrf.mxu0
      %v2732 = vpop.f32.mrf.mxu0
      %v2733 = vadd.f32 0.0, %v2732
      %v2734 = vpop.f32.mrf.mxu0
      %2735 = vmatprep.mubr.bf16.mxu0 0
      %2736 = vmatmul.mubr.bf16.gmra.mxu0 %v2626
      %v2737 = vpop.f32.mrf.mxu0
      %v2738 = vadd.f32 0.0, %v2737
      %v2739 = vpop.f32.mrf.mxu0
      %v2740 = vpop.f32.mrf.mxu0
      %v2741 = vadd.f32 0.0, %v2740
      %v2742 = vpop.f32.mrf.mxu0
      %2743 = vdwg.mxu0
      %v2744 = vadd.f32 %v2566, %v2714
      %v2745 = vadd.f32 %v2567, %v2717
      %v2746 = vadd.f32 %v2568, %v2722
      %v2747 = vadd.f32 %v2569, %v2725
      %v2748 = vadd.f32 %v2570, %v2730
      %v2749 = vadd.f32 %v2571, %v2733
      %v2750 = vadd.f32 %v2572, %v2738
      %v2751 = vadd.f32 %v2573, %v2741
      %s2752 = scalar_lea.vmem [#allocation2], 32
      %v2753 = vld [vmem:[%s2752] sm:$0xff]
      %v2754 = vld [vmem:[%s2752 + $0x10] sm:$0xff]
      %v2755 = vld [vmem:[%s2752 + $0x20] sm:$0xff]
      %v2756 = vld [vmem:[%s2752 + $0x30] sm:$0xff]
      %v2757 = vld [vmem:[%s2752 + $0x40] sm:$0xff]
      %v2758 = vld [vmem:[%s2752 + $0x50] sm:$0xff]
      %v2759 = vld [vmem:[%s2752 + $0x60] sm:$0xff]
      %v2760 = vld [vmem:[%s2752 + $0x70] sm:$0xff]
      %v2761 = vpack.c.bf16 %v2753, %v2753
      %v2762 = vpack.c.bf16 %v2754, %v2754
      %v2763 = vpack.c.bf16 %v2755, %v2755
      %v2764 = vpack.c.bf16 %v2756, %v2756
      %v2765 = vpack.c.bf16 %v2757, %v2757
      %v2766 = vpack.c.bf16 %v2758, %v2758
      %v2767 = vpack.c.bf16 %v2759, %v2759
      %v2768 = vpack.c.bf16 %v2760, %v2760
      %s2769 = scalar_lea.vmem %s3, 384
      %v2770 = vld [vmem:[%s2769] sm:$0xf]
      %v2771 = vld [vmem:[%s2769 + $0x4] sm:$0xf]
      %v2772 = vld [vmem:[%s2769 + $0x8] sm:$0xf]
      %v2773 = vld [vmem:[%s2769 + $0xc] sm:$0xf]
      %v2774 = vld [vmem:[%s2769 + $0x10] sm:$0xf]
      %v2775 = vld [vmem:[%s2769 + $0x14] sm:$0xf]
      %v2776 = vld [vmem:[%s2769 + $0x18] sm:$0xf]
      %v2777 = vld [vmem:[%s2769 + $0x1c] sm:$0xf]
      %v2778 = vld [vmem:[%s2769 + $0x20] sm:$0xf]
      %v2779 = vld [vmem:[%s2769 + $0x24] sm:$0xf]
      %v2780 = vld [vmem:[%s2769 + $0x28] sm:$0xf]
      %v2781 = vld [vmem:[%s2769 + $0x2c] sm:$0xf]
      %v2782 = vld [vmem:[%s2769 + $0x30] sm:$0xf]
      %v2783 = vld [vmem:[%s2769 + $0x34] sm:$0xf]
      %v2784 = vld [vmem:[%s2769 + $0x38] sm:$0xf]
      %v2785 = vld [vmem:[%s2769 + $0x3c] sm:$0xf]
      %v2794 = vunpack.c.l.b16 %v2761
      %v2795 = vunpack.c.l.b16 %v2762
      %v2796 = vunpack.c.l.b16 %v2763
      %v2797 = vunpack.c.l.b16 %v2764
      %v2798 = vunpack.c.l.b16 %v2765
      %v2799 = vunpack.c.l.b16 %v2766
      %v2800 = vunpack.c.l.b16 %v2767
      %v2801 = vunpack.c.l.b16 %v2768
      %v2802 = vpack.c.b16 %v2795, %v2794
      %v2803 = vpack.c.b16 %v2797, %v2796
      %v2804 = vpack.c.b16 %v2799, %v2798
      %v2805 = vpack.c.b16 %v2801, %v2800
      %v2826 = vunpack.c.l.b16 %v2770
      %v2827 = vunpack.c.l.b16 %v2771
      %v2828 = vunpack.c.l.b16 %v2772
      %v2829 = vunpack.c.l.b16 %v2773
      %v2830 = vunpack.c.l.b16 %v2774
      %v2831 = vunpack.c.l.b16 %v2775
      %v2832 = vunpack.c.l.b16 %v2776
      %v2833 = vunpack.c.l.b16 %v2777
      %v2834 = vunpack.c.l.b16 %v2778
      %v2835 = vunpack.c.l.b16 %v2779
      %v2836 = vunpack.c.l.b16 %v2780
      %v2837 = vunpack.c.l.b16 %v2781
      %v2838 = vunpack.c.l.b16 %v2782
      %v2839 = vunpack.c.l.b16 %v2783
      %v2840 = vunpack.c.l.b16 %v2784
      %v2841 = vunpack.c.l.b16 %v2785
      %v2842 = vpack.c.b16 %v2827, %v2826
      %v2843 = vpack.c.b16 %v2829, %v2828
      %v2844 = vpack.c.b16 %v2831, %v2830
      %v2845 = vpack.c.b16 %v2833, %v2832
      %v2846 = vpack.c.b16 %v2835, %v2834
      %v2847 = vpack.c.b16 %v2837, %v2836
      %v2848 = vpack.c.b16 %v2839, %v2838
      %v2849 = vpack.c.b16 %v2841, %v2840
      %2858 = vmatprep.subr.bf16.mxu0 0
      %2859 = vmatpush1.bf16.msra.mxu0 %v2849
      %2860 = vmatprep.subr.bf16.mxu0 0
      %2861 = vmatpush1.bf16.msra.mxu0 %v2848
      %2862 = vmatprep.subr.bf16.mxu0 0
      %2863 = vmatpush1.bf16.msra.mxu0 %v2847
      %2864 = vmatprep.subr.bf16.mxu0 0
      %2865 = vmatpush1.bf16.msra.mxu0 %v2846
      %2866 = vmatprep.subr.bf16.mxu0 0
      %2867 = vmatpush1.bf16.msra.mxu0 %v2845
      %2868 = vmatprep.subr.bf16.mxu0 0
      %2869 = vmatpush1.bf16.msra.mxu0 %v2844
      %2870 = vmatprep.subr.bf16.mxu0 0
      %2871 = vmatpush1.bf16.msra.mxu0 %v2843
      %2872 = vmatprep.subr.bf16.mxu0 0
      %2873 = vmatpush1.bf16.msra.mxu0 %v2842
      %2874 = vmatprep.subr.bf16.mxu0 0
      %2875 = vmatpush2.bf16.msra.mxu0 0
      %2876 = vmatprep.subr.bf16.mxu0 0
      %2877 = vmatpush2.bf16.msra.mxu0 0
      %2878 = vmatprep.subr.bf16.mxu0 0
      %2879 = vmatpush2.bf16.msra.mxu0 0
      %2880 = vmatprep.subr.bf16.mxu0 0
      %2881 = vmatpush2.bf16.msra.mxu0 0
      %2882 = vmatprep.subr.bf16.mxu0 0
      %2883 = vmatpush2.bf16.msra.mxu0 0
      %2884 = vmatprep.subr.bf16.mxu0 0
      %2885 = vmatpush2.bf16.msra.mxu0 0
      %2886 = vmatprep.subr.bf16.mxu0 0
      %2887 = vmatpush2.bf16.msra.mxu0 0
      %2888 = vmatprep.subr.bf16.mxu0 0
      %2889 = vmatpush2.bf16.msra.mxu0 0
      %2890 = vmatprep.mubr.bf16.mxu0 0
      %2891 = vmatmul.mubr.bf16.gmra.mxu0 %v2802
      %v2892 = vpop.f32.mrf.mxu0
      %v2893 = vadd.f32 0.0, %v2892
      %v2894 = vpop.f32.mrf.mxu0
      %v2895 = vpop.f32.mrf.mxu0
      %v2896 = vadd.f32 0.0, %v2895
      %v2897 = vpop.f32.mrf.mxu0
      %2898 = vmatprep.mubr.bf16.mxu0 0
      %2899 = vmatmul.mubr.bf16.gmra.mxu0 %v2803
      %v2900 = vpop.f32.mrf.mxu0
      %v2901 = vadd.f32 0.0, %v2900
      %v2902 = vpop.f32.mrf.mxu0
      %v2903 = vpop.f32.mrf.mxu0
      %v2904 = vadd.f32 0.0, %v2903
      %v2905 = vpop.f32.mrf.mxu0
      %2906 = vmatprep.mubr.bf16.mxu0 0
      %2907 = vmatmul.mubr.bf16.gmra.mxu0 %v2804
      %v2908 = vpop.f32.mrf.mxu0
      %v2909 = vadd.f32 0.0, %v2908
      %v2910 = vpop.f32.mrf.mxu0
      %v2911 = vpop.f32.mrf.mxu0
      %v2912 = vadd.f32 0.0, %v2911
      %v2913 = vpop.f32.mrf.mxu0
      %2914 = vmatprep.mubr.bf16.mxu0 0
      %2915 = vmatmul.mubr.bf16.gmra.mxu0 %v2805
      %v2916 = vpop.f32.mrf.mxu0
      %v2917 = vadd.f32 0.0, %v2916
      %v2918 = vpop.f32.mrf.mxu0
      %v2919 = vpop.f32.mrf.mxu0
      %v2920 = vadd.f32 0.0, %v2919
      %v2921 = vpop.f32.mrf.mxu0
      %2922 = vdwg.mxu0
      %v2923 = vadd.f32 %v2744, %v2893
      %v2924 = vadd.f32 %v2745, %v2896
      %v2925 = vadd.f32 %v2746, %v2901
      %v2926 = vadd.f32 %v2747, %v2904
      %v2927 = vadd.f32 %v2748, %v2909
      %v2928 = vadd.f32 %v2749, %v2912
      %v2929 = vadd.f32 %v2750, %v2917
      %v2930 = vadd.f32 %v2751, %v2920
      %v2931 = vld [vmem:[%s2752 + $0x1] sm:$0xff]
      %v2932 = vld [vmem:[%s2752 + $0x11] sm:$0xff]
      %v2933 = vld [vmem:[%s2752 + $0x21] sm:$0xff]
      %v2934 = vld [vmem:[%s2752 + $0x31] sm:$0xff]
      %v2935 = vld [vmem:[%s2752 + $0x41] sm:$0xff]
      %v2936 = vld [vmem:[%s2752 + $0x51] sm:$0xff]
      %v2937 = vld [vmem:[%s2752 + $0x61] sm:$0xff]
      %v2938 = vld [vmem:[%s2752 + $0x71] sm:$0xff]
      %v2939 = vpack.c.bf16 %v2931, %v2931
      %v2940 = vpack.c.bf16 %v2932, %v2932
      %v2941 = vpack.c.bf16 %v2933, %v2933
      %v2942 = vpack.c.bf16 %v2934, %v2934
      %v2943 = vpack.c.bf16 %v2935, %v2935
      %v2944 = vpack.c.bf16 %v2936, %v2936
      %v2945 = vpack.c.bf16 %v2937, %v2937
      %v2946 = vpack.c.bf16 %v2938, %v2938
      %s2947 = scalar_lea.vmem %s3, 448
      %v2948 = vld [vmem:[%s2947] sm:$0xf]
      %v2949 = vld [vmem:[%s2947 + $0x4] sm:$0xf]
      %v2950 = vld [vmem:[%s2947 + $0x8] sm:$0xf]
      %v2951 = vld [vmem:[%s2947 + $0xc] sm:$0xf]
      %v2952 = vld [vmem:[%s2947 + $0x10] sm:$0xf]
      %v2953 = vld [vmem:[%s2947 + $0x14] sm:$0xf]
      %v2954 = vld [vmem:[%s2947 + $0x18] sm:$0xf]
      %v2955 = vld [vmem:[%s2947 + $0x1c] sm:$0xf]
      %v2956 = vld [vmem:[%s2947 + $0x20] sm:$0xf]
      %v2957 = vld [vmem:[%s2947 + $0x24] sm:$0xf]
      %v2958 = vld [vmem:[%s2947 + $0x28] sm:$0xf]
      %v2959 = vld [vmem:[%s2947 + $0x2c] sm:$0xf]
      %v2960 = vld [vmem:[%s2947 + $0x30] sm:$0xf]
      %v2961 = vld [vmem:[%s2947 + $0x34] sm:$0xf]
      %v2962 = vld [vmem:[%s2947 + $0x38] sm:$0xf]
      %v2963 = vld [vmem:[%s2947 + $0x3c] sm:$0xf]
      %v2972 = vunpack.c.l.b16 %v2939
      %v2973 = vunpack.c.l.b16 %v2940
      %v2974 = vunpack.c.l.b16 %v2941
      %v2975 = vunpack.c.l.b16 %v2942
      %v2976 = vunpack.c.l.b16 %v2943
      %v2977 = vunpack.c.l.b16 %v2944
      %v2978 = vunpack.c.l.b16 %v2945
      %v2979 = vunpack.c.l.b16 %v2946
      %v2980 = vpack.c.b16 %v2973, %v2972
      %v2981 = vpack.c.b16 %v2975, %v2974
      %v2982 = vpack.c.b16 %v2977, %v2976
      %v2983 = vpack.c.b16 %v2979, %v2978
      %v3004 = vunpack.c.l.b16 %v2948
      %v3005 = vunpack.c.l.b16 %v2949
      %v3006 = vunpack.c.l.b16 %v2950
      %v3007 = vunpack.c.l.b16 %v2951
      %v3008 = vunpack.c.l.b16 %v2952
      %v3009 = vunpack.c.l.b16 %v2953
      %v3010 = vunpack.c.l.b16 %v2954
      %v3011 = vunpack.c.l.b16 %v2955
      %v3012 = vunpack.c.l.b16 %v2956
      %v3013 = vunpack.c.l.b16 %v2957
      %v3014 = vunpack.c.l.b16 %v2958
      %v3015 = vunpack.c.l.b16 %v2959
      %v3016 = vunpack.c.l.b16 %v2960
      %v3017 = vunpack.c.l.b16 %v2961
      %v3018 = vunpack.c.l.b16 %v2962
      %v3019 = vunpack.c.l.b16 %v2963
      %v3020 = vpack.c.b16 %v3005, %v3004
      %v3021 = vpack.c.b16 %v3007, %v3006
      %v3022 = vpack.c.b16 %v3009, %v3008
      %v3023 = vpack.c.b16 %v3011, %v3010
      %v3024 = vpack.c.b16 %v3013, %v3012
      %v3025 = vpack.c.b16 %v3015, %v3014
      %v3026 = vpack.c.b16 %v3017, %v3016
      %v3027 = vpack.c.b16 %v3019, %v3018
      %3036 = vmatprep.subr.bf16.mxu0 0
      %3037 = vmatpush1.bf16.msra.mxu0 %v3027
      %3038 = vmatprep.subr.bf16.mxu0 0
      %3039 = vmatpush1.bf16.msra.mxu0 %v3026
      %3040 = vmatprep.subr.bf16.mxu0 0
      %3041 = vmatpush1.bf16.msra.mxu0 %v3025
      %3042 = vmatprep.subr.bf16.mxu0 0
      %3043 = vmatpush1.bf16.msra.mxu0 %v3024
      %3044 = vmatprep.subr.bf16.mxu0 0
      %3045 = vmatpush1.bf16.msra.mxu0 %v3023
      %3046 = vmatprep.subr.bf16.mxu0 0
      %3047 = vmatpush1.bf16.msra.mxu0 %v3022
      %3048 = vmatprep.subr.bf16.mxu0 0
      %3049 = vmatpush1.bf16.msra.mxu0 %v3021
      %3050 = vmatprep.subr.bf16.mxu0 0
      %3051 = vmatpush1.bf16.msra.mxu0 %v3020
      %3052 = vmatprep.subr.bf16.mxu0 0
      %3053 = vmatpush2.bf16.msra.mxu0 0
      %3054 = vmatprep.subr.bf16.mxu0 0
      %3055 = vmatpush2.bf16.msra.mxu0 0
      %3056 = vmatprep.subr.bf16.mxu0 0
      %3057 = vmatpush2.bf16.msra.mxu0 0
      %3058 = vmatprep.subr.bf16.mxu0 0
      %3059 = vmatpush2.bf16.msra.mxu0 0
      %3060 = vmatprep.subr.bf16.mxu0 0
      %3061 = vmatpush2.bf16.msra.mxu0 0
      %3062 = vmatprep.subr.bf16.mxu0 0
      %3063 = vmatpush2.bf16.msra.mxu0 0
      %3064 = vmatprep.subr.bf16.mxu0 0
      %3065 = vmatpush2.bf16.msra.mxu0 0
      %3066 = vmatprep.subr.bf16.mxu0 0
      %3067 = vmatpush2.bf16.msra.mxu0 0
      %3068 = vmatprep.mubr.bf16.mxu0 0
      %3069 = vmatmul.mubr.bf16.gmra.mxu0 %v2980
      %v3070 = vpop.f32.mrf.mxu0
      %v3071 = vadd.f32 0.0, %v3070
      %v3072 = vpop.f32.mrf.mxu0
      %v3073 = vpop.f32.mrf.mxu0
      %v3074 = vadd.f32 0.0, %v3073
      %v3075 = vpop.f32.mrf.mxu0
      %3076 = vmatprep.mubr.bf16.mxu0 0
      %3077 = vmatmul.mubr.bf16.gmra.mxu0 %v2981
      %v3078 = vpop.f32.mrf.mxu0
      %v3079 = vadd.f32 0.0, %v3078
      %v3080 = vpop.f32.mrf.mxu0
      %v3081 = vpop.f32.mrf.mxu0
      %v3082 = vadd.f32 0.0, %v3081
      %v3083 = vpop.f32.mrf.mxu0
      %3084 = vmatprep.mubr.bf16.mxu0 0
      %3085 = vmatmul.mubr.bf16.gmra.mxu0 %v2982
      %v3086 = vpop.f32.mrf.mxu0
      %v3087 = vadd.f32 0.0, %v3086
      %v3088 = vpop.f32.mrf.mxu0
      %v3089 = vpop.f32.mrf.mxu0
      %v3090 = vadd.f32 0.0, %v3089
      %v3091 = vpop.f32.mrf.mxu0
      %3092 = vmatprep.mubr.bf16.mxu0 0
      %3093 = vmatmul.mubr.bf16.gmra.mxu0 %v2983
      %v3094 = vpop.f32.mrf.mxu0
      %v3095 = vadd.f32 0.0, %v3094
      %v3096 = vpop.f32.mrf.mxu0
      %v3097 = vpop.f32.mrf.mxu0
      %v3098 = vadd.f32 0.0, %v3097
      %v3099 = vpop.f32.mrf.mxu0
      %3100 = vdwg.mxu0
      %v3101 = vadd.f32 %v2923, %v3071
      %v3102 = vadd.f32 %v2924, %v3074
      %v3103 = vadd.f32 %v2925, %v3079
      %v3104 = vadd.f32 %v2926, %v3082
      %v3105 = vadd.f32 %v2927, %v3087
      %v3106 = vadd.f32 %v2928, %v3090
      %v3107 = vadd.f32 %v2929, %v3095
      %v3108 = vadd.f32 %v2930, %v3098
      %v3109 = vld [vmem:[%s2752 + $0x2] sm:$0xff]
      %v3110 = vld [vmem:[%s2752 + $0x12] sm:$0xff]
      %v3111 = vld [vmem:[%s2752 + $0x22] sm:$0xff]
      %v3112 = vld [vmem:[%s2752 + $0x32] sm:$0xff]
      %v3113 = vld [vmem:[%s2752 + $0x42] sm:$0xff]
      %v3114 = vld [vmem:[%s2752 + $0x52] sm:$0xff]
      %v3115 = vld [vmem:[%s2752 + $0x62] sm:$0xff]
      %v3116 = vld [vmem:[%s2752 + $0x72] sm:$0xff]
      %v3117 = vpack.c.bf16 %v3109, %v3109
      %v3118 = vpack.c.bf16 %v3110, %v3110
      %v3119 = vpack.c.bf16 %v3111, %v3111
      %v3120 = vpack.c.bf16 %v3112, %v3112
      %v3121 = vpack.c.bf16 %v3113, %v3113
      %v3122 = vpack.c.bf16 %v3114, %v3114
      %v3123 = vpack.c.bf16 %v3115, %v3115
      %v3124 = vpack.c.bf16 %v3116, %v3116
      %s3125 = scalar_lea.vmem %s3, 512
      %v3126 = vld [vmem:[%s3125] sm:$0xf]
      %v3127 = vld [vmem:[%s3125 + $0x4] sm:$0xf]
      %v3128 = vld [vmem:[%s3125 + $0x8] sm:$0xf]
      %v3129 = vld [vmem:[%s3125 + $0xc] sm:$0xf]
      %v3130 = vld [vmem:[%s3125 + $0x10] sm:$0xf]
      %v3131 = vld [vmem:[%s3125 + $0x14] sm:$0xf]
      %v3132 = vld [vmem:[%s3125 + $0x18] sm:$0xf]
      %v3133 = vld [vmem:[%s3125 + $0x1c] sm:$0xf]
      %v3134 = vld [vmem:[%s3125 + $0x20] sm:$0xf]
      %v3135 = vld [vmem:[%s3125 + $0x24] sm:$0xf]
      %v3136 = vld [vmem:[%s3125 + $0x28] sm:$0xf]
      %v3137 = vld [vmem:[%s3125 + $0x2c] sm:$0xf]
      %v3138 = vld [vmem:[%s3125 + $0x30] sm:$0xf]
      %v3139 = vld [vmem:[%s3125 + $0x34] sm:$0xf]
      %v3140 = vld [vmem:[%s3125 + $0x38] sm:$0xf]
      %v3141 = vld [vmem:[%s3125 + $0x3c] sm:$0xf]
      %v3150 = vunpack.c.l.b16 %v3117
      %v3151 = vunpack.c.l.b16 %v3118
      %v3152 = vunpack.c.l.b16 %v3119
      %v3153 = vunpack.c.l.b16 %v3120
      %v3154 = vunpack.c.l.b16 %v3121
      %v3155 = vunpack.c.l.b16 %v3122
      %v3156 = vunpack.c.l.b16 %v3123
      %v3157 = vunpack.c.l.b16 %v3124
      %v3158 = vpack.c.b16 %v3151, %v3150
      %v3159 = vpack.c.b16 %v3153, %v3152
      %v3160 = vpack.c.b16 %v3155, %v3154
      %v3161 = vpack.c.b16 %v3157, %v3156
      %v3182 = vunpack.c.l.b16 %v3126
      %v3183 = vunpack.c.l.b16 %v3127
      %v3184 = vunpack.c.l.b16 %v3128
      %v3185 = vunpack.c.l.b16 %v3129
      %v3186 = vunpack.c.l.b16 %v3130
      %v3187 = vunpack.c.l.b16 %v3131
      %v3188 = vunpack.c.l.b16 %v3132
      %v3189 = vunpack.c.l.b16 %v3133
      %v3190 = vunpack.c.l.b16 %v3134
      %v3191 = vunpack.c.l.b16 %v3135
      %v3192 = vunpack.c.l.b16 %v3136
      %v3193 = vunpack.c.l.b16 %v3137
      %v3194 = vunpack.c.l.b16 %v3138
      %v3195 = vunpack.c.l.b16 %v3139
      %v3196 = vunpack.c.l.b16 %v3140
      %v3197 = vunpack.c.l.b16 %v3141
      %v3198 = vpack.c.b16 %v3183, %v3182
      %v3199 = vpack.c.b16 %v3185, %v3184
      %v3200 = vpack.c.b16 %v3187, %v3186
      %v3201 = vpack.c.b16 %v3189, %v3188
      %v3202 = vpack.c.b16 %v3191, %v3190
      %v3203 = vpack.c.b16 %v3193, %v3192
      %v3204 = vpack.c.b16 %v3195, %v3194
      %v3205 = vpack.c.b16 %v3197, %v3196
      %3214 = vmatprep.subr.bf16.mxu0 0
      %3215 = vmatpush1.bf16.msra.mxu0 %v3205
      %3216 = vmatprep.subr.bf16.mxu0 0
      %3217 = vmatpush1.bf16.msra.mxu0 %v3204
      %3218 = vmatprep.subr.bf16.mxu0 0
      %3219 = vmatpush1.bf16.msra.mxu0 %v3203
      %3220 = vmatprep.subr.bf16.mxu0 0
      %3221 = vmatpush1.bf16.msra.mxu0 %v3202
      %3222 = vmatprep.subr.bf16.mxu0 0
      %3223 = vmatpush1.bf16.msra.mxu0 %v3201
      %3224 = vmatprep.subr.bf16.mxu0 0
      %3225 = vmatpush1.bf16.msra.mxu0 %v3200
      %3226 = vmatprep.subr.bf16.mxu0 0
      %3227 = vmatpush1.bf16.msra.mxu0 %v3199
      %3228 = vmatprep.subr.bf16.mxu0 0
      %3229 = vmatpush1.bf16.msra.mxu0 %v3198
      %3230 = vmatprep.subr.bf16.mxu0 0
      %3231 = vmatpush2.bf16.msra.mxu0 0
      %3232 = vmatprep.subr.bf16.mxu0 0
      %3233 = vmatpush2.bf16.msra.mxu0 0
      %3234 = vmatprep.subr.bf16.mxu0 0
      %3235 = vmatpush2.bf16.msra.mxu0 0
      %3236 = vmatprep.subr.bf16.mxu0 0
      %3237 = vmatpush2.bf16.msra.mxu0 0
      %3238 = vmatprep.subr.bf16.mxu0 0
      %3239 = vmatpush2.bf16.msra.mxu0 0
      %3240 = vmatprep.subr.bf16.mxu0 0
      %3241 = vmatpush2.bf16.msra.mxu0 0
      %3242 = vmatprep.subr.bf16.mxu0 0
      %3243 = vmatpush2.bf16.msra.mxu0 0
      %3244 = vmatprep.subr.bf16.mxu0 0
      %3245 = vmatpush2.bf16.msra.mxu0 0
      %3246 = vmatprep.mubr.bf16.mxu0 0
      %3247 = vmatmul.mubr.bf16.gmra.mxu0 %v3158
      %v3248 = vpop.f32.mrf.mxu0
      %v3249 = vadd.f32 0.0, %v3248
      %v3250 = vpop.f32.mrf.mxu0
      %v3251 = vpop.f32.mrf.mxu0
      %v3252 = vadd.f32 0.0, %v3251
      %v3253 = vpop.f32.mrf.mxu0
      %3254 = vmatprep.mubr.bf16.mxu0 0
      %3255 = vmatmul.mubr.bf16.gmra.mxu0 %v3159
      %v3256 = vpop.f32.mrf.mxu0
      %v3257 = vadd.f32 0.0, %v3256
      %v3258 = vpop.f32.mrf.mxu0
      %v3259 = vpop.f32.mrf.mxu0
      %v3260 = vadd.f32 0.0, %v3259
      %v3261 = vpop.f32.mrf.mxu0
      %3262 = vmatprep.mubr.bf16.mxu0 0
      %3263 = vmatmul.mubr.bf16.gmra.mxu0 %v3160
      %v3264 = vpop.f32.mrf.mxu0
      %v3265 = vadd.f32 0.0, %v3264
      %v3266 = vpop.f32.mrf.mxu0
      %v3267 = vpop.f32.mrf.mxu0
      %v3268 = vadd.f32 0.0, %v3267
      %v3269 = vpop.f32.mrf.mxu0
      %3270 = vmatprep.mubr.bf16.mxu0 0
      %3271 = vmatmul.mubr.bf16.gmra.mxu0 %v3161
      %v3272 = vpop.f32.mrf.mxu0
      %v3273 = vadd.f32 0.0, %v3272
      %v3274 = vpop.f32.mrf.mxu0
      %v3275 = vpop.f32.mrf.mxu0
      %v3276 = vadd.f32 0.0, %v3275
      %v3277 = vpop.f32.mrf.mxu0
      %3278 = vdwg.mxu0
      %v3279 = vadd.f32 %v3101, %v3249
      %v3280 = vadd.f32 %v3102, %v3252
      %v3281 = vadd.f32 %v3103, %v3257
      %v3282 = vadd.f32 %v3104, %v3260
      %v3283 = vadd.f32 %v3105, %v3265
      %v3284 = vadd.f32 %v3106, %v3268
      %v3285 = vadd.f32 %v3107, %v3273
      %v3286 = vadd.f32 %v3108, %v3276
      %v3287 = vld [vmem:[%s832] sm:$0xf]
      %v3288 = vld [vmem:[%s832 + $0x8] sm:$0xf]
      %v3289 = vld [vmem:[%s832 + $0x10] sm:$0xf]
      %v3290 = vld [vmem:[%s832 + $0x18] sm:$0xf]
      %v3291 = vld [vmem:[%s832 + $0x20] sm:$0xf]
      %v3292 = vld [vmem:[%s832 + $0x28] sm:$0xf]
      %v3293 = vld [vmem:[%s832 + $0x30] sm:$0xf]
      %v3294 = vld [vmem:[%s832 + $0x38] sm:$0xf]
      %v3295 = vld [vmem:[%s4] sm:$0x3]
      %v3304 = vunpack.c.l.b16 %v3287
      %v3305 = vunpack.c.l.b16 %v3288
      %v3306 = vunpack.c.l.b16 %v3289
      %v3307 = vunpack.c.l.b16 %v3290
      %v3308 = vunpack.c.l.b16 %v3291
      %v3309 = vunpack.c.l.b16 %v3292
      %v3310 = vunpack.c.l.b16 %v3293
      %v3311 = vunpack.c.l.b16 %v3294
      %v3312 = vpack.c.b16 %v3305, %v3304
      %v3313 = vpack.c.b16 %v3307, %v3306
      %v3314 = vpack.c.b16 %v3309, %v3308
      %v3315 = vpack.c.b16 %v3311, %v3310
      %v3317 = vsel %vm298, %v3312, 0
      %v3320 = vsel %vm298, %v3313, 0
      %v3323 = vsel %vm298, %v3314, 0
      %v3326 = vsel %vm298, %v3315, 0
      %v3329 = vsel %vm311, %v3295, 0
      %3331 = vmatprep.subr.bf16.mxu0 0
      %3332 = vmatpush1.bf16.msra.mxu0 0
      %3333 = vmatprep.subr.bf16.mxu0 0
      %3334 = vmatpush1.bf16.msra.mxu0 0
      %3335 = vmatprep.subr.bf16.mxu0 0
      %3336 = vmatpush1.bf16.msra.mxu0 0
      %3337 = vmatprep.subr.bf16.mxu0 0
      %3338 = vmatpush1.bf16.msra.mxu0 0
      %3339 = vmatprep.subr.bf16.mxu0 0
      %3340 = vmatpush1.bf16.msra.mxu0 0
      %3341 = vmatprep.subr.bf16.mxu0 0
      %3342 = vmatpush1.bf16.msra.mxu0 0
      %3343 = vmatprep.subr.bf16.mxu0 0
      %3344 = vmatpush1.bf16.msra.mxu0 0
      %3345 = vmatprep.subr.bf16.mxu0 0
      %3346 = vmatpush1.bf16.msra.mxu0 %v3329
      %3347 = vmatprep.subr.bf16.mxu0 0
      %3348 = vmatpush2.bf16.msra.mxu0 0
      %3349 = vmatprep.subr.bf16.mxu0 0
      %3350 = vmatpush2.bf16.msra.mxu0 0
      %3351 = vmatprep.subr.bf16.mxu0 0
      %3352 = vmatpush2.bf16.msra.mxu0 0
      %3353 = vmatprep.subr.bf16.mxu0 0
      %3354 = vmatpush2.bf16.msra.mxu0 0
      %3355 = vmatprep.subr.bf16.mxu0 0
      %3356 = vmatpush2.bf16.msra.mxu0 0
      %3357 = vmatprep.subr.bf16.mxu0 0
      %3358 = vmatpush2.bf16.msra.mxu0 0
      %3359 = vmatprep.subr.bf16.mxu0 0
      %3360 = vmatpush2.bf16.msra.mxu0 0
      %3361 = vmatprep.subr.bf16.mxu0 0
      %3362 = vmatpush2.bf16.msra.mxu0 0
      %3363 = vmatprep.mubr.bf16.mxu0 0
      %3364 = vmatmul.mubr.bf16.gmra.mxu0 %v3317
      %v3365 = vpop.f32.mrf.mxu0
      %v3366 = vadd.f32 0.0, %v3365
      %v3367 = vpop.f32.mrf.mxu0
      %v3368 = vpop.f32.mrf.mxu0
      %v3369 = vadd.f32 0.0, %v3368
      %v3370 = vpop.f32.mrf.mxu0
      %3371 = vmatprep.mubr.bf16.mxu0 0
      %3372 = vmatmul.mubr.bf16.gmra.mxu0 %v3320
      %v3373 = vpop.f32.mrf.mxu0
      %v3374 = vadd.f32 0.0, %v3373
      %v3375 = vpop.f32.mrf.mxu0
      %v3376 = vpop.f32.mrf.mxu0
      %v3377 = vadd.f32 0.0, %v3376
      %v3378 = vpop.f32.mrf.mxu0
      %3379 = vmatprep.mubr.bf16.mxu0 0
      %3380 = vmatmul.mubr.bf16.gmra.mxu0 %v3323
      %v3381 = vpop.f32.mrf.mxu0
      %v3382 = vadd.f32 0.0, %v3381
      %v3383 = vpop.f32.mrf.mxu0
      %v3384 = vpop.f32.mrf.mxu0
      %v3385 = vadd.f32 0.0, %v3384
      %v3386 = vpop.f32.mrf.mxu0
      %3387 = vmatprep.mubr.bf16.mxu0 0
      %3388 = vmatmul.mubr.bf16.gmra.mxu0 %v3326
      %v3389 = vpop.f32.mrf.mxu0
      %v3390 = vadd.f32 0.0, %v3389
      %v3391 = vpop.f32.mrf.mxu0
      %v3392 = vpop.f32.mrf.mxu0
      %v3393 = vadd.f32 0.0, %v3392
      %v3394 = vpop.f32.mrf.mxu0
      %3395 = vdwg.mxu0
      %v3396 = vadd.f32 %v3279, %v3366
      %v3397 = vadd.f32 %v3280, %v3369
      %v3398 = vadd.f32 %v3281, %v3374
      %v3399 = vadd.f32 %v3282, %v3377
      %v3400 = vadd.f32 %v3283, %v3382
      %v3401 = vadd.f32 %v3284, %v3385
      %v3402 = vadd.f32 %v3285, %v3390
      %v3403 = vadd.f32 %v3286, %v3393
      %v3404 = vld [vmem:[%s5] sm:$0x1]
      %v3406 = vlaneseq
      %v3407 = vshrl.u32 %v3406, 7
      %v3408 = vsub.s32 0, %v3407
      %v3409 = vrot.slane %v3404, %v3408
      %v3411 = vadd.f32 %v3396, %v3409
      %v3412 = vadd.f32 %v3397, %v3409
      %v3413 = vadd.f32 %v3398, %v3409
      %v3414 = vadd.f32 %v3399, %v3409
      %v3415 = vadd.f32 %v3400, %v3409
      %v3416 = vadd.f32 %v3401, %v3409
      %v3417 = vadd.f32 %v3402, %v3409
      %v3418 = vadd.f32 %v3403, %v3409
      %v3419 = vmax.f32 %v3411, 0.0
      %v3420 = vmax.f32 %v3412, 0.0
      %v3421 = vmax.f32 %v3413, 0.0
      %v3422 = vmax.f32 %v3414, 0.0
      %v3423 = vmax.f32 %v3415, 0.0
      %v3424 = vmax.f32 %v3416, 0.0
      %v3425 = vmax.f32 %v3417, 0.0
      %v3426 = vmax.f32 %v3418, 0.0
      %3427 = vst [vmem:[%s256] sm:$0xff] %v3419
      %3428 = vst [vmem:[%s256 + $0x8] sm:$0xff] %v3420
      %3429 = vst [vmem:[%s256 + $0x10] sm:$0xff] %v3421
      %3430 = vst [vmem:[%s256 + $0x18] sm:$0xff] %v3422
      %3431 = vst [vmem:[%s256 + $0x20] sm:$0xff] %v3423
      %3432 = vst [vmem:[%s256 + $0x28] sm:$0xff] %v3424
      %3433 = vst [vmem:[%s256 + $0x30] sm:$0xff] %v3425
      %3434 = vst [vmem:[%s256 + $0x38] sm:$0xff] %v3426
      %p3435 = scmp.lt.s32.totalorder %s17, 1
      %s3436 = scalar_select %p3435, %s17, 1
      %s3437 = smul.addr %s3436, 8
      %s3438 = smul.addr %s3437, 8
      %s3439 = scalar_lea.vmem %s6, %s3438
      // Predicated region
      $region45: #{_lambda_.1} parent=43 // pred_check
        %p3440 = pneg %p166
      $region46: #{_lambda_.1} parent=43 // pred_check_branch
        %3442 = sbr.rel (%p3440) target = $region48
      $region47: #{_lambda_.1} parent=43 // pred_region
        _
      $region48: #{_lambda_.1} parent=43 // pred_fallthru
        _
    $region44: #{_lambda_.1} parent=5 // pred_fallthru
      _
    %p3443 = scmp.le.s32.totalorder 2, %s12
    // Predicated region
    $region49: #{_lambda_.1} parent=5 // pred_check
      %p3444 = pneg %p3443
    $region50: #{_lambda_.1} parent=5 // pred_check_branch
      %3446 = sbr.rel (%p3444) target = $region52
    $region51: #{_lambda_.1} parent=5 // pred_region
      %s3447 = ssub.s32 %s12, 2
      // Predicated region
      $region53: #{_lambda_.1} parent=51 // pred_check
        %p3448 = pneg %p172
      $region54: #{_lambda_.1} parent=51 // pred_check_branch
        %3450 = sbr.rel (%p3448) target = $region56
      $region55: #{_lambda_.1} parent=51 // pred_region
        %p3451 = scmp.lt.s32.totalorder %s18, 1
        %s3452 = scalar_select %p3451, %s18, 1
        %s3453 = smul.addr %s3452, 8
        %s3454 = smul.addr %s3453, 8
        %s3455 = scalar_lea.vmem %s6, %s3454
      $region56: #{_lambda_.1} parent=51 // pred_fallthru
        _
    $region52: #{_lambda_.1} parent=5 // pred_fallthru
      _
  $region6: #{_lambda_.1} parent=0 // loop_footer
    %s16 = sadd.s32 1, %s12
  $region7: #{_lambda_.1} parent=0 // loop_footer_branch
    %11 = sbr.rel target = $region3
  $region8: #{_lambda_.1} parent=0 // loop_exit
    _

</llo_original>
